<compile_context>
chip_gen: v7x
topology: tpu7x:2x2x1
jax: 0.10.0
libtpu: 0.0.40
codegen_flags: <defaults>
</compile_context>

<pallas_src>
import jax
import jax.numpy as jnp
from jax import lax
from jax.experimental import pallas as pl
from jax.experimental.pallas import tpu as pltpu


# --------------------------- fused kernel ---------------------------

def _make_fused_kernel(num_layers, S, B, H):
    scale = 1.0 / float(H) ** 0.5

    def kernel(*refs):
        # inputs
        x_ref = refs[0]                                   # (S*B, D) seq-major flatten
        lw = refs[1:1 + 3 * num_layers]                   # (wih_t, whh_t, bias) per layer
        wqkv_ref, bqkv_ref, wof_ref, bof_ref = refs[1 + 3 * num_layers:
                                                    1 + 3 * num_layers + 4]
        out_ref = refs[-1]                                # (B*S, O) batch-major

        # ---------------- stacked LSTM (all state register-resident) ----------------
        inp = x_ref[...]                                  # (S*B, Din) value
        hs = None                                         # last layer's per-step h's
        for l in range(num_layers):
            wih = lw[3 * l][...]                          # (Din, 4H) gate order i,f,o|g
            whh = lw[3 * l + 1][...]                      # (H,   4H)
            b = lw[3 * l + 2][...]                        # (1,   4H)

            # hoisted input projection for all timesteps at once (one MXU matmul)
            xproj = jnp.dot(inp, wih, preferred_element_type=jnp.float32) + b

            h = jnp.zeros((B, H), jnp.float32)
            c = jnp.zeros((B, H), jnp.float32)
            hs = []
            for t in range(S):                            # static unroll, static slices
                gates = (xproj[t * B:(t + 1) * B, :]
                         + jnp.dot(h, whh, preferred_element_type=jnp.float32))
                sg = jax.nn.sigmoid(gates[:, :3 * H])     # i, f, o  (3H EUP lanes)
                g_g = jnp.tanh(gates[:, 3 * H:])          # g        (H  EUP lanes)
                i_g = sg[:, 0 * H:1 * H]
                f_g = sg[:, 1 * H:2 * H]
                o_g = sg[:, 2 * H:3 * H]
                c = f_g * c + i_g * g_g
                h = o_g * jnp.tanh(c)
                hs.append(h)
            if l + 1 < num_layers:
                inp = jnp.concatenate(hs, axis=0)         # (S*B, H) seq-major, in vregs

        # -------- single-head self-attention, per batch block (block-diagonal) --------
        wqkv = wqkv_ref[...]                              # (H, 3H)  cols = q|k|v
        bqkv = bqkv_ref[...]                              # (1, 3H)
        wof = wof_ref[...]                                # (H, O)   = Wo @ Wfc (folded)
        bof = bof_ref[...]                                # (1, O)

        outs = []
        for bi in range(B):                               # static loop, B small
            hb = jnp.concatenate([h_t[bi:bi + 1, :] for h_t in hs], axis=0)   # (S, H)
            qkv = jnp.dot(hb, wqkv, preferred_element_type=jnp.float32) + bqkv
            q = qkv[:, 0 * H:1 * H]
            k = qkv[:, 1 * H:2 * H]
            v = qkv[:, 2 * H:3 * H]
            sc = lax.dot_general(q, k, dimension_numbers=(((1,), (1,)), ((), ())),
                                 preferred_element_type=jnp.float32) * scale  # (S, S)
            m = jnp.max(sc, axis=-1, keepdims=True)
            e = jnp.exp(sc - m)
            inv = pl.reciprocal(jnp.sum(e, axis=-1, keepdims=True), approx=True)
            attn = e * inv
            ctx = jnp.dot(attn, v, preferred_element_type=jnp.float32)        # (S, H)
            outs.append(jnp.dot(ctx, wof, preferred_element_type=jnp.float32) + bof)

        # single contiguous store, batch-major (B*S, O)
        out_ref[...] = jnp.concatenate(outs, axis=0)

    return kernel


def _full_block(a):
    nd = a.ndim
    return pl.BlockSpec(a.shape, lambda i, nd=nd: (0,) * nd)


def lstm_attention_forward(x, packed):
    """x: (S, B, D) f32 -> (S, B, output_size) f32. Single fused pallas_call."""
    S, B, D = x.shape
    H = packed["layers"][0][1].shape[0]
    O = packed["w_of"].shape[1]
    NL = len(packed["layers"])

    x2d = x.reshape(S * B, D)                             # seq-major (row = t*B + b)
    inputs = [x2d]
    for (wih_t, whh_t, b) in packed["layers"]:
        inputs += [wih_t, whh_t, b]
    inputs += [packed["wqkv"], packed["bqkv"], packed["w_of"], packed["b_of"]]

    out_bm = pl.pallas_call(
        _make_fused_kernel(NL, S, B, H),
        out_shape=jax.ShapeDtypeStruct((B * S, O), jnp.float32),
        grid_spec=pltpu.PrefetchScalarGridSpec(
            num_scalar_prefetch=0,
            grid=(1,),
            in_specs=[_full_block(a) for a in inputs],
            out_specs=pl.BlockSpec((B * S, O), lambda i: (0, 0)),
        ),
        compiler_params=pltpu.CompilerParams(
            dimension_semantics=("arbitrary",),
            vmem_limit_bytes=32 * 1024 * 1024),
    )(*inputs)
    # kernel output is batch-major; reorder to (S, B, O) in plain XLA outside the kernel
    return jnp.transpose(out_bm.reshape(B, S, O), (1, 0, 2))


# --------------------------- params ---------------------------

def init_params(key, num_neurons, complexity, input_size, output_size):
    """Deterministic synthetic init (uniform), PyTorch-native layouts."""
    H, O, D = num_neurons, output_size, input_size
    k = 1.0 / float(H) ** 0.5
    layers = []
    for l in range(complexity):
        Din = D if l == 0 else H
        key, k1, k2, k3, k4 = jax.random.split(key, 5)
        w_ih = jax.random.uniform(k1, (4 * H, Din), jnp.float32, -k, k)   # i,f,g,o rows
        w_hh = jax.random.uniform(k2, (4 * H, H), jnp.float32, -k, k)
        b_ih = jax.random.uniform(k3, (4 * H,), jnp.float32, -k, k)
        b_hh = jax.random.uniform(k4, (4 * H,), jnp.float32, -k, k)
        layers.append((w_ih, w_hh, b_ih, b_hh))

    key, k1, k2, k3, k4 = jax.random.split(key, 5)
    in_proj_w = jax.random.uniform(k1, (3 * H, H), jnp.float32, -k, k)    # q|k|v rows
    in_proj_b = jax.random.uniform(k2, (3 * H,), jnp.float32, -k, k)
    out_proj_w = jax.random.uniform(k3, (H, H), jnp.float32, -k, k)
    out_proj_b = jax.random.uniform(k4, (H,), jnp.float32, -k, k)

    key, k1, k2 = jax.random.split(key, 3)
    fc_w = jax.random.uniform(k1, (O, H), jnp.float32, -k, k)
    fc_b = jax.random.uniform(k2, (O,), jnp.float32, -k, k)

    return {"layers": layers,
            "in_proj_w": in_proj_w, "in_proj_b": in_proj_b,
            "out_proj_w": out_proj_w, "out_proj_b": out_proj_b,
            "fc_w": fc_w, "fc_b": fc_b}


def pack_params(params):
    """Host-side one-time repack for the kernel:
       * LSTM gate columns permuted from PyTorch (i,f,g,o) to (i,f,o|g), weights
         transposed for right-multiplication, b_ih+b_hh fused.
       * Q/K/V packed into one (H, 3H) weight + (1, 3H) bias.
       * Attention out_proj folded into fc_out: W_of = Wo @ Wfc, b_of = bo @ Wfc + b_fc.
    """
    def perm_gates(w):
        i, f, g, o = jnp.split(w, 4, axis=0)
        return jnp.concatenate([i, f, o, g], axis=0)

    layers = []
    for (w_ih, w_hh, b_ih, b_hh) in params["layers"]:
        layers.append((perm_gates(w_ih).T, perm_gates(w_hh).T,
                       perm_gates(b_ih + b_hh)[None, :]))

    wqkv = params["in_proj_w"].T                          # (H, 3H), cols = q|k|v
    bqkv = params["in_proj_b"][None, :]                   # (1, 3H)
    w_of = params["out_proj_w"].T @ params["fc_w"].T      # (H, O)
    b_of = params["out_proj_b"][None, :] @ params["fc_w"].T + params["fc_b"][None, :]
    return {"layers": layers, "wqkv": wqkv, "bqkv": bqkv, "w_of": w_of, "b_of": b_of}


# --------------------------- pure-JAX reference ---------------------------

def forward_ref(x, params):
    S, B, _ = x.shape
    h_seq = x
    for (w_ih, w_hh, b_ih, b_hh) in params["layers"]:
        H = w_hh.shape[1]

        def step(carry, x_t, w_ih=w_ih, w_hh=w_hh, b_ih=b_ih, b_hh=b_hh, H=H):
            h, c = carry
            gates = x_t @ w_ih.T + h @ w_hh.T + b_ih + b_hh
            i = jax.nn.sigmoid(gates[:, 0 * H:1 * H])
            f = jax.nn.sigmoid(gates[:, 1 * H:2 * H])
            g = jnp.tanh(gates[:, 2 * H:3 * H])
            o = jax.nn.sigmoid(gates[:, 3 * H:4 * H])
            c = f * c + i * g
            h = o * jnp.tanh(c)
            return (h, c), h

        init = (jnp.zeros((B, H), jnp.float32), jnp.zeros((B, H), jnp.float32))
        _, h_seq = lax.scan(step, init, h_seq)

    H = h_seq.shape[-1]
    xb = jnp.transpose(h_seq, (1, 0, 2))                  # (B, S, H)
    wq, wk, wv = (params["in_proj_w"][0:H], params["in_proj_w"][H:2 * H],
                  params["in_proj_w"][2 * H:])
    bq, bk, bv = (params["in_proj_b"][0:H], params["in_proj_b"][H:2 * H],
                  params["in_proj_b"][2 * H:])
    q = xb @ wq.T + bq
    k = xb @ wk.T + bk
    v = xb @ wv.T + bv
    sc = jnp.einsum("bqh,bkh->bqk", q, k) / jnp.sqrt(jnp.float32(H))
    a = jax.nn.softmax(sc, axis=-1)
    ctx = jnp.einsum("bqk,bkh->bqh", a, v)
    att = ctx @ params["out_proj_w"].T + params["out_proj_b"]
    att = jnp.transpose(att, (1, 0, 2))                   # (S, B, H)
    return att @ params["fc_w"].T + params["fc_b"]


if __name__ == "__main__":
    SEQ, BATCH = 8, 2
    INPUT_SIZE, NUM_NEURONS, COMPLEXITY, OUTPUT_SIZE = 16, 32, 2, 8

    key = jax.random.PRNGKey(0)
    key, xk = jax.random.split(key)
    x = jax.random.normal(xk, (SEQ, BATCH, INPUT_SIZE), jnp.float32)
    params = init_params(key, NUM_NEURONS, COMPLEXITY, INPUT_SIZE, OUTPUT_SIZE)
    packed = pack_params(params)

    out = jax.block_until_ready(lstm_attention_forward(x, packed))
    ref = jax.block_until_ready(forward_ref(x, params))

    assert out.shape == (SEQ, BATCH, OUTPUT_SIZE), out.shape
    # tolerance covers the out_proj@fc fold (fp reassociation) and approx reciprocal
    max_err = float(jnp.max(jnp.abs(out - ref)))
    assert max_err < 1e-3, f"mismatch vs reference, max abs err={max_err}"
    print("KERNEL_OK")
</pallas_src>

<mosaic_0001>
module attributes {stable_mosaic.version = 11 : i64} {
  func.func @kernel(%arg0: i32, %arg1: memref<16x16xf32, #tpu.memory_space<vmem>>, %arg2: memref<16x128xf32, #tpu.memory_space<vmem>>, %arg3: memref<32x128xf32, #tpu.memory_space<vmem>>, %arg4: memref<1x128xf32, #tpu.memory_space<vmem>>, %arg5: memref<32x128xf32, #tpu.memory_space<vmem>>, %arg6: memref<32x128xf32, #tpu.memory_space<vmem>>, %arg7: memref<1x128xf32, #tpu.memory_space<vmem>>, %arg8: memref<32x96xf32, #tpu.memory_space<vmem>>, %arg9: memref<1x96xf32, #tpu.memory_space<vmem>>, %arg10: memref<32x8xf32, #tpu.memory_space<vmem>>, %arg11: memref<1x8xf32, #tpu.memory_space<vmem>>, %arg12: memref<16x8xf32, #tpu.memory_space<vmem>>) attributes {dimension_semantics = [#tpu.dimension_semantics<arbitrary>], iteration_bounds = array<i64: 1>, scalar_prefetch = 0 : i64, scratch_operands = 0 : i64, tpu.core_type = #tpu.core_type<tc>, window_params = [{pipeline_mode = #tpu.pipeline_mode<synchronous>, transform_indices = @transform_0, window_bounds = array<i64: 16, 16>}, {pipeline_mode = #tpu.pipeline_mode<synchronous>, transform_indices = @transform_1, window_bounds = array<i64: 16, 128>}, {pipeline_mode = #tpu.pipeline_mode<synchronous>, transform_indices = @transform_2, window_bounds = array<i64: 32, 128>}, {pipeline_mode = #tpu.pipeline_mode<synchronous>, transform_indices = @transform_3, window_bounds = array<i64: 1, 128>}, {pipeline_mode = #tpu.pipeline_mode<synchronous>, transform_indices = @transform_4, window_bounds = array<i64: 32, 128>}, {pipeline_mode = #tpu.pipeline_mode<synchronous>, transform_indices = @transform_5, window_bounds = array<i64: 32, 128>}, {pipeline_mode = #tpu.pipeline_mode<synchronous>, transform_indices = @transform_6, window_bounds = array<i64: 1, 128>}, {pipeline_mode = #tpu.pipeline_mode<synchronous>, transform_indices = @transform_7, window_bounds = array<i64: 32, 96>}, {pipeline_mode = #tpu.pipeline_mode<synchronous>, transform_indices = @transform_8, window_bounds = array<i64: 1, 96>}, {pipeline_mode = #tpu.pipeline_mode<synchronous>, transform_indices = @transform_9, window_bounds = array<i64: 32, 8>}, {pipeline_mode = #tpu.pipeline_mode<synchronous>, transform_indices = @transform_10, window_bounds = array<i64: 1, 8>}, {pipeline_mode = #tpu.pipeline_mode<synchronous>, transform_indices = @transform_11, window_bounds = array<i64: 16, 8>}]} {
    %c0 = arith.constant 0 : index
    %c0_0 = arith.constant 0 : index
    %0 = vector.load %arg1[%c0, %c0_0] : memref<16x16xf32, #tpu.memory_space<vmem>>, vector<16x16xf32>
    %c0_1 = arith.constant 0 : index
    %c0_2 = arith.constant 0 : index
    %1 = vector.load %arg2[%c0_1, %c0_2] : memref<16x128xf32, #tpu.memory_space<vmem>>, vector<16x128xf32>
    %c0_3 = arith.constant 0 : index
    %c0_4 = arith.constant 0 : index
    %2 = vector.load %arg3[%c0_3, %c0_4] : memref<32x128xf32, #tpu.memory_space<vmem>>, vector<32x128xf32>
    %c0_5 = arith.constant 0 : index
    %c0_6 = arith.constant 0 : index
    %3 = vector.load %arg4[%c0_5, %c0_6] : memref<1x128xf32, #tpu.memory_space<vmem>>, vector<1x128xf32>
    %cst = arith.constant dense<0.000000e+00> : vector<16x128xf32>
    %4 = tpu.matmul %0, %1, %cst {dimension_numbers = #tpu.dot_dimension_numbers<[1], [0], [0], [1], [0, 0, 1, 1], [], []>} : vector<16x16xf32>, vector<16x128xf32>, vector<16x128xf32> -> vector<16x128xf32>
    %5 = vector.broadcast %3 : vector<1x128xf32> to vector<16x128xf32>
    %6 = arith.addf %4, %5 : vector<16x128xf32>
    %cst_7 = arith.constant 0.000000e+00 : f32
    %7 = vector.broadcast %cst_7 : f32 to vector<2x32xf32>
    %cst_8 = arith.constant 0.000000e+00 : f32
    %8 = vector.broadcast %cst_8 : f32 to vector<2x32xf32>
    %9 = vector.extract_strided_slice %6 {offsets = [0, 0], sizes = [2, 128], strides = [1, 1]} : vector<16x128xf32> to vector<2x128xf32>
    %cst_9 = arith.constant dense<0.000000e+00> : vector<2x128xf32>
    %10 = tpu.matmul %7, %2, %cst_9 {dimension_numbers = #tpu.dot_dimension_numbers<[1], [0], [0], [1], [0, 0, 1, 1], [], []>} : vector<2x32xf32>, vector<32x128xf32>, vector<2x128xf32> -> vector<2x128xf32>
    %11 = arith.addf %9, %10 : vector<2x128xf32>
    %12 = vector.extract_strided_slice %11 {offsets = [0, 0], sizes = [2, 96], strides = [1, 1]} : vector<2x128xf32> to vector<2x96xf32>
    %13 = arith.negf %12 : vector<2x96xf32>
    %14 = math.exp %13 : vector<2x96xf32>
    %cst_10 = arith.constant 1.000000e+00 : f32
    %15 = vector.broadcast %cst_10 : f32 to vector<2x96xf32>
    %16 = arith.addf %15, %14 : vector<2x96xf32>
    %17 = arith.divf %15, %16 : vector<2x96xf32>
    %18 = vector.extract_strided_slice %11 {offsets = [0, 96], sizes = [2, 32], strides = [1, 1]} : vector<2x128xf32> to vector<2x32xf32>
    %19 = math.tanh %18 : vector<2x32xf32>
    %20 = vector.extract_strided_slice %17 {offsets = [0, 0], sizes = [2, 32], strides = [1, 1]} : vector<2x96xf32> to vector<2x32xf32>
    %21 = vector.extract_strided_slice %17 {offsets = [0, 32], sizes = [2, 32], strides = [1, 1]} : vector<2x96xf32> to vector<2x32xf32>
    %22 = vector.extract_strided_slice %17 {offsets = [0, 64], sizes = [2, 32], strides = [1, 1]} : vector<2x96xf32> to vector<2x32xf32>
    %23 = arith.mulf %21, %8 : vector<2x32xf32>
    %24 = arith.mulf %20, %19 : vector<2x32xf32>
    %25 = arith.addf %23, %24 : vector<2x32xf32>
    %26 = math.tanh %25 : vector<2x32xf32>
    %27 = arith.mulf %22, %26 : vector<2x32xf32>
    %28 = vector.extract_strided_slice %6 {offsets = [2, 0], sizes = [2, 128], strides = [1, 1]} : vector<16x128xf32> to vector<2x128xf32>
    %cst_11 = arith.constant dense<0.000000e+00> : vector<2x128xf32>
    %29 = tpu.matmul %27, %2, %cst_11 {dimension_numbers = #tpu.dot_dimension_numbers<[1], [0], [0], [1], [0, 0, 1, 1], [], []>} : vector<2x32xf32>, vector<32x128xf32>, vector<2x128xf32> -> vector<2x128xf32>
    %30 = arith.addf %28, %29 : vector<2x128xf32>
    %31 = vector.extract_strided_slice %30 {offsets = [0, 0], sizes = [2, 96], strides = [1, 1]} : vector<2x128xf32> to vector<2x96xf32>
    %32 = arith.negf %31 : vector<2x96xf32>
    %33 = math.exp %32 : vector<2x96xf32>
    %cst_12 = arith.constant 1.000000e+00 : f32
    %34 = vector.broadcast %cst_12 : f32 to vector<2x96xf32>
    %35 = arith.addf %34, %33 : vector<2x96xf32>
    %36 = arith.divf %34, %35 : vector<2x96xf32>
    %37 = vector.extract_strided_slice %30 {offsets = [0, 96], sizes = [2, 32], strides = [1, 1]} : vector<2x128xf32> to vector<2x32xf32>
    %38 = math.tanh %37 : vector<2x32xf32>
    %39 = vector.extract_strided_slice %36 {offsets = [0, 0], sizes = [2, 32], strides = [1, 1]} : vector<2x96xf32> to vector<2x32xf32>
    %40 = vector.extract_strided_slice %36 {offsets = [0, 32], sizes = [2, 32], strides = [1, 1]} : vector<2x96xf32> to vector<2x32xf32>
    %41 = vector.extract_strided_slice %36 {offsets = [0, 64], sizes = [2, 32], strides = [1, 1]} : vector<2x96xf32> to vector<2x32xf32>
    %42 = arith.mulf %40, %25 : vector<2x32xf32>
    %43 = arith.mulf %39, %38 : vector<2x32xf32>
    %44 = arith.addf %42, %43 : vector<2x32xf32>
    %45 = math.tanh %44 : vector<2x32xf32>
    %46 = arith.mulf %41, %45 : vector<2x32xf32>
    %47 = vector.extract_strided_slice %6 {offsets = [4, 0], sizes = [2, 128], strides = [1, 1]} : vector<16x128xf32> to vector<2x128xf32>
    %cst_13 = arith.constant dense<0.000000e+00> : vector<2x128xf32>
    %48 = tpu.matmul %46, %2, %cst_13 {dimension_numbers = #tpu.dot_dimension_numbers<[1], [0], [0], [1], [0, 0, 1, 1], [], []>} : vector<2x32xf32>, vector<32x128xf32>, vector<2x128xf32> -> vector<2x128xf32>
    %49 = arith.addf %47, %48 : vector<2x128xf32>
    %50 = vector.extract_strided_slice %49 {offsets = [0, 0], sizes = [2, 96], strides = [1, 1]} : vector<2x128xf32> to vector<2x96xf32>
    %51 = arith.negf %50 : vector<2x96xf32>
    %52 = math.exp %51 : vector<2x96xf32>
    %cst_14 = arith.constant 1.000000e+00 : f32
    %53 = vector.broadcast %cst_14 : f32 to vector<2x96xf32>
    %54 = arith.addf %53, %52 : vector<2x96xf32>
    %55 = arith.divf %53, %54 : vector<2x96xf32>
    %56 = vector.extract_strided_slice %49 {offsets = [0, 96], sizes = [2, 32], strides = [1, 1]} : vector<2x128xf32> to vector<2x32xf32>
    %57 = math.tanh %56 : vector<2x32xf32>
    %58 = vector.extract_strided_slice %55 {offsets = [0, 0], sizes = [2, 32], strides = [1, 1]} : vector<2x96xf32> to vector<2x32xf32>
    %59 = vector.extract_strided_slice %55 {offsets = [0, 32], sizes = [2, 32], strides = [1, 1]} : vector<2x96xf32> to vector<2x32xf32>
    %60 = vector.extract_strided_slice %55 {offsets = [0, 64], sizes = [2, 32], strides = [1, 1]} : vector<2x96xf32> to vector<2x32xf32>
    %61 = arith.mulf %59, %44 : vector<2x32xf32>
    %62 = arith.mulf %58, %57 : vector<2x32xf32>
    %63 = arith.addf %61, %62 : vector<2x32xf32>
    %64 = math.tanh %63 : vector<2x32xf32>
    %65 = arith.mulf %60, %64 : vector<2x32xf32>
    %66 = vector.extract_strided_slice %6 {offsets = [6, 0], sizes = [2, 128], strides = [1, 1]} : vector<16x128xf32> to vector<2x128xf32>
    %cst_15 = arith.constant dense<0.000000e+00> : vector<2x128xf32>
    %67 = tpu.matmul %65, %2, %cst_15 {dimension_numbers = #tpu.dot_dimension_numbers<[1], [0], [0], [1], [0, 0, 1, 1], [], []>} : vector<2x32xf32>, vector<32x128xf32>, vector<2x128xf32> -> vector<2x128xf32>
    %68 = arith.addf %66, %67 : vector<2x128xf32>
    %69 = vector.extract_strided_slice %68 {offsets = [0, 0], sizes = [2, 96], strides = [1, 1]} : vector<2x128xf32> to vector<2x96xf32>
    %70 = arith.negf %69 : vector<2x96xf32>
    %71 = math.exp %70 : vector<2x96xf32>
    %cst_16 = arith.constant 1.000000e+00 : f32
    %72 = vector.broadcast %cst_16 : f32 to vector<2x96xf32>
    %73 = arith.addf %72, %71 : vector<2x96xf32>
    %74 = arith.divf %72, %73 : vector<2x96xf32>
    %75 = vector.extract_strided_slice %68 {offsets = [0, 96], sizes = [2, 32], strides = [1, 1]} : vector<2x128xf32> to vector<2x32xf32>
    %76 = math.tanh %75 : vector<2x32xf32>
    %77 = vector.extract_strided_slice %74 {offsets = [0, 0], sizes = [2, 32], strides = [1, 1]} : vector<2x96xf32> to vector<2x32xf32>
    %78 = vector.extract_strided_slice %74 {offsets = [0, 32], sizes = [2, 32], strides = [1, 1]} : vector<2x96xf32> to vector<2x32xf32>
    %79 = vector.extract_strided_slice %74 {offsets = [0, 64], sizes = [2, 32], strides = [1, 1]} : vector<2x96xf32> to vector<2x32xf32>
    %80 = arith.mulf %78, %63 : vector<2x32xf32>
    %81 = arith.mulf %77, %76 : vector<2x32xf32>
    %82 = arith.addf %80, %81 : vector<2x32xf32>
    %83 = math.tanh %82 : vector<2x32xf32>
    %84 = arith.mulf %79, %83 : vector<2x32xf32>
    %85 = vector.extract_strided_slice %6 {offsets = [8, 0], sizes = [2, 128], strides = [1, 1]} : vector<16x128xf32> to vector<2x128xf32>
    %cst_17 = arith.constant dense<0.000000e+00> : vector<2x128xf32>
    %86 = tpu.matmul %84, %2, %cst_17 {dimension_numbers = #tpu.dot_dimension_numbers<[1], [0], [0], [1], [0, 0, 1, 1], [], []>} : vector<2x32xf32>, vector<32x128xf32>, vector<2x128xf32> -> vector<2x128xf32>
    %87 = arith.addf %85, %86 : vector<2x128xf32>
    %88 = vector.extract_strided_slice %87 {offsets = [0, 0], sizes = [2, 96], strides = [1, 1]} : vector<2x128xf32> to vector<2x96xf32>
    %89 = arith.negf %88 : vector<2x96xf32>
    %90 = math.exp %89 : vector<2x96xf32>
    %cst_18 = arith.constant 1.000000e+00 : f32
    %91 = vector.broadcast %cst_18 : f32 to vector<2x96xf32>
    %92 = arith.addf %91, %90 : vector<2x96xf32>
    %93 = arith.divf %91, %92 : vector<2x96xf32>
    %94 = vector.extract_strided_slice %87 {offsets = [0, 96], sizes = [2, 32], strides = [1, 1]} : vector<2x128xf32> to vector<2x32xf32>
    %95 = math.tanh %94 : vector<2x32xf32>
    %96 = vector.extract_strided_slice %93 {offsets = [0, 0], sizes = [2, 32], strides = [1, 1]} : vector<2x96xf32> to vector<2x32xf32>
    %97 = vector.extract_strided_slice %93 {offsets = [0, 32], sizes = [2, 32], strides = [1, 1]} : vector<2x96xf32> to vector<2x32xf32>
    %98 = vector.extract_strided_slice %93 {offsets = [0, 64], sizes = [2, 32], strides = [1, 1]} : vector<2x96xf32> to vector<2x32xf32>
    %99 = arith.mulf %97, %82 : vector<2x32xf32>
    %100 = arith.mulf %96, %95 : vector<2x32xf32>
    %101 = arith.addf %99, %100 : vector<2x32xf32>
    %102 = math.tanh %101 : vector<2x32xf32>
    %103 = arith.mulf %98, %102 : vector<2x32xf32>
    %104 = vector.extract_strided_slice %6 {offsets = [10, 0], sizes = [2, 128], strides = [1, 1]} : vector<16x128xf32> to vector<2x128xf32>
    %cst_19 = arith.constant dense<0.000000e+00> : vector<2x128xf32>
    %105 = tpu.matmul %103, %2, %cst_19 {dimension_numbers = #tpu.dot_dimension_numbers<[1], [0], [0], [1], [0, 0, 1, 1], [], []>} : vector<2x32xf32>, vector<32x128xf32>, vector<2x128xf32> -> vector<2x128xf32>
    %106 = arith.addf %104, %105 : vector<2x128xf32>
    %107 = vector.extract_strided_slice %106 {offsets = [0, 0], sizes = [2, 96], strides = [1, 1]} : vector<2x128xf32> to vector<2x96xf32>
    %108 = arith.negf %107 : vector<2x96xf32>
    %109 = math.exp %108 : vector<2x96xf32>
    %cst_20 = arith.constant 1.000000e+00 : f32
    %110 = vector.broadcast %cst_20 : f32 to vector<2x96xf32>
    %111 = arith.addf %110, %109 : vector<2x96xf32>
    %112 = arith.divf %110, %111 : vector<2x96xf32>
    %113 = vector.extract_strided_slice %106 {offsets = [0, 96], sizes = [2, 32], strides = [1, 1]} : vector<2x128xf32> to vector<2x32xf32>
    %114 = math.tanh %113 : vector<2x32xf32>
    %115 = vector.extract_strided_slice %112 {offsets = [0, 0], sizes = [2, 32], strides = [1, 1]} : vector<2x96xf32> to vector<2x32xf32>
    %116 = vector.extract_strided_slice %112 {offsets = [0, 32], sizes = [2, 32], strides = [1, 1]} : vector<2x96xf32> to vector<2x32xf32>
    %117 = vector.extract_strided_slice %112 {offsets = [0, 64], sizes = [2, 32], strides = [1, 1]} : vector<2x96xf32> to vector<2x32xf32>
    %118 = arith.mulf %116, %101 : vector<2x32xf32>
    %119 = arith.mulf %115, %114 : vector<2x32xf32>
    %120 = arith.addf %118, %119 : vector<2x32xf32>
    %121 = math.tanh %120 : vector<2x32xf32>
    %122 = arith.mulf %117, %121 : vector<2x32xf32>
    %123 = vector.extract_strided_slice %6 {offsets = [12, 0], sizes = [2, 128], strides = [1, 1]} : vector<16x128xf32> to vector<2x128xf32>
    %cst_21 = arith.constant dense<0.000000e+00> : vector<2x128xf32>
    %124 = tpu.matmul %122, %2, %cst_21 {dimension_numbers = #tpu.dot_dimension_numbers<[1], [0], [0], [1], [0, 0, 1, 1], [], []>} : vector<2x32xf32>, vector<32x128xf32>, vector<2x128xf32> -> vector<2x128xf32>
    %125 = arith.addf %123, %124 : vector<2x128xf32>
    %126 = vector.extract_strided_slice %125 {offsets = [0, 0], sizes = [2, 96], strides = [1, 1]} : vector<2x128xf32> to vector<2x96xf32>
    %127 = arith.negf %126 : vector<2x96xf32>
    %128 = math.exp %127 : vector<2x96xf32>
    %cst_22 = arith.constant 1.000000e+00 : f32
    %129 = vector.broadcast %cst_22 : f32 to vector<2x96xf32>
    %130 = arith.addf %129, %128 : vector<2x96xf32>
    %131 = arith.divf %129, %130 : vector<2x96xf32>
    %132 = vector.extract_strided_slice %125 {offsets = [0, 96], sizes = [2, 32], strides = [1, 1]} : vector<2x128xf32> to vector<2x32xf32>
    %133 = math.tanh %132 : vector<2x32xf32>
    %134 = vector.extract_strided_slice %131 {offsets = [0, 0], sizes = [2, 32], strides = [1, 1]} : vector<2x96xf32> to vector<2x32xf32>
    %135 = vector.extract_strided_slice %131 {offsets = [0, 32], sizes = [2, 32], strides = [1, 1]} : vector<2x96xf32> to vector<2x32xf32>
    %136 = vector.extract_strided_slice %131 {offsets = [0, 64], sizes = [2, 32], strides = [1, 1]} : vector<2x96xf32> to vector<2x32xf32>
    %137 = arith.mulf %135, %120 : vector<2x32xf32>
    %138 = arith.mulf %134, %133 : vector<2x32xf32>
    %139 = arith.addf %137, %138 : vector<2x32xf32>
    %140 = math.tanh %139 : vector<2x32xf32>
    %141 = arith.mulf %136, %140 : vector<2x32xf32>
    %142 = vector.extract_strided_slice %6 {offsets = [14, 0], sizes = [2, 128], strides = [1, 1]} : vector<16x128xf32> to vector<2x128xf32>
    %cst_23 = arith.constant dense<0.000000e+00> : vector<2x128xf32>
    %143 = tpu.matmul %141, %2, %cst_23 {dimension_numbers = #tpu.dot_dimension_numbers<[1], [0], [0], [1], [0, 0, 1, 1], [], []>} : vector<2x32xf32>, vector<32x128xf32>, vector<2x128xf32> -> vector<2x128xf32>
    %144 = arith.addf %142, %143 : vector<2x128xf32>
    %145 = vector.extract_strided_slice %144 {offsets = [0, 0], sizes = [2, 96], strides = [1, 1]} : vector<2x128xf32> to vector<2x96xf32>
    %146 = arith.negf %145 : vector<2x96xf32>
    %147 = math.exp %146 : vector<2x96xf32>
    %cst_24 = arith.constant 1.000000e+00 : f32
    %148 = vector.broadcast %cst_24 : f32 to vector<2x96xf32>
    %149 = arith.addf %148, %147 : vector<2x96xf32>
    %150 = arith.divf %148, %149 : vector<2x96xf32>
    %151 = vector.extract_strided_slice %144 {offsets = [0, 96], sizes = [2, 32], strides = [1, 1]} : vector<2x128xf32> to vector<2x32xf32>
    %152 = math.tanh %151 : vector<2x32xf32>
    %153 = vector.extract_strided_slice %150 {offsets = [0, 0], sizes = [2, 32], strides = [1, 1]} : vector<2x96xf32> to vector<2x32xf32>
    %154 = vector.extract_strided_slice %150 {offsets = [0, 32], sizes = [2, 32], strides = [1, 1]} : vector<2x96xf32> to vector<2x32xf32>
    %155 = vector.extract_strided_slice %150 {offsets = [0, 64], sizes = [2, 32], strides = [1, 1]} : vector<2x96xf32> to vector<2x32xf32>
    %156 = arith.mulf %154, %139 : vector<2x32xf32>
    %157 = arith.mulf %153, %152 : vector<2x32xf32>
    %158 = arith.addf %156, %157 : vector<2x32xf32>
    %159 = math.tanh %158 : vector<2x32xf32>
    %160 = arith.mulf %155, %159 : vector<2x32xf32>
    %161 = tpu.concatenate %27, %46, %65, %84, %103, %122, %141, %160 in 0 : vector<2x32xf32>, vector<2x32xf32>, vector<2x32xf32>, vector<2x32xf32>, vector<2x32xf32>, vector<2x32xf32>, vector<2x32xf32>, vector<2x32xf32> -> vector<16x32xf32>
    %c0_25 = arith.constant 0 : index
    %c0_26 = arith.constant 0 : index
    %162 = vector.load %arg5[%c0_25, %c0_26] : memref<32x128xf32, #tpu.memory_space<vmem>>, vector<32x128xf32>
    %c0_27 = arith.constant 0 : index
    %c0_28 = arith.constant 0 : index
    %163 = vector.load %arg6[%c0_27, %c0_28] : memref<32x128xf32, #tpu.memory_space<vmem>>, vector<32x128xf32>
    %c0_29 = arith.constant 0 : index
    %c0_30 = arith.constant 0 : index
    %164 = vector.load %arg7[%c0_29, %c0_30] : memref<1x128xf32, #tpu.memory_space<vmem>>, vector<1x128xf32>
    %cst_31 = arith.constant dense<0.000000e+00> : vector<16x128xf32>
    %165 = tpu.matmul %161, %162, %cst_31 {dimension_numbers = #tpu.dot_dimension_numbers<[1], [0], [0], [1], [0, 0, 1, 1], [], []>} : vector<16x32xf32>, vector<32x128xf32>, vector<16x128xf32> -> vector<16x128xf32>
    %166 = vector.broadcast %164 : vector<1x128xf32> to vector<16x128xf32>
    %167 = arith.addf %165, %166 : vector<16x128xf32>
    %cst_32 = arith.constant 0.000000e+00 : f32
    %168 = vector.broadcast %cst_32 : f32 to vector<2x32xf32>
    %cst_33 = arith.constant 0.000000e+00 : f32
    %169 = vector.broadcast %cst_33 : f32 to vector<2x32xf32>
    %170 = vector.extract_strided_slice %167 {offsets = [0, 0], sizes = [2, 128], strides = [1, 1]} : vector<16x128xf32> to vector<2x128xf32>
    %cst_34 = arith.constant dense<0.000000e+00> : vector<2x128xf32>
    %171 = tpu.matmul %168, %163, %cst_34 {dimension_numbers = #tpu.dot_dimension_numbers<[1], [0], [0], [1], [0, 0, 1, 1], [], []>} : vector<2x32xf32>, vector<32x128xf32>, vector<2x128xf32> -> vector<2x128xf32>
    %172 = arith.addf %170, %171 : vector<2x128xf32>
    %173 = vector.extract_strided_slice %172 {offsets = [0, 0], sizes = [2, 96], strides = [1, 1]} : vector<2x128xf32> to vector<2x96xf32>
    %174 = arith.negf %173 : vector<2x96xf32>
    %175 = math.exp %174 : vector<2x96xf32>
    %cst_35 = arith.constant 1.000000e+00 : f32
    %176 = vector.broadcast %cst_35 : f32 to vector<2x96xf32>
    %177 = arith.addf %176, %175 : vector<2x96xf32>
    %178 = arith.divf %176, %177 : vector<2x96xf32>
    %179 = vector.extract_strided_slice %172 {offsets = [0, 96], sizes = [2, 32], strides = [1, 1]} : vector<2x128xf32> to vector<2x32xf32>
    %180 = math.tanh %179 : vector<2x32xf32>
    %181 = vector.extract_strided_slice %178 {offsets = [0, 0], sizes = [2, 32], strides = [1, 1]} : vector<2x96xf32> to vector<2x32xf32>
    %182 = vector.extract_strided_slice %178 {offsets = [0, 32], sizes = [2, 32], strides = [1, 1]} : vector<2x96xf32> to vector<2x32xf32>
    %183 = vector.extract_strided_slice %178 {offsets = [0, 64], sizes = [2, 32], strides = [1, 1]} : vector<2x96xf32> to vector<2x32xf32>
    %184 = arith.mulf %182, %169 : vector<2x32xf32>
    %185 = arith.mulf %181, %180 : vector<2x32xf32>
    %186 = arith.addf %184, %185 : vector<2x32xf32>
    %187 = math.tanh %186 : vector<2x32xf32>
    %188 = arith.mulf %183, %187 : vector<2x32xf32>
    %189 = vector.extract_strided_slice %167 {offsets = [2, 0], sizes = [2, 128], strides = [1, 1]} : vector<16x128xf32> to vector<2x128xf32>
    %cst_36 = arith.constant dense<0.000000e+00> : vector<2x128xf32>
    %190 = tpu.matmul %188, %163, %cst_36 {dimension_numbers = #tpu.dot_dimension_numbers<[1], [0], [0], [1], [0, 0, 1, 1], [], []>} : vector<2x32xf32>, vector<32x128xf32>, vector<2x128xf32> -> vector<2x128xf32>
    %191 = arith.addf %189, %190 : vector<2x128xf32>
    %192 = vector.extract_strided_slice %191 {offsets = [0, 0], sizes = [2, 96], strides = [1, 1]} : vector<2x128xf32> to vector<2x96xf32>
    %193 = arith.negf %192 : vector<2x96xf32>
    %194 = math.exp %193 : vector<2x96xf32>
    %cst_37 = arith.constant 1.000000e+00 : f32
    %195 = vector.broadcast %cst_37 : f32 to vector<2x96xf32>
    %196 = arith.addf %195, %194 : vector<2x96xf32>
    %197 = arith.divf %195, %196 : vector<2x96xf32>
    %198 = vector.extract_strided_slice %191 {offsets = [0, 96], sizes = [2, 32], strides = [1, 1]} : vector<2x128xf32> to vector<2x32xf32>
    %199 = math.tanh %198 : vector<2x32xf32>
    %200 = vector.extract_strided_slice %197 {offsets = [0, 0], sizes = [2, 32], strides = [1, 1]} : vector<2x96xf32> to vector<2x32xf32>
    %201 = vector.extract_strided_slice %197 {offsets = [0, 32], sizes = [2, 32], strides = [1, 1]} : vector<2x96xf32> to vector<2x32xf32>
    %202 = vector.extract_strided_slice %197 {offsets = [0, 64], sizes = [2, 32], strides = [1, 1]} : vector<2x96xf32> to vector<2x32xf32>
    %203 = arith.mulf %201, %186 : vector<2x32xf32>
    %204 = arith.mulf %200, %199 : vector<2x32xf32>
    %205 = arith.addf %203, %204 : vector<2x32xf32>
    %206 = math.tanh %205 : vector<2x32xf32>
    %207 = arith.mulf %202, %206 : vector<2x32xf32>
    %208 = vector.extract_strided_slice %167 {offsets = [4, 0], sizes = [2, 128], strides = [1, 1]} : vector<16x128xf32> to vector<2x128xf32>
    %cst_38 = arith.constant dense<0.000000e+00> : vector<2x128xf32>
    %209 = tpu.matmul %207, %163, %cst_38 {dimension_numbers = #tpu.dot_dimension_numbers<[1], [0], [0], [1], [0, 0, 1, 1], [], []>} : vector<2x32xf32>, vector<32x128xf32>, vector<2x128xf32> -> vector<2x128xf32>
    %210 = arith.addf %208, %209 : vector<2x128xf32>
    %211 = vector.extract_strided_slice %210 {offsets = [0, 0], sizes = [2, 96], strides = [1, 1]} : vector<2x128xf32> to vector<2x96xf32>
    %212 = arith.negf %211 : vector<2x96xf32>
    %213 = math.exp %212 : vector<2x96xf32>
    %cst_39 = arith.constant 1.000000e+00 : f32
    %214 = vector.broadcast %cst_39 : f32 to vector<2x96xf32>
    %215 = arith.addf %214, %213 : vector<2x96xf32>
    %216 = arith.divf %214, %215 : vector<2x96xf32>
    %217 = vector.extract_strided_slice %210 {offsets = [0, 96], sizes = [2, 32], strides = [1, 1]} : vector<2x128xf32> to vector<2x32xf32>
    %218 = math.tanh %217 : vector<2x32xf32>
    %219 = vector.extract_strided_slice %216 {offsets = [0, 0], sizes = [2, 32], strides = [1, 1]} : vector<2x96xf32> to vector<2x32xf32>
    %220 = vector.extract_strided_slice %216 {offsets = [0, 32], sizes = [2, 32], strides = [1, 1]} : vector<2x96xf32> to vector<2x32xf32>
    %221 = vector.extract_strided_slice %216 {offsets = [0, 64], sizes = [2, 32], strides = [1, 1]} : vector<2x96xf32> to vector<2x32xf32>
    %222 = arith.mulf %220, %205 : vector<2x32xf32>
    %223 = arith.mulf %219, %218 : vector<2x32xf32>
    %224 = arith.addf %222, %223 : vector<2x32xf32>
    %225 = math.tanh %224 : vector<2x32xf32>
    %226 = arith.mulf %221, %225 : vector<2x32xf32>
    %227 = vector.extract_strided_slice %167 {offsets = [6, 0], sizes = [2, 128], strides = [1, 1]} : vector<16x128xf32> to vector<2x128xf32>
    %cst_40 = arith.constant dense<0.000000e+00> : vector<2x128xf32>
    %228 = tpu.matmul %226, %163, %cst_40 {dimension_numbers = #tpu.dot_dimension_numbers<[1], [0], [0], [1], [0, 0, 1, 1], [], []>} : vector<2x32xf32>, vector<32x128xf32>, vector<2x128xf32> -> vector<2x128xf32>
    %229 = arith.addf %227, %228 : vector<2x128xf32>
    %230 = vector.extract_strided_slice %229 {offsets = [0, 0], sizes = [2, 96], strides = [1, 1]} : vector<2x128xf32> to vector<2x96xf32>
    %231 = arith.negf %230 : vector<2x96xf32>
    %232 = math.exp %231 : vector<2x96xf32>
    %cst_41 = arith.constant 1.000000e+00 : f32
    %233 = vector.broadcast %cst_41 : f32 to vector<2x96xf32>
    %234 = arith.addf %233, %232 : vector<2x96xf32>
    %235 = arith.divf %233, %234 : vector<2x96xf32>
    %236 = vector.extract_strided_slice %229 {offsets = [0, 96], sizes = [2, 32], strides = [1, 1]} : vector<2x128xf32> to vector<2x32xf32>
    %237 = math.tanh %236 : vector<2x32xf32>
    %238 = vector.extract_strided_slice %235 {offsets = [0, 0], sizes = [2, 32], strides = [1, 1]} : vector<2x96xf32> to vector<2x32xf32>
    %239 = vector.extract_strided_slice %235 {offsets = [0, 32], sizes = [2, 32], strides = [1, 1]} : vector<2x96xf32> to vector<2x32xf32>
    %240 = vector.extract_strided_slice %235 {offsets = [0, 64], sizes = [2, 32], strides = [1, 1]} : vector<2x96xf32> to vector<2x32xf32>
    %241 = arith.mulf %239, %224 : vector<2x32xf32>
    %242 = arith.mulf %238, %237 : vector<2x32xf32>
    %243 = arith.addf %241, %242 : vector<2x32xf32>
    %244 = math.tanh %243 : vector<2x32xf32>
    %245 = arith.mulf %240, %244 : vector<2x32xf32>
    %246 = vector.extract_strided_slice %167 {offsets = [8, 0], sizes = [2, 128], strides = [1, 1]} : vector<16x128xf32> to vector<2x128xf32>
    %cst_42 = arith.constant dense<0.000000e+00> : vector<2x128xf32>
    %247 = tpu.matmul %245, %163, %cst_42 {dimension_numbers = #tpu.dot_dimension_numbers<[1], [0], [0], [1], [0, 0, 1, 1], [], []>} : vector<2x32xf32>, vector<32x128xf32>, vector<2x128xf32> -> vector<2x128xf32>
    %248 = arith.addf %246, %247 : vector<2x128xf32>
    %249 = vector.extract_strided_slice %248 {offsets = [0, 0], sizes = [2, 96], strides = [1, 1]} : vector<2x128xf32> to vector<2x96xf32>
    %250 = arith.negf %249 : vector<2x96xf32>
    %251 = math.exp %250 : vector<2x96xf32>
    %cst_43 = arith.constant 1.000000e+00 : f32
    %252 = vector.broadcast %cst_43 : f32 to vector<2x96xf32>
    %253 = arith.addf %252, %251 : vector<2x96xf32>
    %254 = arith.divf %252, %253 : vector<2x96xf32>
    %255 = vector.extract_strided_slice %248 {offsets = [0, 96], sizes = [2, 32], strides = [1, 1]} : vector<2x128xf32> to vector<2x32xf32>
    %256 = math.tanh %255 : vector<2x32xf32>
    %257 = vector.extract_strided_slice %254 {offsets = [0, 0], sizes = [2, 32], strides = [1, 1]} : vector<2x96xf32> to vector<2x32xf32>
    %258 = vector.extract_strided_slice %254 {offsets = [0, 32], sizes = [2, 32], strides = [1, 1]} : vector<2x96xf32> to vector<2x32xf32>
    %259 = vector.extract_strided_slice %254 {offsets = [0, 64], sizes = [2, 32], strides = [1, 1]} : vector<2x96xf32> to vector<2x32xf32>
    %260 = arith.mulf %258, %243 : vector<2x32xf32>
    %261 = arith.mulf %257, %256 : vector<2x32xf32>
    %262 = arith.addf %260, %261 : vector<2x32xf32>
    %263 = math.tanh %262 : vector<2x32xf32>
    %264 = arith.mulf %259, %263 : vector<2x32xf32>
    %265 = vector.extract_strided_slice %167 {offsets = [10, 0], sizes = [2, 128], strides = [1, 1]} : vector<16x128xf32> to vector<2x128xf32>
    %cst_44 = arith.constant dense<0.000000e+00> : vector<2x128xf32>
    %266 = tpu.matmul %264, %163, %cst_44 {dimension_numbers = #tpu.dot_dimension_numbers<[1], [0], [0], [1], [0, 0, 1, 1], [], []>} : vector<2x32xf32>, vector<32x128xf32>, vector<2x128xf32> -> vector<2x128xf32>
    %267 = arith.addf %265, %266 : vector<2x128xf32>
    %268 = vector.extract_strided_slice %267 {offsets = [0, 0], sizes = [2, 96], strides = [1, 1]} : vector<2x128xf32> to vector<2x96xf32>
    %269 = arith.negf %268 : vector<2x96xf32>
    %270 = math.exp %269 : vector<2x96xf32>
    %cst_45 = arith.constant 1.000000e+00 : f32
    %271 = vector.broadcast %cst_45 : f32 to vector<2x96xf32>
    %272 = arith.addf %271, %270 : vector<2x96xf32>
    %273 = arith.divf %271, %272 : vector<2x96xf32>
    %274 = vector.extract_strided_slice %267 {offsets = [0, 96], sizes = [2, 32], strides = [1, 1]} : vector<2x128xf32> to vector<2x32xf32>
    %275 = math.tanh %274 : vector<2x32xf32>
    %276 = vector.extract_strided_slice %273 {offsets = [0, 0], sizes = [2, 32], strides = [1, 1]} : vector<2x96xf32> to vector<2x32xf32>
    %277 = vector.extract_strided_slice %273 {offsets = [0, 32], sizes = [2, 32], strides = [1, 1]} : vector<2x96xf32> to vector<2x32xf32>
    %278 = vector.extract_strided_slice %273 {offsets = [0, 64], sizes = [2, 32], strides = [1, 1]} : vector<2x96xf32> to vector<2x32xf32>
    %279 = arith.mulf %277, %262 : vector<2x32xf32>
    %280 = arith.mulf %276, %275 : vector<2x32xf32>
    %281 = arith.addf %279, %280 : vector<2x32xf32>
    %282 = math.tanh %281 : vector<2x32xf32>
    %283 = arith.mulf %278, %282 : vector<2x32xf32>
    %284 = vector.extract_strided_slice %167 {offsets = [12, 0], sizes = [2, 128], strides = [1, 1]} : vector<16x128xf32> to vector<2x128xf32>
    %cst_46 = arith.constant dense<0.000000e+00> : vector<2x128xf32>
    %285 = tpu.matmul %283, %163, %cst_46 {dimension_numbers = #tpu.dot_dimension_numbers<[1], [0], [0], [1], [0, 0, 1, 1], [], []>} : vector<2x32xf32>, vector<32x128xf32>, vector<2x128xf32> -> vector<2x128xf32>
    %286 = arith.addf %284, %285 : vector<2x128xf32>
    %287 = vector.extract_strided_slice %286 {offsets = [0, 0], sizes = [2, 96], strides = [1, 1]} : vector<2x128xf32> to vector<2x96xf32>
    %288 = arith.negf %287 : vector<2x96xf32>
    %289 = math.exp %288 : vector<2x96xf32>
    %cst_47 = arith.constant 1.000000e+00 : f32
    %290 = vector.broadcast %cst_47 : f32 to vector<2x96xf32>
    %291 = arith.addf %290, %289 : vector<2x96xf32>
    %292 = arith.divf %290, %291 : vector<2x96xf32>
    %293 = vector.extract_strided_slice %286 {offsets = [0, 96], sizes = [2, 32], strides = [1, 1]} : vector<2x128xf32> to vector<2x32xf32>
    %294 = math.tanh %293 : vector<2x32xf32>
    %295 = vector.extract_strided_slice %292 {offsets = [0, 0], sizes = [2, 32], strides = [1, 1]} : vector<2x96xf32> to vector<2x32xf32>
    %296 = vector.extract_strided_slice %292 {offsets = [0, 32], sizes = [2, 32], strides = [1, 1]} : vector<2x96xf32> to vector<2x32xf32>
    %297 = vector.extract_strided_slice %292 {offsets = [0, 64], sizes = [2, 32], strides = [1, 1]} : vector<2x96xf32> to vector<2x32xf32>
    %298 = arith.mulf %296, %281 : vector<2x32xf32>
    %299 = arith.mulf %295, %294 : vector<2x32xf32>
    %300 = arith.addf %298, %299 : vector<2x32xf32>
    %301 = math.tanh %300 : vector<2x32xf32>
    %302 = arith.mulf %297, %301 : vector<2x32xf32>
    %303 = vector.extract_strided_slice %167 {offsets = [14, 0], sizes = [2, 128], strides = [1, 1]} : vector<16x128xf32> to vector<2x128xf32>
    %cst_48 = arith.constant dense<0.000000e+00> : vector<2x128xf32>
    %304 = tpu.matmul %302, %163, %cst_48 {dimension_numbers = #tpu.dot_dimension_numbers<[1], [0], [0], [1], [0, 0, 1, 1], [], []>} : vector<2x32xf32>, vector<32x128xf32>, vector<2x128xf32> -> vector<2x128xf32>
    %305 = arith.addf %303, %304 : vector<2x128xf32>
    %306 = vector.extract_strided_slice %305 {offsets = [0, 0], sizes = [2, 96], strides = [1, 1]} : vector<2x128xf32> to vector<2x96xf32>
    %307 = arith.negf %306 : vector<2x96xf32>
    %308 = math.exp %307 : vector<2x96xf32>
    %cst_49 = arith.constant 1.000000e+00 : f32
    %309 = vector.broadcast %cst_49 : f32 to vector<2x96xf32>
    %310 = arith.addf %309, %308 : vector<2x96xf32>
    %311 = arith.divf %309, %310 : vector<2x96xf32>
    %312 = vector.extract_strided_slice %305 {offsets = [0, 96], sizes = [2, 32], strides = [1, 1]} : vector<2x128xf32> to vector<2x32xf32>
    %313 = math.tanh %312 : vector<2x32xf32>
    %314 = vector.extract_strided_slice %311 {offsets = [0, 0], sizes = [2, 32], strides = [1, 1]} : vector<2x96xf32> to vector<2x32xf32>
    %315 = vector.extract_strided_slice %311 {offsets = [0, 32], sizes = [2, 32], strides = [1, 1]} : vector<2x96xf32> to vector<2x32xf32>
    %316 = vector.extract_strided_slice %311 {offsets = [0, 64], sizes = [2, 32], strides = [1, 1]} : vector<2x96xf32> to vector<2x32xf32>
    %317 = arith.mulf %315, %300 : vector<2x32xf32>
    %318 = arith.mulf %314, %313 : vector<2x32xf32>
    %319 = arith.addf %317, %318 : vector<2x32xf32>
    %320 = math.tanh %319 : vector<2x32xf32>
    %321 = arith.mulf %316, %320 : vector<2x32xf32>
    %c0_50 = arith.constant 0 : index
    %c0_51 = arith.constant 0 : index
    %322 = vector.load %arg8[%c0_50, %c0_51] : memref<32x96xf32, #tpu.memory_space<vmem>>, vector<32x96xf32>
    %c0_52 = arith.constant 0 : index
    %c0_53 = arith.constant 0 : index
    %323 = vector.load %arg9[%c0_52, %c0_53] : memref<1x96xf32, #tpu.memory_space<vmem>>, vector<1x96xf32>
    %c0_54 = arith.constant 0 : index
    %c0_55 = arith.constant 0 : index
    %324 = vector.load %arg10[%c0_54, %c0_55] : memref<32x8xf32, #tpu.memory_space<vmem>>, vector<32x8xf32>
    %c0_56 = arith.constant 0 : index
    %c0_57 = arith.constant 0 : index
    %325 = vector.load %arg11[%c0_56, %c0_57] : memref<1x8xf32, #tpu.memory_space<vmem>>, vector<1x8xf32>
    %326 = vector.extract_strided_slice %188 {offsets = [0, 0], sizes = [1, 32], strides = [1, 1]} : vector<2x32xf32> to vector<1x32xf32>
    %327 = vector.extract_strided_slice %207 {offsets = [0, 0], sizes = [1, 32], strides = [1, 1]} : vector<2x32xf32> to vector<1x32xf32>
    %328 = vector.extract_strided_slice %226 {offsets = [0, 0], sizes = [1, 32], strides = [1, 1]} : vector<2x32xf32> to vector<1x32xf32>
    %329 = vector.extract_strided_slice %245 {offsets = [0, 0], sizes = [1, 32], strides = [1, 1]} : vector<2x32xf32> to vector<1x32xf32>
    %330 = vector.extract_strided_slice %264 {offsets = [0, 0], sizes = [1, 32], strides = [1, 1]} : vector<2x32xf32> to vector<1x32xf32>
    %331 = vector.extract_strided_slice %283 {offsets = [0, 0], sizes = [1, 32], strides = [1, 1]} : vector<2x32xf32> to vector<1x32xf32>
    %332 = vector.extract_strided_slice %302 {offsets = [0, 0], sizes = [1, 32], strides = [1, 1]} : vector<2x32xf32> to vector<1x32xf32>
    %333 = vector.extract_strided_slice %321 {offsets = [0, 0], sizes = [1, 32], strides = [1, 1]} : vector<2x32xf32> to vector<1x32xf32>
    %334 = tpu.concatenate %326, %327, %328, %329, %330, %331, %332, %333 in 0 : vector<1x32xf32>, vector<1x32xf32>, vector<1x32xf32>, vector<1x32xf32>, vector<1x32xf32>, vector<1x32xf32>, vector<1x32xf32>, vector<1x32xf32> -> vector<8x32xf32>
    %cst_58 = arith.constant dense<0.000000e+00> : vector<8x96xf32>
    %335 = tpu.matmul %334, %322, %cst_58 {dimension_numbers = #tpu.dot_dimension_numbers<[1], [0], [0], [1], [0, 0, 1, 1], [], []>} : vector<8x32xf32>, vector<32x96xf32>, vector<8x96xf32> -> vector<8x96xf32>
    %336 = vector.broadcast %323 : vector<1x96xf32> to vector<8x96xf32>
    %337 = arith.addf %335, %336 : vector<8x96xf32>
    %338 = vector.extract_strided_slice %337 {offsets = [0, 0], sizes = [8, 32], strides = [1, 1]} : vector<8x96xf32> to vector<8x32xf32>
    %339 = vector.extract_strided_slice %337 {offsets = [0, 32], sizes = [8, 32], strides = [1, 1]} : vector<8x96xf32> to vector<8x32xf32>
    %340 = vector.extract_strided_slice %337 {offsets = [0, 64], sizes = [8, 32], strides = [1, 1]} : vector<8x96xf32> to vector<8x32xf32>
    %cst_59 = arith.constant dense<0.000000e+00> : vector<8x8xf32>
    %341 = tpu.matmul %338, %339, %cst_59 {dimension_numbers = #tpu.dot_dimension_numbers<[1], [1], [0], [0], [0, 0, 1, 0], [], []>} : vector<8x32xf32>, vector<8x32xf32>, vector<8x8xf32> -> vector<8x8xf32>
    %cst_60 = arith.constant 0.176776692 : f32
    %342 = vector.broadcast %cst_60 : f32 to vector<8x8xf32>
    %343 = arith.mulf %341, %342 : vector<8x8xf32>
    %cst_61 = arith.constant dense<0xFF800000> : vector<8xf32>
    %344 = vector.multi_reduction <maximumf>, %343, %cst_61 [1] : vector<8x8xf32> to vector<8xf32>
    %345 = vector.shape_cast %344 : vector<8xf32> to vector<8x1xf32>
    %346 = vector.broadcast %345 : vector<8x1xf32> to vector<8x8xf32>
    %347 = arith.subf %343, %346 : vector<8x8xf32>
    %348 = math.exp %347 : vector<8x8xf32>
    %cst_62 = arith.constant dense<0.000000e+00> : vector<8xf32>
    %349 = vector.multi_reduction <add>, %348, %cst_62 [1] : vector<8x8xf32> to vector<8xf32>
    %350 = vector.shape_cast %349 : vector<8xf32> to vector<8x1xf32>
    %351 = tpu.reciprocal %350 {approx = true} : vector<8x1xf32> -> vector<8x1xf32>
    %352 = vector.broadcast %351 : vector<8x1xf32> to vector<8x8xf32>
    %353 = arith.mulf %348, %352 : vector<8x8xf32>
    %cst_63 = arith.constant dense<0.000000e+00> : vector<8x32xf32>
    %354 = tpu.matmul %353, %340, %cst_63 {dimension_numbers = #tpu.dot_dimension_numbers<[1], [0], [0], [1], [0, 0, 1, 1], [], []>} : vector<8x8xf32>, vector<8x32xf32>, vector<8x32xf32> -> vector<8x32xf32>
    %cst_64 = arith.constant dense<0.000000e+00> : vector<8x8xf32>
    %355 = tpu.matmul %354, %324, %cst_64 {dimension_numbers = #tpu.dot_dimension_numbers<[1], [0], [0], [1], [0, 0, 1, 1], [], []>} : vector<8x32xf32>, vector<32x8xf32>, vector<8x8xf32> -> vector<8x8xf32>
    %356 = vector.broadcast %325 : vector<1x8xf32> to vector<8x8xf32>
    %357 = arith.addf %355, %356 : vector<8x8xf32>
    %358 = vector.extract_strided_slice %188 {offsets = [1, 0], sizes = [1, 32], strides = [1, 1]} : vector<2x32xf32> to vector<1x32xf32>
    %359 = vector.extract_strided_slice %207 {offsets = [1, 0], sizes = [1, 32], strides = [1, 1]} : vector<2x32xf32> to vector<1x32xf32>
    %360 = vector.extract_strided_slice %226 {offsets = [1, 0], sizes = [1, 32], strides = [1, 1]} : vector<2x32xf32> to vector<1x32xf32>
    %361 = vector.extract_strided_slice %245 {offsets = [1, 0], sizes = [1, 32], strides = [1, 1]} : vector<2x32xf32> to vector<1x32xf32>
    %362 = vector.extract_strided_slice %264 {offsets = [1, 0], sizes = [1, 32], strides = [1, 1]} : vector<2x32xf32> to vector<1x32xf32>
    %363 = vector.extract_strided_slice %283 {offsets = [1, 0], sizes = [1, 32], strides = [1, 1]} : vector<2x32xf32> to vector<1x32xf32>
    %364 = vector.extract_strided_slice %302 {offsets = [1, 0], sizes = [1, 32], strides = [1, 1]} : vector<2x32xf32> to vector<1x32xf32>
    %365 = vector.extract_strided_slice %321 {offsets = [1, 0], sizes = [1, 32], strides = [1, 1]} : vector<2x32xf32> to vector<1x32xf32>
    %366 = tpu.concatenate %358, %359, %360, %361, %362, %363, %364, %365 in 0 : vector<1x32xf32>, vector<1x32xf32>, vector<1x32xf32>, vector<1x32xf32>, vector<1x32xf32>, vector<1x32xf32>, vector<1x32xf32>, vector<1x32xf32> -> vector<8x32xf32>
    %cst_65 = arith.constant dense<0.000000e+00> : vector<8x96xf32>
    %367 = tpu.matmul %366, %322, %cst_65 {dimension_numbers = #tpu.dot_dimension_numbers<[1], [0], [0], [1], [0, 0, 1, 1], [], []>} : vector<8x32xf32>, vector<32x96xf32>, vector<8x96xf32> -> vector<8x96xf32>
    %368 = vector.broadcast %323 : vector<1x96xf32> to vector<8x96xf32>
    %369 = arith.addf %367, %368 : vector<8x96xf32>
    %370 = vector.extract_strided_slice %369 {offsets = [0, 0], sizes = [8, 32], strides = [1, 1]} : vector<8x96xf32> to vector<8x32xf32>
    %371 = vector.extract_strided_slice %369 {offsets = [0, 32], sizes = [8, 32], strides = [1, 1]} : vector<8x96xf32> to vector<8x32xf32>
    %372 = vector.extract_strided_slice %369 {offsets = [0, 64], sizes = [8, 32], strides = [1, 1]} : vector<8x96xf32> to vector<8x32xf32>
    %cst_66 = arith.constant dense<0.000000e+00> : vector<8x8xf32>
    %373 = tpu.matmul %370, %371, %cst_66 {dimension_numbers = #tpu.dot_dimension_numbers<[1], [1], [0], [0], [0, 0, 1, 0], [], []>} : vector<8x32xf32>, vector<8x32xf32>, vector<8x8xf32> -> vector<8x8xf32>
    %cst_67 = arith.constant 0.176776692 : f32
    %374 = vector.broadcast %cst_67 : f32 to vector<8x8xf32>
    %375 = arith.mulf %373, %374 : vector<8x8xf32>
    %cst_68 = arith.constant dense<0xFF800000> : vector<8xf32>
    %376 = vector.multi_reduction <maximumf>, %375, %cst_68 [1] : vector<8x8xf32> to vector<8xf32>
    %377 = vector.shape_cast %376 : vector<8xf32> to vector<8x1xf32>
    %378 = vector.broadcast %377 : vector<8x1xf32> to vector<8x8xf32>
    %379 = arith.subf %375, %378 : vector<8x8xf32>
    %380 = math.exp %379 : vector<8x8xf32>
    %cst_69 = arith.constant dense<0.000000e+00> : vector<8xf32>
    %381 = vector.multi_reduction <add>, %380, %cst_69 [1] : vector<8x8xf32> to vector<8xf32>
    %382 = vector.shape_cast %381 : vector<8xf32> to vector<8x1xf32>
    %383 = tpu.reciprocal %382 {approx = true} : vector<8x1xf32> -> vector<8x1xf32>
    %384 = vector.broadcast %383 : vector<8x1xf32> to vector<8x8xf32>
    %385 = arith.mulf %380, %384 : vector<8x8xf32>
    %cst_70 = arith.constant dense<0.000000e+00> : vector<8x32xf32>
    %386 = tpu.matmul %385, %372, %cst_70 {dimension_numbers = #tpu.dot_dimension_numbers<[1], [0], [0], [1], [0, 0, 1, 1], [], []>} : vector<8x8xf32>, vector<8x32xf32>, vector<8x32xf32> -> vector<8x32xf32>
    %cst_71 = arith.constant dense<0.000000e+00> : vector<8x8xf32>
    %387 = tpu.matmul %386, %324, %cst_71 {dimension_numbers = #tpu.dot_dimension_numbers<[1], [0], [0], [1], [0, 0, 1, 1], [], []>} : vector<8x32xf32>, vector<32x8xf32>, vector<8x8xf32> -> vector<8x8xf32>
    %388 = vector.broadcast %325 : vector<1x8xf32> to vector<8x8xf32>
    %389 = arith.addf %387, %388 : vector<8x8xf32>
    %390 = tpu.concatenate %357, %389 in 0 : vector<8x8xf32>, vector<8x8xf32> -> vector<16x8xf32>
    %c0_72 = arith.constant 0 : index
    %c0_73 = arith.constant 0 : index
    %391 = vector.load %arg12[%c0_72, %c0_73] : memref<16x8xf32, #tpu.memory_space<vmem>>, vector<16x8xf32>
    tpu.vector_store %arg12[%c0_72, %c0_73], %390 {strides = array<i32>} : memref<16x8xf32, #tpu.memory_space<vmem>>, vector<16x8xf32>,
    return
  }
  func.func @transform_0(%arg0: i32) -> (i32, i32) {
    %c0_i32 = arith.constant 0 : i32
    %c0_i32_0 = arith.constant 0 : i32
    %c0_i32_1 = arith.constant 0 : i32
    return %c0_i32, %c0_i32_0 : i32, i32
  }
  func.func @transform_1(%arg0: i32) -> (i32, i32) {
    %c0_i32 = arith.constant 0 : i32
    %c0_i32_0 = arith.constant 0 : i32
    %c0_i32_1 = arith.constant 0 : i32
    return %c0_i32, %c0_i32_0 : i32, i32
  }
  func.func @transform_2(%arg0: i32) -> (i32, i32) {
    %c0_i32 = arith.constant 0 : i32
    %c0_i32_0 = arith.constant 0 : i32
    %c0_i32_1 = arith.constant 0 : i32
    return %c0_i32, %c0_i32_0 : i32, i32
  }
  func.func @transform_3(%arg0: i32) -> (i32, i32) {
    %c0_i32 = arith.constant 0 : i32
    %c0_i32_0 = arith.constant 0 : i32
    %c0_i32_1 = arith.constant 0 : i32
    return %c0_i32, %c0_i32_0 : i32, i32
  }
  func.func @transform_4(%arg0: i32) -> (i32, i32) {
    %c0_i32 = arith.constant 0 : i32
    %c0_i32_0 = arith.constant 0 : i32
    %c0_i32_1 = arith.constant 0 : i32
    return %c0_i32, %c0_i32_0 : i32, i32
  }
  func.func @transform_5(%arg0: i32) -> (i32, i32) {
    %c0_i32 = arith.constant 0 : i32
    %c0_i32_0 = arith.constant 0 : i32
    %c0_i32_1 = arith.constant 0 : i32
    return %c0_i32, %c0_i32_0 : i32, i32
  }
  func.func @transform_6(%arg0: i32) -> (i32, i32) {
    %c0_i32 = arith.constant 0 : i32
    %c0_i32_0 = arith.constant 0 : i32
    %c0_i32_1 = arith.constant 0 : i32
    return %c0_i32, %c0_i32_0 : i32, i32
  }
  func.func @transform_7(%arg0: i32) -> (i32, i32) {
    %c0_i32 = arith.constant 0 : i32
    %c0_i32_0 = arith.constant 0 : i32
    %c0_i32_1 = arith.constant 0 : i32
    return %c0_i32, %c0_i32_0 : i32, i32
  }
  func.func @transform_8(%arg0: i32) -> (i32, i32) {
    %c0_i32 = arith.constant 0 : i32
    %c0_i32_0 = arith.constant 0 : i32
    %c0_i32_1 = arith.constant 0 : i32
    return %c0_i32, %c0_i32_0 : i32, i32
  }
  func.func @transform_9(%arg0: i32) -> (i32, i32) {
    %c0_i32 = arith.constant 0 : i32
    %c0_i32_0 = arith.constant 0 : i32
    %c0_i32_1 = arith.constant 0 : i32
    return %c0_i32, %c0_i32_0 : i32, i32
  }
  func.func @transform_10(%arg0: i32) -> (i32, i32) {
    %c0_i32 = arith.constant 0 : i32
    %c0_i32_0 = arith.constant 0 : i32
    %c0_i32_1 = arith.constant 0 : i32
    return %c0_i32, %c0_i32_0 : i32, i32
  }
  func.func @transform_11(%arg0: i32) -> (i32, i32) {
    %c0_i32 = arith.constant 0 : i32
    %c0_i32_0 = arith.constant 0 : i32
    %c0_i32_1 = arith.constant 0 : i32
    return %c0_i32, %c0_i32_0 : i32, i32
  }
}

</mosaic_0001>

<llo_original>
// kernel: tpu_custom_call.1
$region0: #{tpu_custom_call.1}
  #allocation0 [shape = 'u32[]', space=smem, size = 0x4, offset = 0x4, fixed_abs, tag = 'smem constant byte address 0x4 - core index']
  #allocation1 [shape = 'u32[144,128]{1,0:T(1,128)}', space=vmem, size = 0x12000, scoped, tag = 'internal scratch']
  %s0 = inlined_call_operand.hbm [shape: f32[16,16], index: 0, kind: input, shape index: {}]
  %s1 = inlined_call_operand.hbm [shape: f32[16,128], index: 1, kind: input, shape index: {}]
  %s2 = inlined_call_operand.vmem [shape: f32[32,128], index: 2, kind: input, shape index: {}]
  %s3 = inlined_call_operand.vmem [shape: f32[1,128], index: 3, kind: input, shape index: {}]
  %s4 = inlined_call_operand.hbm [shape: f32[32,128], index: 4, kind: input, shape index: {}]
  %s5 = inlined_call_operand.hbm [shape: f32[32,128], index: 5, kind: input, shape index: {}]
  %s6 = inlined_call_operand.vmem [shape: f32[1,128], index: 6, kind: input, shape index: {}]
  %s7 = inlined_call_operand.vmem [shape: f32[32,96], index: 7, kind: input, shape index: {}]
  %s8 = inlined_call_operand.hbm [shape: f32[1,96], index: 8, kind: input, shape index: {}]
  %s9 = inlined_call_operand.vmem [shape: f32[32,8], index: 9, kind: input, shape index: {}]
  %s10 = inlined_call_operand.vmem [shape: f32[1,8], index: 10, kind: input, shape index: {}]
  %s11 = inlined_call_operand.vmem [shape: f32[16,8], index: 11, kind: output, shape index: {}]
  %s12 = sld [smem:[#allocation0]]
  $region74: #{tpu_custom_call.1} parent=0
    _
  %s14 = ssub.s32 1, %s12
  %s15 = scalar_select 0, %s14, %s12
  $region1: #{tpu_custom_call.1} parent=0
    #allocation2 [shape = 'u8[8192]{0}', space=vmem, size = 0x2000, scoped, tag = 'input window, operand 0, single buffered']
    #allocation3 [shape = 's32[1]{0}', space=sflag, size = 0x4, scoped, tag = 'scoped memory for tpu_custom_call.1']
    #allocation4 [shape = 'u8[8192]{0}', space=vmem, size = 0x2000, scoped, tag = 'input window, operand 1, single buffered']
    #allocation5 [shape = 's32[1]{0}', space=sflag, size = 0x4, scoped, tag = 'scoped memory for tpu_custom_call.1']
    #allocation6 [shape = 'u8[16384]{0}', space=vmem, size = 0x4000, scoped, tag = 'input window, operand 4, single buffered']
    #allocation7 [shape = 'u8[16384]{0}', space=vmem, size = 0x4000, scoped, tag = 'input window, operand 5, single buffered']
    #allocation8 [shape = 's32[1]{0}', space=sflag, size = 0x4, scoped, tag = 'scoped memory for tpu_custom_call.1']
    #allocation9 [shape = 'u8[512]{0}', space=vmem, size = 0x400, scoped, tag = 'input window, operand 8, single buffered']
    %16 = vsyncpa [#allocation3], 0
    %17 = vsyncpa [#allocation5], 0
    %18 = vsyncpa [#allocation8], 0
    // Predicated region
    $region2: #{tpu_custom_call.1} parent=1 // pred_check
      _
    $region3: #{tpu_custom_call.1} parent=1 // pred_check_branch
      %20 = sbr.rel (0) target = $region5
    $region4: #{tpu_custom_call.1} parent=1 // pred_region
      %s22 = ssub.s32 256, 256
      %23 = vsyncadd [#allocation3], %s22
      %s24 = sshll.u32 [#allocation2], 4
      %s25 = int_to_ptr.vmem [resolvable:$true] %s24
      %30 = dma.hbm_to_vmem [thread:$0]  %s0, 256, %s25, [#allocation3], 128, 128, 8
    $region5: #{tpu_custom_call.1} parent=1 // pred_fallthru
      _
    // Predicated region
    $region6: #{tpu_custom_call.1} parent=1 // pred_check
      _
    $region7: #{tpu_custom_call.1} parent=1 // pred_check_branch
      %32 = sbr.rel (0) target = $region9
    $region8: #{tpu_custom_call.1} parent=1 // pred_region
      %s34 = ssub.s32 256, 256
      %35 = vsyncadd [#allocation5], %s34
      %s36 = sshll.u32 [#allocation4], 4
      %s37 = int_to_ptr.vmem [resolvable:$true] %s36
      %42 = dma.hbm_to_vmem [thread:$0]  %s1, 256, %s37, [#allocation5], 128, 128, 8
    $region9: #{tpu_custom_call.1} parent=1 // pred_fallthru
      _
    // Predicated region
    $region10: #{tpu_custom_call.1} parent=1 // pred_check
      _
    $region11: #{tpu_custom_call.1} parent=1 // pred_check_branch
      %44 = sbr.rel (0) target = $region13
    $region12: #{tpu_custom_call.1} parent=1 // pred_region
      _
    $region13: #{tpu_custom_call.1} parent=1 // pred_fallthru
      _
    // Predicated region
    $region14: #{tpu_custom_call.1} parent=1 // pred_check
      _
    $region15: #{tpu_custom_call.1} parent=1 // pred_check_branch
      %46 = sbr.rel (0) target = $region17
    $region16: #{tpu_custom_call.1} parent=1 // pred_region
      _
    $region17: #{tpu_custom_call.1} parent=1 // pred_fallthru
      _
    // Predicated region
    $region18: #{tpu_custom_call.1} parent=1 // pred_check
      _
    $region19: #{tpu_custom_call.1} parent=1 // pred_check_branch
      %48 = sbr.rel (0) target = $region21
    $region20: #{tpu_custom_call.1} parent=1 // pred_region
      %s50 = ssub.s32 512, 512
      %51 = vsyncadd [#allocation5], %s50
      %s52 = sshll.u32 [#allocation6], 4
      %s53 = int_to_ptr.vmem [resolvable:$true] %s52
      %58 = dma.hbm_to_vmem [thread:$0]  %s4, 512, %s53, [#allocation5], 128, 128, 8
    $region21: #{tpu_custom_call.1} parent=1 // pred_fallthru
      _
    // Predicated region
    $region22: #{tpu_custom_call.1} parent=1 // pred_check
      _
    $region23: #{tpu_custom_call.1} parent=1 // pred_check_branch
      %60 = sbr.rel (0) target = $region25
    $region24: #{tpu_custom_call.1} parent=1 // pred_region
      %s62 = ssub.s32 512, 512
      %63 = vsyncadd [#allocation8], %s62
      %s64 = sshll.u32 [#allocation7], 4
      %s65 = int_to_ptr.vmem [resolvable:$true] %s64
      %70 = dma.hbm_to_vmem [thread:$0]  %s5, 512, %s65, [#allocation8], 128, 128, 8
    $region25: #{tpu_custom_call.1} parent=1 // pred_fallthru
      _
    // Predicated region
    $region26: #{tpu_custom_call.1} parent=1 // pred_check
      _
    $region27: #{tpu_custom_call.1} parent=1 // pred_check_branch
      %72 = sbr.rel (0) target = $region29
    $region28: #{tpu_custom_call.1} parent=1 // pred_region
      _
    $region29: #{tpu_custom_call.1} parent=1 // pred_fallthru
      _
    // Predicated region
    $region30: #{tpu_custom_call.1} parent=1 // pred_check
      _
    $region31: #{tpu_custom_call.1} parent=1 // pred_check_branch
      %74 = sbr.rel (0) target = $region33
    $region32: #{tpu_custom_call.1} parent=1 // pred_region
      _
    $region33: #{tpu_custom_call.1} parent=1 // pred_fallthru
      _
    // Predicated region
    $region34: #{tpu_custom_call.1} parent=1 // pred_check
      _
    $region35: #{tpu_custom_call.1} parent=1 // pred_check_branch
      %76 = sbr.rel (0) target = $region37
    $region36: #{tpu_custom_call.1} parent=1 // pred_region
      %s78 = ssub.s32 16, 16
      %79 = vsyncadd [#allocation8], %s78
      %s81 = sshll.u32 [#allocation9], 4
      %s82 = int_to_ptr.vmem [resolvable:$true] %s81
      %84 = dma.hbm_to_vmem [thread:$0]  %s8, 16, %s82, [#allocation8]
    $region37: #{tpu_custom_call.1} parent=1 // pred_fallthru
      _
    // Predicated region
    $region38: #{tpu_custom_call.1} parent=1 // pred_check
      _
    $region39: #{tpu_custom_call.1} parent=1 // pred_check_branch
      %86 = sbr.rel (0) target = $region41
    $region40: #{tpu_custom_call.1} parent=1 // pred_region
      _
    $region41: #{tpu_custom_call.1} parent=1 // pred_fallthru
      _
    // Predicated region
    $region42: #{tpu_custom_call.1} parent=1 // pred_check
      _
    $region43: #{tpu_custom_call.1} parent=1 // pred_check_branch
      %88 = sbr.rel (0) target = $region45
    $region44: #{tpu_custom_call.1} parent=1 // pred_region
      _
    $region45: #{tpu_custom_call.1} parent=1 // pred_fallthru
      _
    // Predicated region
    $region46: #{tpu_custom_call.1} parent=1 // pred_check
      _
    $region47: #{tpu_custom_call.1} parent=1 // pred_check_branch
      %90 = sbr.rel (0) target = $region49
    $region48: #{tpu_custom_call.1} parent=1 // pred_region
      %91 = dma.done [#allocation3], 256
    $region49: #{tpu_custom_call.1} parent=1 // pred_fallthru
      _
    // Predicated region
    $region50: #{tpu_custom_call.1} parent=1 // pred_check
      _
    $region51: #{tpu_custom_call.1} parent=1 // pred_check_branch
      %93 = sbr.rel (0) target = $region53
    $region52: #{tpu_custom_call.1} parent=1 // pred_region
      %94 = dma.done [#allocation5], 256
    $region53: #{tpu_custom_call.1} parent=1 // pred_fallthru
      _
    // Predicated region
    $region54: #{tpu_custom_call.1} parent=1 // pred_check
      _
    $region55: #{tpu_custom_call.1} parent=1 // pred_check_branch
      %96 = sbr.rel (0) target = $region57
    $region56: #{tpu_custom_call.1} parent=1 // pred_region
      %97 = dma.done [#allocation5], 512
    $region57: #{tpu_custom_call.1} parent=1 // pred_fallthru
      _
    // Predicated region
    $region58: #{tpu_custom_call.1} parent=1 // pred_check
      _
    $region59: #{tpu_custom_call.1} parent=1 // pred_check_branch
      %99 = sbr.rel (0) target = $region61
    $region60: #{tpu_custom_call.1} parent=1 // pred_region
      %100 = dma.done [#allocation8], 512
    $region61: #{tpu_custom_call.1} parent=1 // pred_fallthru
      _
    // Predicated region
    $region62: #{tpu_custom_call.1} parent=1 // pred_check
      _
    $region63: #{tpu_custom_call.1} parent=1 // pred_check_branch
      %102 = sbr.rel (0) target = $region65
    $region64: #{tpu_custom_call.1} parent=1 // pred_region
      %103 = dma.done [#allocation8], 16
    $region65: #{tpu_custom_call.1} parent=1 // pred_fallthru
      _
    %v104 = vld [vmem:[#allocation2] sm:$0xff]
    %v105 = vld [vmem:[#allocation2 + $0x8] sm:$0xff]
    %v106 = vld [vmem:[#allocation4] sm:$0xff]
    %v107 = vld [vmem:[#allocation4 + $0x8] sm:$0xff]
    %v108 = vld [vmem:[%s2] sm:$0xff]
    %v109 = vld [vmem:[%s2 + $0x8] sm:$0xff]
    %v110 = vld [vmem:[%s2 + $0x10] sm:$0xff]
    %v111 = vld [vmem:[%s2 + $0x18] sm:$0xff]
    %v112 = vld [vmem:[%s3] sm:$0x1]
    %v114 = vlaneseq
    %v115 = vshrl.u32 %v114, 7
    %v116 = vsub.s32 0, %v115
    %v117 = vrot.slane %v112, %v116
    %vm119 = vcmask 130048
    %v121 = vsel %vm119, %v104, 0
    %v124 = vsel %vm119, %v105, 0
    %126 = vmatprep.subr.mxu0 0.0
    %127 = vmatpush1.msra.mxu0 %v106
    %128 = vmatprep.subr.mxu0 0.0
    %129 = vmatpush1.msra.mxu0 %v107
    %130 = vmatprep.subr.mxu0 0.0
    %131 = vmatpush1.msra.mxu0 0.0
    %132 = vmatprep.subr.mxu0 0.0
    %133 = vmatpush1.msra.mxu0 0.0
    %134 = vmatprep.subr.mxu0 0.0
    %135 = vmatpush1.msra.mxu0 0.0
    %136 = vmatprep.subr.mxu0 0.0
    %137 = vmatpush1.msra.mxu0 0.0
    %138 = vmatprep.subr.mxu0 0.0
    %139 = vmatpush1.msra.mxu0 0.0
    %140 = vmatprep.subr.mxu0 0.0
    %141 = vmatpush1.msra.mxu0 0.0
    %142 = vmatprep.subr.mxu0 0.0
    %143 = vmatpush1.msra.mxu0 0.0
    %144 = vmatprep.subr.mxu0 0.0
    %145 = vmatpush1.msra.mxu0 0.0
    %146 = vmatprep.subr.mxu0 0.0
    %147 = vmatpush1.msra.mxu0 0.0
    %148 = vmatprep.subr.mxu0 0.0
    %149 = vmatpush1.msra.mxu0 0.0
    %150 = vmatprep.subr.mxu0 0.0
    %151 = vmatpush1.msra.mxu0 0.0
    %152 = vmatprep.subr.mxu0 0.0
    %153 = vmatpush1.msra.mxu0 0.0
    %154 = vmatprep.subr.mxu0 0.0
    %155 = vmatpush1.msra.mxu0 0.0
    %156 = vmatprep.subr.mxu0 0.0
    %157 = vmatpush1.msra.mxu0 0.0
    %158 = vmatprep.subr.mxu0 0.0
    %159 = vmatpush1.msra.mxu0 0.0
    %160 = vmatprep.subr.mxu0 0.0
    %161 = vmatpush1.msra.mxu0 0.0
    %162 = vmatprep.subr.mxu0 0.0
    %163 = vmatpush1.msra.mxu0 0.0
    %164 = vmatprep.subr.mxu0 0.0
    %165 = vmatpush1.msra.mxu0 0.0
    %166 = vmatprep.subr.mxu0 0.0
    %167 = vmatpush1.msra.mxu0 0.0
    %168 = vmatprep.subr.mxu0 0.0
    %169 = vmatpush1.msra.mxu0 0.0
    %170 = vmatprep.subr.mxu0 0.0
    %171 = vmatpush1.msra.mxu0 0.0
    %172 = vmatprep.subr.mxu0 0.0
    %173 = vmatpush1.msra.mxu0 0.0
    %174 = vmatprep.subr.mxu0 0.0
    %175 = vmatpush1.msra.mxu0 0.0
    %176 = vmatprep.subr.mxu0 0.0
    %177 = vmatpush1.msra.mxu0 0.0
    %178 = vmatprep.subr.mxu0 0.0
    %179 = vmatpush1.msra.mxu0 0.0
    %180 = vmatprep.subr.mxu0 0.0
    %181 = vmatpush1.msra.mxu0 0.0
    %182 = vmatprep.subr.mxu0 0.0
    %183 = vmatpush1.msra.mxu0 0.0
    %184 = vmatprep.subr.mxu0 0.0
    %185 = vmatpush1.msra.mxu0 0.0
    %186 = vmatprep.subr.mxu0 0.0
    %187 = vmatpush1.msra.mxu0 0.0
    %188 = vmatprep.subr.mxu0 0.0
    %189 = vmatpush1.msra.mxu0 0.0
    %190 = vmatprep.mubr.f32.mxu0 0.0
    %191 = vmatmul.mubr.f32.gmra.mrb[0].mxu0 %v121
    %v192 = vpop.f32.mrb[0].mxu0
    %v193 = vadd.f32 %v117, %v192
    %v194 = vpop.f32.mrb[0].mxu0
    %195 = vmatprep.mubr.f32.mxu0 0.0
    %196 = vmatmul.mubr.f32.gmra.mrb[0].mxu0 %v124
    %v197 = vpop.f32.mrb[0].mxu0
    %v198 = vadd.f32 %v117, %v197
    %v199 = vpop.f32.mrb[0].mxu0
    %200 = vdwg.mxu0
    %vm201 = vcmask 261120
    %v203 = vsel %vm201, 0.0, 0
    %205 = vmatprep.subr.mxu0 0.0
    %206 = vmatpush1.msra.mxu0 %v108
    %207 = vmatprep.subr.mxu0 0.0
    %208 = vmatpush1.msra.mxu0 %v109
    %209 = vmatprep.subr.mxu0 0.0
    %210 = vmatpush1.msra.mxu0 %v110
    %211 = vmatprep.subr.mxu0 0.0
    %212 = vmatpush1.msra.mxu0 %v111
    %213 = vmatprep.subr.mxu0 0.0
    %214 = vmatpush1.msra.mxu0 0.0
    %215 = vmatprep.subr.mxu0 0.0
    %216 = vmatpush1.msra.mxu0 0.0
    %217 = vmatprep.subr.mxu0 0.0
    %218 = vmatpush1.msra.mxu0 0.0
    %219 = vmatprep.subr.mxu0 0.0
    %220 = vmatpush1.msra.mxu0 0.0
    %221 = vmatprep.subr.mxu0 0.0
    %222 = vmatpush1.msra.mxu0 0.0
    %223 = vmatprep.subr.mxu0 0.0
    %224 = vmatpush1.msra.mxu0 0.0
    %225 = vmatprep.subr.mxu0 0.0
    %226 = vmatpush1.msra.mxu0 0.0
    %227 = vmatprep.subr.mxu0 0.0
    %228 = vmatpush1.msra.mxu0 0.0
    %229 = vmatprep.subr.mxu0 0.0
    %230 = vmatpush1.msra.mxu0 0.0
    %231 = vmatprep.subr.mxu0 0.0
    %232 = vmatpush1.msra.mxu0 0.0
    %233 = vmatprep.subr.mxu0 0.0
    %234 = vmatpush1.msra.mxu0 0.0
    %235 = vmatprep.subr.mxu0 0.0
    %236 = vmatpush1.msra.mxu0 0.0
    %237 = vmatprep.subr.mxu0 0.0
    %238 = vmatpush1.msra.mxu0 0.0
    %239 = vmatprep.subr.mxu0 0.0
    %240 = vmatpush1.msra.mxu0 0.0
    %241 = vmatprep.subr.mxu0 0.0
    %242 = vmatpush1.msra.mxu0 0.0
    %243 = vmatprep.subr.mxu0 0.0
    %244 = vmatpush1.msra.mxu0 0.0
    %245 = vmatprep.subr.mxu0 0.0
    %246 = vmatpush1.msra.mxu0 0.0
    %247 = vmatprep.subr.mxu0 0.0
    %248 = vmatpush1.msra.mxu0 0.0
    %249 = vmatprep.subr.mxu0 0.0
    %250 = vmatpush1.msra.mxu0 0.0
    %251 = vmatprep.subr.mxu0 0.0
    %252 = vmatpush1.msra.mxu0 0.0
    %253 = vmatprep.subr.mxu0 0.0
    %254 = vmatpush1.msra.mxu0 0.0
    %255 = vmatprep.subr.mxu0 0.0
    %256 = vmatpush1.msra.mxu0 0.0
    %257 = vmatprep.subr.mxu0 0.0
    %258 = vmatpush1.msra.mxu0 0.0
    %259 = vmatprep.subr.mxu0 0.0
    %260 = vmatpush1.msra.mxu0 0.0
    %261 = vmatprep.subr.mxu0 0.0
    %262 = vmatpush1.msra.mxu0 0.0
    %263 = vmatprep.subr.mxu0 0.0
    %264 = vmatpush1.msra.mxu0 0.0
    %265 = vmatprep.subr.mxu0 0.0
    %266 = vmatpush1.msra.mxu0 0.0
    %267 = vmatprep.subr.mxu0 0.0
    %268 = vmatpush1.msra.mxu0 0.0
    %269 = vmatprep.mubr.f32.mxu0 0.0
    %270 = vmatmul.mubr.f32.gmra.mrb[0].mxu0 %v203
    %v271 = vpop.f32.mrb[0].mxu0
    %v272 = vadd.f32 0.0, %v271
    %v273 = vpop.f32.mrb[0].mxu0
    %274 = vdwg.mxu0
    %v275 = vadd.f32 %v193, %v272
    %v276 = vxor.u32 %v275, 2147483648
    %v277 = vmul.f32 %v276, 1.442695
    %v278 = vpow.pop %v277
    %v279 = vadd.f32 %v278, 1.0
    %v280 = vrcp.pop %v279
    %v281 = vmul.f32 1.0, %v280
    %v282 = vtanh.pop %v275
    %v283 = vmul.f32 %v281, 0.0
    %285 = vrot.lane.b32.xlu0 %v282, 32
    %v286 = vpop.permute.xlu0 %285
    %v288 = vmul.f32 %v281, %v286
    %290 = vrot.lane.b32.xlu0 %v288, 32
    %v291 = vpop.permute.xlu0 %290
    %v293 = vadd.f32 %v283, %v291
    %v294 = vtanh.pop %v293
    %296 = vrot.lane.b32.xlu0 %v294, 32
    %v297 = vpop.permute.xlu0 %296
    %v299 = vmul.f32 %v281, %v297
    %301 = vrot.lane.b32.xlu0 %v299, 64
    %v302 = vpop.permute.xlu0 %301
    %v303 = vsel %vm201, %v302, 0
    %305 = vmatprep.subr.mxu0 0.0
    %306 = vmatpush1.msra.mxu0 %v108
    %307 = vmatprep.subr.mxu0 0.0
    %308 = vmatpush1.msra.mxu0 %v109
    %309 = vmatprep.subr.mxu0 0.0
    %310 = vmatpush1.msra.mxu0 %v110
    %311 = vmatprep.subr.mxu0 0.0
    %312 = vmatpush1.msra.mxu0 %v111
    %313 = vmatprep.subr.mxu0 0.0
    %314 = vmatpush1.msra.mxu0 0.0
    %315 = vmatprep.subr.mxu0 0.0
    %316 = vmatpush1.msra.mxu0 0.0
    %317 = vmatprep.subr.mxu0 0.0
    %318 = vmatpush1.msra.mxu0 0.0
    %319 = vmatprep.subr.mxu0 0.0
    %320 = vmatpush1.msra.mxu0 0.0
    %321 = vmatprep.subr.mxu0 0.0
    %322 = vmatpush1.msra.mxu0 0.0
    %323 = vmatprep.subr.mxu0 0.0
    %324 = vmatpush1.msra.mxu0 0.0
    %325 = vmatprep.subr.mxu0 0.0
    %326 = vmatpush1.msra.mxu0 0.0
    %327 = vmatprep.subr.mxu0 0.0
    %328 = vmatpush1.msra.mxu0 0.0
    %329 = vmatprep.subr.mxu0 0.0
    %330 = vmatpush1.msra.mxu0 0.0
    %331 = vmatprep.subr.mxu0 0.0
    %332 = vmatpush1.msra.mxu0 0.0
    %333 = vmatprep.subr.mxu0 0.0
    %334 = vmatpush1.msra.mxu0 0.0
    %335 = vmatprep.subr.mxu0 0.0
    %336 = vmatpush1.msra.mxu0 0.0
    %337 = vmatprep.subr.mxu0 0.0
    %338 = vmatpush1.msra.mxu0 0.0
    %339 = vmatprep.subr.mxu0 0.0
    %340 = vmatpush1.msra.mxu0 0.0
    %341 = vmatprep.subr.mxu0 0.0
    %342 = vmatpush1.msra.mxu0 0.0
    %343 = vmatprep.subr.mxu0 0.0
    %344 = vmatpush1.msra.mxu0 0.0
    %345 = vmatprep.subr.mxu0 0.0
    %346 = vmatpush1.msra.mxu0 0.0
    %347 = vmatprep.subr.mxu0 0.0
    %348 = vmatpush1.msra.mxu0 0.0
    %349 = vmatprep.subr.mxu0 0.0
    %350 = vmatpush1.msra.mxu0 0.0
    %351 = vmatprep.subr.mxu0 0.0
    %352 = vmatpush1.msra.mxu0 0.0
    %353 = vmatprep.subr.mxu0 0.0
    %354 = vmatpush1.msra.mxu0 0.0
    %355 = vmatprep.subr.mxu0 0.0
    %356 = vmatpush1.msra.mxu0 0.0
    %357 = vmatprep.subr.mxu0 0.0
    %358 = vmatpush1.msra.mxu0 0.0
    %359 = vmatprep.subr.mxu0 0.0
    %360 = vmatpush1.msra.mxu0 0.0
    %361 = vmatprep.subr.mxu0 0.0
    %362 = vmatpush1.msra.mxu0 0.0
    %363 = vmatprep.subr.mxu0 0.0
    %364 = vmatpush1.msra.mxu0 0.0
    %365 = vmatprep.subr.mxu0 0.0
    %366 = vmatpush1.msra.mxu0 0.0
    %367 = vmatprep.subr.mxu0 0.0
    %368 = vmatpush1.msra.mxu0 0.0
    %369 = vmatprep.mubr.f32.mxu0 0.0
    %370 = vmatmul.mubr.f32.gmra.mrb[0].mxu0 %v303
    %v371 = vpop.f32.mrb[0].mxu0
    %v372 = vadd.f32 0.0, %v371
    %v373 = vpop.f32.mrb[0].mxu0
    %374 = vdwg.mxu0
    %v376 = vrot.slane %v372, 6
    %v378 = vadd.f32 %v193, %v376
    %v379 = vxor.u32 %v378, 2147483648
    %v380 = vmul.f32 %v379, 1.442695
    %v381 = vpow.pop %v380
    %v382 = vadd.f32 %v381, 1.0
    %v383 = vrcp.pop %v382
    %v384 = vmul.f32 1.0, %v383
    %v385 = vtanh.pop %v378
    %v387 = vrot.slane %v293, 6
    %v389 = vmul.f32 %v384, %v387
    %391 = vrot.lane.b32.xlu0 %v385, 32
    %v392 = vpop.permute.xlu0 %391
    %v394 = vmul.f32 %v384, %v392
    %396 = vrot.lane.b32.xlu0 %v394, 32
    %v397 = vpop.permute.xlu0 %396
    %v399 = vadd.f32 %v389, %v397
    %v400 = vtanh.pop %v399
    %402 = vrot.lane.b32.xlu0 %v400, 32
    %v403 = vpop.permute.xlu0 %402
    %v405 = vmul.f32 %v384, %v403
    %v407 = vrot.slane %v405, 2
    %408 = vrot.lane.b32.xlu0 %v407, 64
    %v409 = vpop.permute.xlu0 %408
    %v410 = vsel %vm201, %v409, 0
    %412 = vmatprep.subr.mxu0 0.0
    %413 = vmatpush1.msra.mxu0 %v108
    %414 = vmatprep.subr.mxu0 0.0
    %415 = vmatpush1.msra.mxu0 %v109
    %416 = vmatprep.subr.mxu0 0.0
    %417 = vmatpush1.msra.mxu0 %v110
    %418 = vmatprep.subr.mxu0 0.0
    %419 = vmatpush1.msra.mxu0 %v111
    %420 = vmatprep.subr.mxu0 0.0
    %421 = vmatpush1.msra.mxu0 0.0
    %422 = vmatprep.subr.mxu0 0.0
    %423 = vmatpush1.msra.mxu0 0.0
    %424 = vmatprep.subr.mxu0 0.0
    %425 = vmatpush1.msra.mxu0 0.0
    %426 = vmatprep.subr.mxu0 0.0
    %427 = vmatpush1.msra.mxu0 0.0
    %428 = vmatprep.subr.mxu0 0.0
    %429 = vmatpush1.msra.mxu0 0.0
    %430 = vmatprep.subr.mxu0 0.0
    %431 = vmatpush1.msra.mxu0 0.0
    %432 = vmatprep.subr.mxu0 0.0
    %433 = vmatpush1.msra.mxu0 0.0
    %434 = vmatprep.subr.mxu0 0.0
    %435 = vmatpush1.msra.mxu0 0.0
    %436 = vmatprep.subr.mxu0 0.0
    %437 = vmatpush1.msra.mxu0 0.0
    %438 = vmatprep.subr.mxu0 0.0
    %439 = vmatpush1.msra.mxu0 0.0
    %440 = vmatprep.subr.mxu0 0.0
    %441 = vmatpush1.msra.mxu0 0.0
    %442 = vmatprep.subr.mxu0 0.0
    %443 = vmatpush1.msra.mxu0 0.0
    %444 = vmatprep.subr.mxu0 0.0
    %445 = vmatpush1.msra.mxu0 0.0
    %446 = vmatprep.subr.mxu0 0.0
    %447 = vmatpush1.msra.mxu0 0.0
    %448 = vmatprep.subr.mxu0 0.0
    %449 = vmatpush1.msra.mxu0 0.0
    %450 = vmatprep.subr.mxu0 0.0
    %451 = vmatpush1.msra.mxu0 0.0
    %452 = vmatprep.subr.mxu0 0.0
    %453 = vmatpush1.msra.mxu0 0.0
    %454 = vmatprep.subr.mxu0 0.0
    %455 = vmatpush1.msra.mxu0 0.0
    %456 = vmatprep.subr.mxu0 0.0
    %457 = vmatpush1.msra.mxu0 0.0
    %458 = vmatprep.subr.mxu0 0.0
    %459 = vmatpush1.msra.mxu0 0.0
    %460 = vmatprep.subr.mxu0 0.0
    %461 = vmatpush1.msra.mxu0 0.0
    %462 = vmatprep.subr.mxu0 0.0
    %463 = vmatpush1.msra.mxu0 0.0
    %464 = vmatprep.subr.mxu0 0.0
    %465 = vmatpush1.msra.mxu0 0.0
    %466 = vmatprep.subr.mxu0 0.0
    %467 = vmatpush1.msra.mxu0 0.0
    %468 = vmatprep.subr.mxu0 0.0
    %469 = vmatpush1.msra.mxu0 0.0
    %470 = vmatprep.subr.mxu0 0.0
    %471 = vmatpush1.msra.mxu0 0.0
    %472 = vmatprep.subr.mxu0 0.0
    %473 = vmatpush1.msra.mxu0 0.0
    %474 = vmatprep.subr.mxu0 0.0
    %475 = vmatpush1.msra.mxu0 0.0
    %476 = vmatprep.mubr.f32.mxu0 0.0
    %477 = vmatmul.mubr.f32.gmra.mrb[0].mxu0 %v410
    %v478 = vpop.f32.mrb[0].mxu0
    %v479 = vadd.f32 0.0, %v478
    %v480 = vpop.f32.mrb[0].mxu0
    %481 = vdwg.mxu0
    %v483 = vrot.slane %v479, 4
    %v485 = vadd.f32 %v193, %v483
    %v486 = vxor.u32 %v485, 2147483648
    %v487 = vmul.f32 %v486, 1.442695
    %v488 = vpow.pop %v487
    %v489 = vadd.f32 %v488, 1.0
    %v490 = vrcp.pop %v489
    %v491 = vmul.f32 1.0, %v490
    %v492 = vtanh.pop %v485
    %v494 = vrot.slane %v399, 6
    %v496 = vmul.f32 %v491, %v494
    %498 = vrot.lane.b32.xlu0 %v492, 32
    %v499 = vpop.permute.xlu0 %498
    %v501 = vmul.f32 %v491, %v499
    %503 = vrot.lane.b32.xlu0 %v501, 32
    %v504 = vpop.permute.xlu0 %503
    %v506 = vadd.f32 %v496, %v504
    %v507 = vtanh.pop %v506
    %509 = vrot.lane.b32.xlu0 %v507, 32
    %v510 = vpop.permute.xlu0 %509
    %v512 = vmul.f32 %v491, %v510
    %v514 = vrot.slane %v512, 4
    %515 = vrot.lane.b32.xlu0 %v514, 64
    %v516 = vpop.permute.xlu0 %515
    %v517 = vsel %vm201, %v516, 0
    %519 = vmatprep.subr.mxu0 0.0
    %520 = vmatpush1.msra.mxu0 %v108
    %521 = vmatprep.subr.mxu0 0.0
    %522 = vmatpush1.msra.mxu0 %v109
    %523 = vmatprep.subr.mxu0 0.0
    %524 = vmatpush1.msra.mxu0 %v110
    %525 = vmatprep.subr.mxu0 0.0
    %526 = vmatpush1.msra.mxu0 %v111
    %527 = vmatprep.subr.mxu0 0.0
    %528 = vmatpush1.msra.mxu0 0.0
    %529 = vmatprep.subr.mxu0 0.0
    %530 = vmatpush1.msra.mxu0 0.0
    %531 = vmatprep.subr.mxu0 0.0
    %532 = vmatpush1.msra.mxu0 0.0
    %533 = vmatprep.subr.mxu0 0.0
    %534 = vmatpush1.msra.mxu0 0.0
    %535 = vmatprep.subr.mxu0 0.0
    %536 = vmatpush1.msra.mxu0 0.0
    %537 = vmatprep.subr.mxu0 0.0
    %538 = vmatpush1.msra.mxu0 0.0
    %539 = vmatprep.subr.mxu0 0.0
    %540 = vmatpush1.msra.mxu0 0.0
    %541 = vmatprep.subr.mxu0 0.0
    %542 = vmatpush1.msra.mxu0 0.0
    %543 = vmatprep.subr.mxu0 0.0
    %544 = vmatpush1.msra.mxu0 0.0
    %545 = vmatprep.subr.mxu0 0.0
    %546 = vmatpush1.msra.mxu0 0.0
    %547 = vmatprep.subr.mxu0 0.0
    %548 = vmatpush1.msra.mxu0 0.0
    %549 = vmatprep.subr.mxu0 0.0
    %550 = vmatpush1.msra.mxu0 0.0
    %551 = vmatprep.subr.mxu0 0.0
    %552 = vmatpush1.msra.mxu0 0.0
    %553 = vmatprep.subr.mxu0 0.0
    %554 = vmatpush1.msra.mxu0 0.0
    %555 = vmatprep.subr.mxu0 0.0
    %556 = vmatpush1.msra.mxu0 0.0
    %557 = vmatprep.subr.mxu0 0.0
    %558 = vmatpush1.msra.mxu0 0.0
    %559 = vmatprep.subr.mxu0 0.0
    %560 = vmatpush1.msra.mxu0 0.0
    %561 = vmatprep.subr.mxu0 0.0
    %562 = vmatpush1.msra.mxu0 0.0
    %563 = vmatprep.subr.mxu0 0.0
    %564 = vmatpush1.msra.mxu0 0.0
    %565 = vmatprep.subr.mxu0 0.0
    %566 = vmatpush1.msra.mxu0 0.0
    %567 = vmatprep.subr.mxu0 0.0
    %568 = vmatpush1.msra.mxu0 0.0
    %569 = vmatprep.subr.mxu0 0.0
    %570 = vmatpush1.msra.mxu0 0.0
    %571 = vmatprep.subr.mxu0 0.0
    %572 = vmatpush1.msra.mxu0 0.0
    %573 = vmatprep.subr.mxu0 0.0
    %574 = vmatpush1.msra.mxu0 0.0
    %575 = vmatprep.subr.mxu0 0.0
    %576 = vmatpush1.msra.mxu0 0.0
    %577 = vmatprep.subr.mxu0 0.0
    %578 = vmatpush1.msra.mxu0 0.0
    %579 = vmatprep.subr.mxu0 0.0
    %580 = vmatpush1.msra.mxu0 0.0
    %581 = vmatprep.subr.mxu0 0.0
    %582 = vmatpush1.msra.mxu0 0.0
    %583 = vmatprep.mubr.f32.mxu0 0.0
    %584 = vmatmul.mubr.f32.gmra.mrb[0].mxu0 %v517
    %v585 = vpop.f32.mrb[0].mxu0
    %v586 = vadd.f32 0.0, %v585
    %v587 = vpop.f32.mrb[0].mxu0
    %588 = vdwg.mxu0
    %v590 = vrot.slane %v586, 2
    %v592 = vadd.f32 %v193, %v590
    %v593 = vxor.u32 %v592, 2147483648
    %v594 = vmul.f32 %v593, 1.442695
    %v595 = vpow.pop %v594
    %v596 = vadd.f32 %v595, 1.0
    %v597 = vrcp.pop %v596
    %v598 = vmul.f32 1.0, %v597
    %v599 = vtanh.pop %v592
    %v601 = vrot.slane %v506, 6
    %v603 = vmul.f32 %v598, %v601
    %605 = vrot.lane.b32.xlu0 %v599, 32
    %v606 = vpop.permute.xlu0 %605
    %v608 = vmul.f32 %v598, %v606
    %610 = vrot.lane.b32.xlu0 %v608, 32
    %v611 = vpop.permute.xlu0 %610
    %v613 = vadd.f32 %v603, %v611
    %v614 = vtanh.pop %v613
    %616 = vrot.lane.b32.xlu0 %v614, 32
    %v617 = vpop.permute.xlu0 %616
    %v619 = vmul.f32 %v598, %v617
    %v621 = vrot.slane %v619, 6
    %622 = vrot.lane.b32.xlu0 %v621, 64
    %v623 = vpop.permute.xlu0 %622
    %v624 = vsel %vm201, %v623, 0
    %626 = vmatprep.subr.mxu0 0.0
    %627 = vmatpush1.msra.mxu0 %v108
    %628 = vmatprep.subr.mxu0 0.0
    %629 = vmatpush1.msra.mxu0 %v109
    %630 = vmatprep.subr.mxu0 0.0
    %631 = vmatpush1.msra.mxu0 %v110
    %632 = vmatprep.subr.mxu0 0.0
    %633 = vmatpush1.msra.mxu0 %v111
    %634 = vmatprep.subr.mxu0 0.0
    %635 = vmatpush1.msra.mxu0 0.0
    %636 = vmatprep.subr.mxu0 0.0
    %637 = vmatpush1.msra.mxu0 0.0
    %638 = vmatprep.subr.mxu0 0.0
    %639 = vmatpush1.msra.mxu0 0.0
    %640 = vmatprep.subr.mxu0 0.0
    %641 = vmatpush1.msra.mxu0 0.0
    %642 = vmatprep.subr.mxu0 0.0
    %643 = vmatpush1.msra.mxu0 0.0
    %644 = vmatprep.subr.mxu0 0.0
    %645 = vmatpush1.msra.mxu0 0.0
    %646 = vmatprep.subr.mxu0 0.0
    %647 = vmatpush1.msra.mxu0 0.0
    %648 = vmatprep.subr.mxu0 0.0
    %649 = vmatpush1.msra.mxu0 0.0
    %650 = vmatprep.subr.mxu0 0.0
    %651 = vmatpush1.msra.mxu0 0.0
    %652 = vmatprep.subr.mxu0 0.0
    %653 = vmatpush1.msra.mxu0 0.0
    %654 = vmatprep.subr.mxu0 0.0
    %655 = vmatpush1.msra.mxu0 0.0
    %656 = vmatprep.subr.mxu0 0.0
    %657 = vmatpush1.msra.mxu0 0.0
    %658 = vmatprep.subr.mxu0 0.0
    %659 = vmatpush1.msra.mxu0 0.0
    %660 = vmatprep.subr.mxu0 0.0
    %661 = vmatpush1.msra.mxu0 0.0
    %662 = vmatprep.subr.mxu0 0.0
    %663 = vmatpush1.msra.mxu0 0.0
    %664 = vmatprep.subr.mxu0 0.0
    %665 = vmatpush1.msra.mxu0 0.0
    %666 = vmatprep.subr.mxu0 0.0
    %667 = vmatpush1.msra.mxu0 0.0
    %668 = vmatprep.subr.mxu0 0.0
    %669 = vmatpush1.msra.mxu0 0.0
    %670 = vmatprep.subr.mxu0 0.0
    %671 = vmatpush1.msra.mxu0 0.0
    %672 = vmatprep.subr.mxu0 0.0
    %673 = vmatpush1.msra.mxu0 0.0
    %674 = vmatprep.subr.mxu0 0.0
    %675 = vmatpush1.msra.mxu0 0.0
    %676 = vmatprep.subr.mxu0 0.0
    %677 = vmatpush1.msra.mxu0 0.0
    %678 = vmatprep.subr.mxu0 0.0
    %679 = vmatpush1.msra.mxu0 0.0
    %680 = vmatprep.subr.mxu0 0.0
    %681 = vmatpush1.msra.mxu0 0.0
    %682 = vmatprep.subr.mxu0 0.0
    %683 = vmatpush1.msra.mxu0 0.0
    %684 = vmatprep.subr.mxu0 0.0
    %685 = vmatpush1.msra.mxu0 0.0
    %686 = vmatprep.subr.mxu0 0.0
    %687 = vmatpush1.msra.mxu0 0.0
    %688 = vmatprep.subr.mxu0 0.0
    %689 = vmatpush1.msra.mxu0 0.0
    %690 = vmatprep.mubr.f32.mxu0 0.0
    %691 = vmatmul.mubr.f32.gmra.mrb[0].mxu0 %v624
    %v692 = vpop.f32.mrb[0].mxu0
    %v693 = vadd.f32 0.0, %v692
    %v694 = vpop.f32.mrb[0].mxu0
    %695 = vdwg.mxu0
    %v696 = vadd.f32 %v198, %v693
    %v697 = vxor.u32 %v696, 2147483648
    %v698 = vmul.f32 %v697, 1.442695
    %v699 = vpow.pop %v698
    %v700 = vadd.f32 %v699, 1.0
    %v701 = vrcp.pop %v700
    %v702 = vmul.f32 1.0, %v701
    %v703 = vtanh.pop %v696
    %v705 = vrot.slane %v613, 6
    %v707 = vmul.f32 %v702, %v705
    %709 = vrot.lane.b32.xlu0 %v703, 32
    %v710 = vpop.permute.xlu0 %709
    %v712 = vmul.f32 %v702, %v710
    %714 = vrot.lane.b32.xlu0 %v712, 32
    %v715 = vpop.permute.xlu0 %714
    %v717 = vadd.f32 %v707, %v715
    %v718 = vtanh.pop %v717
    %720 = vrot.lane.b32.xlu0 %v718, 32
    %v721 = vpop.permute.xlu0 %720
    %v723 = vmul.f32 %v702, %v721
    %725 = vrot.lane.b32.xlu0 %v723, 64
    %v726 = vpop.permute.xlu0 %725
    %v727 = vsel %vm201, %v726, 0
    %729 = vmatprep.subr.mxu0 0.0
    %730 = vmatpush1.msra.mxu0 %v108
    %731 = vmatprep.subr.mxu0 0.0
    %732 = vmatpush1.msra.mxu0 %v109
    %733 = vmatprep.subr.mxu0 0.0
    %734 = vmatpush1.msra.mxu0 %v110
    %735 = vmatprep.subr.mxu0 0.0
    %736 = vmatpush1.msra.mxu0 %v111
    %737 = vmatprep.subr.mxu0 0.0
    %738 = vmatpush1.msra.mxu0 0.0
    %739 = vmatprep.subr.mxu0 0.0
    %740 = vmatpush1.msra.mxu0 0.0
    %741 = vmatprep.subr.mxu0 0.0
    %742 = vmatpush1.msra.mxu0 0.0
    %743 = vmatprep.subr.mxu0 0.0
    %744 = vmatpush1.msra.mxu0 0.0
    %745 = vmatprep.subr.mxu0 0.0
    %746 = vmatpush1.msra.mxu0 0.0
    %747 = vmatprep.subr.mxu0 0.0
    %748 = vmatpush1.msra.mxu0 0.0
    %749 = vmatprep.subr.mxu0 0.0
    %750 = vmatpush1.msra.mxu0 0.0
    %751 = vmatprep.subr.mxu0 0.0
    %752 = vmatpush1.msra.mxu0 0.0
    %753 = vmatprep.subr.mxu0 0.0
    %754 = vmatpush1.msra.mxu0 0.0
    %755 = vmatprep.subr.mxu0 0.0
    %756 = vmatpush1.msra.mxu0 0.0
    %757 = vmatprep.subr.mxu0 0.0
    %758 = vmatpush1.msra.mxu0 0.0
    %759 = vmatprep.subr.mxu0 0.0
    %760 = vmatpush1.msra.mxu0 0.0
    %761 = vmatprep.subr.mxu0 0.0
    %762 = vmatpush1.msra.mxu0 0.0
    %763 = vmatprep.subr.mxu0 0.0
    %764 = vmatpush1.msra.mxu0 0.0
    %765 = vmatprep.subr.mxu0 0.0
    %766 = vmatpush1.msra.mxu0 0.0
    %767 = vmatprep.subr.mxu0 0.0
    %768 = vmatpush1.msra.mxu0 0.0
    %769 = vmatprep.subr.mxu0 0.0
    %770 = vmatpush1.msra.mxu0 0.0
    %771 = vmatprep.subr.mxu0 0.0
    %772 = vmatpush1.msra.mxu0 0.0
    %773 = vmatprep.subr.mxu0 0.0
    %774 = vmatpush1.msra.mxu0 0.0
    %775 = vmatprep.subr.mxu0 0.0
    %776 = vmatpush1.msra.mxu0 0.0
    %777 = vmatprep.subr.mxu0 0.0
    %778 = vmatpush1.msra.mxu0 0.0
    %779 = vmatprep.subr.mxu0 0.0
    %780 = vmatpush1.msra.mxu0 0.0
    %781 = vmatprep.subr.mxu0 0.0
    %782 = vmatpush1.msra.mxu0 0.0
    %783 = vmatprep.subr.mxu0 0.0
    %784 = vmatpush1.msra.mxu0 0.0
    %785 = vmatprep.subr.mxu0 0.0
    %786 = vmatpush1.msra.mxu0 0.0
    %787 = vmatprep.subr.mxu0 0.0
    %788 = vmatpush1.msra.mxu0 0.0
    %789 = vmatprep.subr.mxu0 0.0
    %790 = vmatpush1.msra.mxu0 0.0
    %791 = vmatprep.subr.mxu0 0.0
    %792 = vmatpush1.msra.mxu0 0.0
    %793 = vmatprep.mubr.f32.mxu0 0.0
    %794 = vmatmul.mubr.f32.gmra.mrb[0].mxu0 %v727
    %v795 = vpop.f32.mrb[0].mxu0
    %v796 = vadd.f32 0.0, %v795
    %v797 = vpop.f32.mrb[0].mxu0
    %798 = vdwg.mxu0
    %v800 = vrot.slane %v796, 6
    %v802 = vadd.f32 %v198, %v800
    %v803 = vxor.u32 %v802, 2147483648
    %v804 = vmul.f32 %v803, 1.442695
    %v805 = vpow.pop %v804
    %v806 = vadd.f32 %v805, 1.0
    %v807 = vrcp.pop %v806
    %v808 = vmul.f32 1.0, %v807
    %v809 = vtanh.pop %v802
    %v811 = vrot.slane %v717, 6
    %v813 = vmul.f32 %v808, %v811
    %815 = vrot.lane.b32.xlu0 %v809, 32
    %v816 = vpop.permute.xlu0 %815
    %v818 = vmul.f32 %v808, %v816
    %820 = vrot.lane.b32.xlu0 %v818, 32
    %v821 = vpop.permute.xlu0 %820
    %v823 = vadd.f32 %v813, %v821
    %v824 = vtanh.pop %v823
    %826 = vrot.lane.b32.xlu0 %v824, 32
    %v827 = vpop.permute.xlu0 %826
    %v829 = vmul.f32 %v808, %v827
    %v831 = vrot.slane %v829, 2
    %832 = vrot.lane.b32.xlu0 %v831, 64
    %v833 = vpop.permute.xlu0 %832
    %v834 = vsel %vm201, %v833, 0
    %836 = vmatprep.subr.mxu0 0.0
    %837 = vmatpush1.msra.mxu0 %v108
    %838 = vmatprep.subr.mxu0 0.0
    %839 = vmatpush1.msra.mxu0 %v109
    %840 = vmatprep.subr.mxu0 0.0
    %841 = vmatpush1.msra.mxu0 %v110
    %842 = vmatprep.subr.mxu0 0.0
    %843 = vmatpush1.msra.mxu0 %v111
    %844 = vmatprep.subr.mxu0 0.0
    %845 = vmatpush1.msra.mxu0 0.0
    %846 = vmatprep.subr.mxu0 0.0
    %847 = vmatpush1.msra.mxu0 0.0
    %848 = vmatprep.subr.mxu0 0.0
    %849 = vmatpush1.msra.mxu0 0.0
    %850 = vmatprep.subr.mxu0 0.0
    %851 = vmatpush1.msra.mxu0 0.0
    %852 = vmatprep.subr.mxu0 0.0
    %853 = vmatpush1.msra.mxu0 0.0
    %854 = vmatprep.subr.mxu0 0.0
    %855 = vmatpush1.msra.mxu0 0.0
    %856 = vmatprep.subr.mxu0 0.0
    %857 = vmatpush1.msra.mxu0 0.0
    %858 = vmatprep.subr.mxu0 0.0
    %859 = vmatpush1.msra.mxu0 0.0
    %860 = vmatprep.subr.mxu0 0.0
    %861 = vmatpush1.msra.mxu0 0.0
    %862 = vmatprep.subr.mxu0 0.0
    %863 = vmatpush1.msra.mxu0 0.0
    %864 = vmatprep.subr.mxu0 0.0
    %865 = vmatpush1.msra.mxu0 0.0
    %866 = vmatprep.subr.mxu0 0.0
    %867 = vmatpush1.msra.mxu0 0.0
    %868 = vmatprep.subr.mxu0 0.0
    %869 = vmatpush1.msra.mxu0 0.0
    %870 = vmatprep.subr.mxu0 0.0
    %871 = vmatpush1.msra.mxu0 0.0
    %872 = vmatprep.subr.mxu0 0.0
    %873 = vmatpush1.msra.mxu0 0.0
    %874 = vmatprep.subr.mxu0 0.0
    %875 = vmatpush1.msra.mxu0 0.0
    %876 = vmatprep.subr.mxu0 0.0
    %877 = vmatpush1.msra.mxu0 0.0
    %878 = vmatprep.subr.mxu0 0.0
    %879 = vmatpush1.msra.mxu0 0.0
    %880 = vmatprep.subr.mxu0 0.0
    %881 = vmatpush1.msra.mxu0 0.0
    %882 = vmatprep.subr.mxu0 0.0
    %883 = vmatpush1.msra.mxu0 0.0
    %884 = vmatprep.subr.mxu0 0.0
    %885 = vmatpush1.msra.mxu0 0.0
    %886 = vmatprep.subr.mxu0 0.0
    %887 = vmatpush1.msra.mxu0 0.0
    %888 = vmatprep.subr.mxu0 0.0
    %889 = vmatpush1.msra.mxu0 0.0
    %890 = vmatprep.subr.mxu0 0.0
    %891 = vmatpush1.msra.mxu0 0.0
    %892 = vmatprep.subr.mxu0 0.0
    %893 = vmatpush1.msra.mxu0 0.0
    %894 = vmatprep.subr.mxu0 0.0
    %895 = vmatpush1.msra.mxu0 0.0
    %896 = vmatprep.subr.mxu0 0.0
    %897 = vmatpush1.msra.mxu0 0.0
    %898 = vmatprep.subr.mxu0 0.0
    %899 = vmatpush1.msra.mxu0 0.0
    %900 = vmatprep.mubr.f32.mxu0 0.0
    %901 = vmatmul.mubr.f32.gmra.mrb[0].mxu0 %v834
    %v902 = vpop.f32.mrb[0].mxu0
    %v903 = vadd.f32 0.0, %v902
    %v904 = vpop.f32.mrb[0].mxu0
    %905 = vdwg.mxu0
    %v907 = vrot.slane %v903, 4
    %v909 = vadd.f32 %v198, %v907
    %v910 = vxor.u32 %v909, 2147483648
    %v911 = vmul.f32 %v910, 1.442695
    %v912 = vpow.pop %v911
    %v913 = vadd.f32 %v912, 1.0
    %v914 = vrcp.pop %v913
    %v915 = vmul.f32 1.0, %v914
    %v916 = vtanh.pop %v909
    %v918 = vrot.slane %v823, 6
    %v920 = vmul.f32 %v915, %v918
    %922 = vrot.lane.b32.xlu0 %v916, 32
    %v923 = vpop.permute.xlu0 %922
    %v925 = vmul.f32 %v915, %v923
    %927 = vrot.lane.b32.xlu0 %v925, 32
    %v928 = vpop.permute.xlu0 %927
    %v930 = vadd.f32 %v920, %v928
    %v931 = vtanh.pop %v930
    %933 = vrot.lane.b32.xlu0 %v931, 32
    %v934 = vpop.permute.xlu0 %933
    %v936 = vmul.f32 %v915, %v934
    %v938 = vrot.slane %v936, 4
    %939 = vrot.lane.b32.xlu0 %v938, 64
    %v940 = vpop.permute.xlu0 %939
    %v941 = vsel %vm201, %v940, 0
    %943 = vmatprep.subr.mxu0 0.0
    %944 = vmatpush1.msra.mxu0 %v108
    %945 = vmatprep.subr.mxu0 0.0
    %946 = vmatpush1.msra.mxu0 %v109
    %947 = vmatprep.subr.mxu0 0.0
    %948 = vmatpush1.msra.mxu0 %v110
    %949 = vmatprep.subr.mxu0 0.0
    %950 = vmatpush1.msra.mxu0 %v111
    %951 = vmatprep.subr.mxu0 0.0
    %952 = vmatpush1.msra.mxu0 0.0
    %953 = vmatprep.subr.mxu0 0.0
    %954 = vmatpush1.msra.mxu0 0.0
    %955 = vmatprep.subr.mxu0 0.0
    %956 = vmatpush1.msra.mxu0 0.0
    %957 = vmatprep.subr.mxu0 0.0
    %958 = vmatpush1.msra.mxu0 0.0
    %959 = vmatprep.subr.mxu0 0.0
    %960 = vmatpush1.msra.mxu0 0.0
    %961 = vmatprep.subr.mxu0 0.0
    %962 = vmatpush1.msra.mxu0 0.0
    %963 = vmatprep.subr.mxu0 0.0
    %964 = vmatpush1.msra.mxu0 0.0
    %965 = vmatprep.subr.mxu0 0.0
    %966 = vmatpush1.msra.mxu0 0.0
    %967 = vmatprep.subr.mxu0 0.0
    %968 = vmatpush1.msra.mxu0 0.0
    %969 = vmatprep.subr.mxu0 0.0
    %970 = vmatpush1.msra.mxu0 0.0
    %971 = vmatprep.subr.mxu0 0.0
    %972 = vmatpush1.msra.mxu0 0.0
    %973 = vmatprep.subr.mxu0 0.0
    %974 = vmatpush1.msra.mxu0 0.0
    %975 = vmatprep.subr.mxu0 0.0
    %976 = vmatpush1.msra.mxu0 0.0
    %977 = vmatprep.subr.mxu0 0.0
    %978 = vmatpush1.msra.mxu0 0.0
    %979 = vmatprep.subr.mxu0 0.0
    %980 = vmatpush1.msra.mxu0 0.0
    %981 = vmatprep.subr.mxu0 0.0
    %982 = vmatpush1.msra.mxu0 0.0
    %983 = vmatprep.subr.mxu0 0.0
    %984 = vmatpush1.msra.mxu0 0.0
    %985 = vmatprep.subr.mxu0 0.0
    %986 = vmatpush1.msra.mxu0 0.0
    %987 = vmatprep.subr.mxu0 0.0
    %988 = vmatpush1.msra.mxu0 0.0
    %989 = vmatprep.subr.mxu0 0.0
    %990 = vmatpush1.msra.mxu0 0.0
    %991 = vmatprep.subr.mxu0 0.0
    %992 = vmatpush1.msra.mxu0 0.0
    %993 = vmatprep.subr.mxu0 0.0
    %994 = vmatpush1.msra.mxu0 0.0
    %995 = vmatprep.subr.mxu0 0.0
    %996 = vmatpush1.msra.mxu0 0.0
    %997 = vmatprep.subr.mxu0 0.0
    %998 = vmatpush1.msra.mxu0 0.0
    %999 = vmatprep.subr.mxu0 0.0
    %1000 = vmatpush1.msra.mxu0 0.0
    %1001 = vmatprep.subr.mxu0 0.0
    %1002 = vmatpush1.msra.mxu0 0.0
    %1003 = vmatprep.subr.mxu0 0.0
    %1004 = vmatpush1.msra.mxu0 0.0
    %1005 = vmatprep.subr.mxu0 0.0
    %1006 = vmatpush1.msra.mxu0 0.0
    %1007 = vmatprep.mubr.f32.mxu0 0.0
    %1008 = vmatmul.mubr.f32.gmra.mrb[0].mxu0 %v941
    %v1009 = vpop.f32.mrb[0].mxu0
    %v1010 = vadd.f32 0.0, %v1009
    %v1011 = vpop.f32.mrb[0].mxu0
    %1012 = vdwg.mxu0
    %v1014 = vrot.slane %v1010, 2
    %v1016 = vadd.f32 %v198, %v1014
    %v1017 = vxor.u32 %v1016, 2147483648
    %v1018 = vmul.f32 %v1017, 1.442695
    %v1019 = vpow.pop %v1018
    %v1020 = vadd.f32 %v1019, 1.0
    %v1021 = vrcp.pop %v1020
    %v1022 = vmul.f32 1.0, %v1021
    %v1023 = vtanh.pop %v1016
    %v1025 = vrot.slane %v930, 6
    %v1027 = vmul.f32 %v1022, %v1025
    %1029 = vrot.lane.b32.xlu0 %v1023, 32
    %v1030 = vpop.permute.xlu0 %1029
    %v1032 = vmul.f32 %v1022, %v1030
    %1034 = vrot.lane.b32.xlu0 %v1032, 32
    %v1035 = vpop.permute.xlu0 %1034
    %v1037 = vadd.f32 %v1027, %v1035
    %v1038 = vtanh.pop %v1037
    %1040 = vrot.lane.b32.xlu0 %v1038, 32
    %v1041 = vpop.permute.xlu0 %1040
    %v1043 = vmul.f32 %v1022, %v1041
    %vm1044 = vcmask 1041408
    %v1045 = vsel %vm1044, %v299, %v405
    %vm1046 = vcmask 1043456
    %v1047 = vsel %vm1046, %v1045, %v512
    %vm1048 = vcmask 1045504
    %v1049 = vsel %vm1048, %v1047, %v619
    %v1050 = vsel %vm1044, %v723, %v829
    %v1051 = vsel %vm1046, %v1050, %v936
    %v1052 = vsel %vm1048, %v1051, %v1043
    %v1053 = vld [vmem:[#allocation6] sm:$0xff]
    %v1054 = vld [vmem:[#allocation6 + $0x8] sm:$0xff]
    %v1055 = vld [vmem:[#allocation6 + $0x10] sm:$0xff]
    %v1056 = vld [vmem:[#allocation6 + $0x18] sm:$0xff]
    %v1057 = vld [vmem:[#allocation7] sm:$0xff]
    %v1058 = vld [vmem:[#allocation7 + $0x8] sm:$0xff]
    %v1059 = vld [vmem:[#allocation7 + $0x10] sm:$0xff]
    %v1060 = vld [vmem:[#allocation7 + $0x18] sm:$0xff]
    %v1061 = vld [vmem:[%s6] sm:$0x1]
    %v1063 = vlaneseq
    %v1064 = vshrl.u32 %v1063, 7
    %v1065 = vsub.s32 0, %v1064
    %v1066 = vrot.slane %v1061, %v1065
    %1070 = vrot.lane.b32.xlu0 %v1049, 64
    %v1071 = vpop.permute.xlu0 %1070
    %1072 = vrot.lane.b32.xlu0 %v1052, 64
    %v1073 = vpop.permute.xlu0 %1072
    %v1074 = vsel %vm201, %v1071, 0
    %v1076 = vsel %vm201, %v1073, 0
    %1078 = vmatprep.subr.mxu0 0.0
    %1079 = vmatpush1.msra.mxu0 %v1053
    %1080 = vmatprep.subr.mxu0 0.0
    %1081 = vmatpush1.msra.mxu0 %v1054
    %1082 = vmatprep.subr.mxu0 0.0
    %1083 = vmatpush1.msra.mxu0 %v1055
    %1084 = vmatprep.subr.mxu0 0.0
    %1085 = vmatpush1.msra.mxu0 %v1056
    %1086 = vmatprep.subr.mxu0 0.0
    %1087 = vmatpush1.msra.mxu0 0.0
    %1088 = vmatprep.subr.mxu0 0.0
    %1089 = vmatpush1.msra.mxu0 0.0
    %1090 = vmatprep.subr.mxu0 0.0
    %1091 = vmatpush1.msra.mxu0 0.0
    %1092 = vmatprep.subr.mxu0 0.0
    %1093 = vmatpush1.msra.mxu0 0.0
    %1094 = vmatprep.subr.mxu0 0.0
    %1095 = vmatpush1.msra.mxu0 0.0
    %1096 = vmatprep.subr.mxu0 0.0
    %1097 = vmatpush1.msra.mxu0 0.0
    %1098 = vmatprep.subr.mxu0 0.0
    %1099 = vmatpush1.msra.mxu0 0.0
    %1100 = vmatprep.subr.mxu0 0.0
    %1101 = vmatpush1.msra.mxu0 0.0
    %1102 = vmatprep.subr.mxu0 0.0
    %1103 = vmatpush1.msra.mxu0 0.0
    %1104 = vmatprep.subr.mxu0 0.0
    %1105 = vmatpush1.msra.mxu0 0.0
    %1106 = vmatprep.subr.mxu0 0.0
    %1107 = vmatpush1.msra.mxu0 0.0
    %1108 = vmatprep.subr.mxu0 0.0
    %1109 = vmatpush1.msra.mxu0 0.0
    %1110 = vmatprep.subr.mxu0 0.0
    %1111 = vmatpush1.msra.mxu0 0.0
    %1112 = vmatprep.subr.mxu0 0.0
    %1113 = vmatpush1.msra.mxu0 0.0
    %1114 = vmatprep.subr.mxu0 0.0
    %1115 = vmatpush1.msra.mxu0 0.0
    %1116 = vmatprep.subr.mxu0 0.0
    %1117 = vmatpush1.msra.mxu0 0.0
    %1118 = vmatprep.subr.mxu0 0.0
    %1119 = vmatpush1.msra.mxu0 0.0
    %1120 = vmatprep.subr.mxu0 0.0
    %1121 = vmatpush1.msra.mxu0 0.0
    %1122 = vmatprep.subr.mxu0 0.0
    %1123 = vmatpush1.msra.mxu0 0.0
    %1124 = vmatprep.subr.mxu0 0.0
    %1125 = vmatpush1.msra.mxu0 0.0
    %1126 = vmatprep.subr.mxu0 0.0
    %1127 = vmatpush1.msra.mxu0 0.0
    %1128 = vmatprep.subr.mxu0 0.0
    %1129 = vmatpush1.msra.mxu0 0.0
    %1130 = vmatprep.subr.mxu0 0.0
    %1131 = vmatpush1.msra.mxu0 0.0
    %1132 = vmatprep.subr.mxu0 0.0
    %1133 = vmatpush1.msra.mxu0 0.0
    %1134 = vmatprep.subr.mxu0 0.0
    %1135 = vmatpush1.msra.mxu0 0.0
    %1136 = vmatprep.subr.mxu0 0.0
    %1137 = vmatpush1.msra.mxu0 0.0
    %1138 = vmatprep.subr.mxu0 0.0
    %1139 = vmatpush1.msra.mxu0 0.0
    %1140 = vmatprep.subr.mxu0 0.0
    %1141 = vmatpush1.msra.mxu0 0.0
    %1142 = vmatprep.mubr.f32.mxu0 0.0
    %1143 = vmatmul.mubr.f32.gmra.mrb[0].mxu0 %v1074
    %v1144 = vpop.f32.mrb[0].mxu0
    %v1145 = vadd.f32 %v1066, %v1144
    %v1146 = vpop.f32.mrb[0].mxu0
    %1147 = vmatprep.mubr.f32.mxu0 0.0
    %1148 = vmatmul.mubr.f32.gmra.mrb[0].mxu0 %v1076
    %v1149 = vpop.f32.mrb[0].mxu0
    %v1150 = vadd.f32 %v1066, %v1149
    %v1151 = vpop.f32.mrb[0].mxu0
    %1152 = vdwg.mxu0
    %1153 = vmatprep.subr.mxu0 0.0
    %1154 = vmatpush1.msra.mxu0 %v1057
    %1155 = vmatprep.subr.mxu0 0.0
    %1156 = vmatpush1.msra.mxu0 %v1058
    %1157 = vmatprep.subr.mxu0 0.0
    %1158 = vmatpush1.msra.mxu0 %v1059
    %1159 = vmatprep.subr.mxu0 0.0
    %1160 = vmatpush1.msra.mxu0 %v1060
    %1161 = vmatprep.subr.mxu0 0.0
    %1162 = vmatpush1.msra.mxu0 0.0
    %1163 = vmatprep.subr.mxu0 0.0
    %1164 = vmatpush1.msra.mxu0 0.0
    %1165 = vmatprep.subr.mxu0 0.0
    %1166 = vmatpush1.msra.mxu0 0.0
    %1167 = vmatprep.subr.mxu0 0.0
    %1168 = vmatpush1.msra.mxu0 0.0
    %1169 = vmatprep.subr.mxu0 0.0
    %1170 = vmatpush1.msra.mxu0 0.0
    %1171 = vmatprep.subr.mxu0 0.0
    %1172 = vmatpush1.msra.mxu0 0.0
    %1173 = vmatprep.subr.mxu0 0.0
    %1174 = vmatpush1.msra.mxu0 0.0
    %1175 = vmatprep.subr.mxu0 0.0
    %1176 = vmatpush1.msra.mxu0 0.0
    %1177 = vmatprep.subr.mxu0 0.0
    %1178 = vmatpush1.msra.mxu0 0.0
    %1179 = vmatprep.subr.mxu0 0.0
    %1180 = vmatpush1.msra.mxu0 0.0
    %1181 = vmatprep.subr.mxu0 0.0
    %1182 = vmatpush1.msra.mxu0 0.0
    %1183 = vmatprep.subr.mxu0 0.0
    %1184 = vmatpush1.msra.mxu0 0.0
    %1185 = vmatprep.subr.mxu0 0.0
    %1186 = vmatpush1.msra.mxu0 0.0
    %1187 = vmatprep.subr.mxu0 0.0
    %1188 = vmatpush1.msra.mxu0 0.0
    %1189 = vmatprep.subr.mxu0 0.0
    %1190 = vmatpush1.msra.mxu0 0.0
    %1191 = vmatprep.subr.mxu0 0.0
    %1192 = vmatpush1.msra.mxu0 0.0
    %1193 = vmatprep.subr.mxu0 0.0
    %1194 = vmatpush1.msra.mxu0 0.0
    %1195 = vmatprep.subr.mxu0 0.0
    %1196 = vmatpush1.msra.mxu0 0.0
    %1197 = vmatprep.subr.mxu0 0.0
    %1198 = vmatpush1.msra.mxu0 0.0
    %1199 = vmatprep.subr.mxu0 0.0
    %1200 = vmatpush1.msra.mxu0 0.0
    %1201 = vmatprep.subr.mxu0 0.0
    %1202 = vmatpush1.msra.mxu0 0.0
    %1203 = vmatprep.subr.mxu0 0.0
    %1204 = vmatpush1.msra.mxu0 0.0
    %1205 = vmatprep.subr.mxu0 0.0
    %1206 = vmatpush1.msra.mxu0 0.0
    %1207 = vmatprep.subr.mxu0 0.0
    %1208 = vmatpush1.msra.mxu0 0.0
    %1209 = vmatprep.subr.mxu0 0.0
    %1210 = vmatpush1.msra.mxu0 0.0
    %1211 = vmatprep.subr.mxu0 0.0
    %1212 = vmatpush1.msra.mxu0 0.0
    %1213 = vmatprep.subr.mxu0 0.0
    %1214 = vmatpush1.msra.mxu0 0.0
    %1215 = vmatprep.subr.mxu0 0.0
    %1216 = vmatpush1.msra.mxu0 0.0
    %1217 = vmatprep.mubr.f32.mxu0 0.0
    %1218 = vmatmul.mubr.f32.gmra.mrb[0].mxu0 %v203
    %v1219 = vpop.f32.mrb[0].mxu0
    %v1220 = vadd.f32 0.0, %v1219
    %v1221 = vpop.f32.mrb[0].mxu0
    %1222 = vdwg.mxu0
    %v1223 = vadd.f32 %v1145, %v1220
    %v1224 = vxor.u32 %v1223, 2147483648
    %v1225 = vmul.f32 %v1224, 1.442695
    %v1226 = vpow.pop %v1225
    %v1227 = vadd.f32 %v1226, 1.0
    %v1228 = vrcp.pop %v1227
    %v1229 = vmul.f32 1.0, %v1228
    %v1230 = vtanh.pop %v1223
    %v1231 = vmul.f32 %v1229, 0.0
    %1233 = vrot.lane.b32.xlu0 %v1230, 32
    %v1234 = vpop.permute.xlu0 %1233
    %v1236 = vmul.f32 %v1229, %v1234
    %1238 = vrot.lane.b32.xlu0 %v1236, 32
    %v1239 = vpop.permute.xlu0 %1238
    %v1241 = vadd.f32 %v1231, %v1239
    %v1242 = vtanh.pop %v1241
    %1244 = vrot.lane.b32.xlu0 %v1242, 32
    %v1245 = vpop.permute.xlu0 %1244
    %v1247 = vmul.f32 %v1229, %v1245
    %1249 = vrot.lane.b32.xlu0 %v1247, 64
    %v1250 = vpop.permute.xlu0 %1249
    %v1251 = vsel %vm201, %v1250, 0
    %1253 = vmatprep.subr.mxu0 0.0
    %1254 = vmatpush1.msra.mxu0 %v1057
    %1255 = vmatprep.subr.mxu0 0.0
    %1256 = vmatpush1.msra.mxu0 %v1058
    %1257 = vmatprep.subr.mxu0 0.0
    %1258 = vmatpush1.msra.mxu0 %v1059
    %1259 = vmatprep.subr.mxu0 0.0
    %1260 = vmatpush1.msra.mxu0 %v1060
    %1261 = vmatprep.subr.mxu0 0.0
    %1262 = vmatpush1.msra.mxu0 0.0
    %1263 = vmatprep.subr.mxu0 0.0
    %1264 = vmatpush1.msra.mxu0 0.0
    %1265 = vmatprep.subr.mxu0 0.0
    %1266 = vmatpush1.msra.mxu0 0.0
    %1267 = vmatprep.subr.mxu0 0.0
    %1268 = vmatpush1.msra.mxu0 0.0
    %1269 = vmatprep.subr.mxu0 0.0
    %1270 = vmatpush1.msra.mxu0 0.0
    %1271 = vmatprep.subr.mxu0 0.0
    %1272 = vmatpush1.msra.mxu0 0.0
    %1273 = vmatprep.subr.mxu0 0.0
    %1274 = vmatpush1.msra.mxu0 0.0
    %1275 = vmatprep.subr.mxu0 0.0
    %1276 = vmatpush1.msra.mxu0 0.0
    %1277 = vmatprep.subr.mxu0 0.0
    %1278 = vmatpush1.msra.mxu0 0.0
    %1279 = vmatprep.subr.mxu0 0.0
    %1280 = vmatpush1.msra.mxu0 0.0
    %1281 = vmatprep.subr.mxu0 0.0
    %1282 = vmatpush1.msra.mxu0 0.0
    %1283 = vmatprep.subr.mxu0 0.0
    %1284 = vmatpush1.msra.mxu0 0.0
    %1285 = vmatprep.subr.mxu0 0.0
    %1286 = vmatpush1.msra.mxu0 0.0
    %1287 = vmatprep.subr.mxu0 0.0
    %1288 = vmatpush1.msra.mxu0 0.0
    %1289 = vmatprep.subr.mxu0 0.0
    %1290 = vmatpush1.msra.mxu0 0.0
    %1291 = vmatprep.subr.mxu0 0.0
    %1292 = vmatpush1.msra.mxu0 0.0
    %1293 = vmatprep.subr.mxu0 0.0
    %1294 = vmatpush1.msra.mxu0 0.0
    %1295 = vmatprep.subr.mxu0 0.0
    %1296 = vmatpush1.msra.mxu0 0.0
    %1297 = vmatprep.subr.mxu0 0.0
    %1298 = vmatpush1.msra.mxu0 0.0
    %1299 = vmatprep.subr.mxu0 0.0
    %1300 = vmatpush1.msra.mxu0 0.0
    %1301 = vmatprep.subr.mxu0 0.0
    %1302 = vmatpush1.msra.mxu0 0.0
    %1303 = vmatprep.subr.mxu0 0.0
    %1304 = vmatpush1.msra.mxu0 0.0
    %1305 = vmatprep.subr.mxu0 0.0
    %1306 = vmatpush1.msra.mxu0 0.0
    %1307 = vmatprep.subr.mxu0 0.0
    %1308 = vmatpush1.msra.mxu0 0.0
    %1309 = vmatprep.subr.mxu0 0.0
    %1310 = vmatpush1.msra.mxu0 0.0
    %1311 = vmatprep.subr.mxu0 0.0
    %1312 = vmatpush1.msra.mxu0 0.0
    %1313 = vmatprep.subr.mxu0 0.0
    %1314 = vmatpush1.msra.mxu0 0.0
    %1315 = vmatprep.subr.mxu0 0.0
    %1316 = vmatpush1.msra.mxu0 0.0
    %1317 = vmatprep.mubr.f32.mxu0 0.0
    %1318 = vmatmul.mubr.f32.gmra.mrb[0].mxu0 %v1251
    %v1319 = vpop.f32.mrb[0].mxu0
    %v1320 = vadd.f32 0.0, %v1319
    %v1321 = vpop.f32.mrb[0].mxu0
    %1322 = vdwg.mxu0
    %v1324 = vrot.slane %v1320, 6
    %v1326 = vadd.f32 %v1145, %v1324
    %v1327 = vxor.u32 %v1326, 2147483648
    %v1328 = vmul.f32 %v1327, 1.442695
    %v1329 = vpow.pop %v1328
    %v1330 = vadd.f32 %v1329, 1.0
    %v1331 = vrcp.pop %v1330
    %v1332 = vmul.f32 1.0, %v1331
    %v1333 = vtanh.pop %v1326
    %v1335 = vrot.slane %v1241, 6
    %v1337 = vmul.f32 %v1332, %v1335
    %1339 = vrot.lane.b32.xlu0 %v1333, 32
    %v1340 = vpop.permute.xlu0 %1339
    %v1342 = vmul.f32 %v1332, %v1340
    %1344 = vrot.lane.b32.xlu0 %v1342, 32
    %v1345 = vpop.permute.xlu0 %1344
    %v1347 = vadd.f32 %v1337, %v1345
    %v1348 = vtanh.pop %v1347
    %1350 = vrot.lane.b32.xlu0 %v1348, 32
    %v1351 = vpop.permute.xlu0 %1350
    %v1353 = vmul.f32 %v1332, %v1351
    %v1355 = vrot.slane %v1353, 2
    %1356 = vrot.lane.b32.xlu0 %v1355, 64
    %v1357 = vpop.permute.xlu0 %1356
    %v1358 = vsel %vm201, %v1357, 0
    %1360 = vmatprep.subr.mxu0 0.0
    %1361 = vmatpush1.msra.mxu0 %v1057
    %1362 = vmatprep.subr.mxu0 0.0
    %1363 = vmatpush1.msra.mxu0 %v1058
    %1364 = vmatprep.subr.mxu0 0.0
    %1365 = vmatpush1.msra.mxu0 %v1059
    %1366 = vmatprep.subr.mxu0 0.0
    %1367 = vmatpush1.msra.mxu0 %v1060
    %1368 = vmatprep.subr.mxu0 0.0
    %1369 = vmatpush1.msra.mxu0 0.0
    %1370 = vmatprep.subr.mxu0 0.0
    %1371 = vmatpush1.msra.mxu0 0.0
    %1372 = vmatprep.subr.mxu0 0.0
    %1373 = vmatpush1.msra.mxu0 0.0
    %1374 = vmatprep.subr.mxu0 0.0
    %1375 = vmatpush1.msra.mxu0 0.0
    %1376 = vmatprep.subr.mxu0 0.0
    %1377 = vmatpush1.msra.mxu0 0.0
    %1378 = vmatprep.subr.mxu0 0.0
    %1379 = vmatpush1.msra.mxu0 0.0
    %1380 = vmatprep.subr.mxu0 0.0
    %1381 = vmatpush1.msra.mxu0 0.0
    %1382 = vmatprep.subr.mxu0 0.0
    %1383 = vmatpush1.msra.mxu0 0.0
    %1384 = vmatprep.subr.mxu0 0.0
    %1385 = vmatpush1.msra.mxu0 0.0
    %1386 = vmatprep.subr.mxu0 0.0
    %1387 = vmatpush1.msra.mxu0 0.0
    %1388 = vmatprep.subr.mxu0 0.0
    %1389 = vmatpush1.msra.mxu0 0.0
    %1390 = vmatprep.subr.mxu0 0.0
    %1391 = vmatpush1.msra.mxu0 0.0
    %1392 = vmatprep.subr.mxu0 0.0
    %1393 = vmatpush1.msra.mxu0 0.0
    %1394 = vmatprep.subr.mxu0 0.0
    %1395 = vmatpush1.msra.mxu0 0.0
    %1396 = vmatprep.subr.mxu0 0.0
    %1397 = vmatpush1.msra.mxu0 0.0
    %1398 = vmatprep.subr.mxu0 0.0
    %1399 = vmatpush1.msra.mxu0 0.0
    %1400 = vmatprep.subr.mxu0 0.0
    %1401 = vmatpush1.msra.mxu0 0.0
    %1402 = vmatprep.subr.mxu0 0.0
    %1403 = vmatpush1.msra.mxu0 0.0
    %1404 = vmatprep.subr.mxu0 0.0
    %1405 = vmatpush1.msra.mxu0 0.0
    %1406 = vmatprep.subr.mxu0 0.0
    %1407 = vmatpush1.msra.mxu0 0.0
    %1408 = vmatprep.subr.mxu0 0.0
    %1409 = vmatpush1.msra.mxu0 0.0
    %1410 = vmatprep.subr.mxu0 0.0
    %1411 = vmatpush1.msra.mxu0 0.0
    %1412 = vmatprep.subr.mxu0 0.0
    %1413 = vmatpush1.msra.mxu0 0.0
    %1414 = vmatprep.subr.mxu0 0.0
    %1415 = vmatpush1.msra.mxu0 0.0
    %1416 = vmatprep.subr.mxu0 0.0
    %1417 = vmatpush1.msra.mxu0 0.0
    %1418 = vmatprep.subr.mxu0 0.0
    %1419 = vmatpush1.msra.mxu0 0.0
    %1420 = vmatprep.subr.mxu0 0.0
    %1421 = vmatpush1.msra.mxu0 0.0
    %1422 = vmatprep.subr.mxu0 0.0
    %1423 = vmatpush1.msra.mxu0 0.0
    %1424 = vmatprep.mubr.f32.mxu0 0.0
    %1425 = vmatmul.mubr.f32.gmra.mrb[0].mxu0 %v1358
    %v1426 = vpop.f32.mrb[0].mxu0
    %v1427 = vadd.f32 0.0, %v1426
    %v1428 = vpop.f32.mrb[0].mxu0
    %1429 = vdwg.mxu0
    %v1431 = vrot.slane %v1427, 4
    %v1433 = vadd.f32 %v1145, %v1431
    %v1434 = vxor.u32 %v1433, 2147483648
    %v1435 = vmul.f32 %v1434, 1.442695
    %v1436 = vpow.pop %v1435
    %v1437 = vadd.f32 %v1436, 1.0
    %v1438 = vrcp.pop %v1437
    %v1439 = vmul.f32 1.0, %v1438
    %v1440 = vtanh.pop %v1433
    %v1442 = vrot.slane %v1347, 6
    %v1444 = vmul.f32 %v1439, %v1442
    %1446 = vrot.lane.b32.xlu0 %v1440, 32
    %v1447 = vpop.permute.xlu0 %1446
    %v1449 = vmul.f32 %v1439, %v1447
    %1451 = vrot.lane.b32.xlu0 %v1449, 32
    %v1452 = vpop.permute.xlu0 %1451
    %v1454 = vadd.f32 %v1444, %v1452
    %v1455 = vtanh.pop %v1454
    %1457 = vrot.lane.b32.xlu0 %v1455, 32
    %v1458 = vpop.permute.xlu0 %1457
    %v1460 = vmul.f32 %v1439, %v1458
    %v1462 = vrot.slane %v1460, 4
    %1463 = vrot.lane.b32.xlu0 %v1462, 64
    %v1464 = vpop.permute.xlu0 %1463
    %v1465 = vsel %vm201, %v1464, 0
    %1467 = vmatprep.subr.mxu0 0.0
    %1468 = vmatpush1.msra.mxu0 %v1057
    %1469 = vmatprep.subr.mxu0 0.0
    %1470 = vmatpush1.msra.mxu0 %v1058
    %1471 = vmatprep.subr.mxu0 0.0
    %1472 = vmatpush1.msra.mxu0 %v1059
    %1473 = vmatprep.subr.mxu0 0.0
    %1474 = vmatpush1.msra.mxu0 %v1060
    %1475 = vmatprep.subr.mxu0 0.0
    %1476 = vmatpush1.msra.mxu0 0.0
    %1477 = vmatprep.subr.mxu0 0.0
    %1478 = vmatpush1.msra.mxu0 0.0
    %1479 = vmatprep.subr.mxu0 0.0
    %1480 = vmatpush1.msra.mxu0 0.0
    %1481 = vmatprep.subr.mxu0 0.0
    %1482 = vmatpush1.msra.mxu0 0.0
    %1483 = vmatprep.subr.mxu0 0.0
    %1484 = vmatpush1.msra.mxu0 0.0
    %1485 = vmatprep.subr.mxu0 0.0
    %1486 = vmatpush1.msra.mxu0 0.0
    %1487 = vmatprep.subr.mxu0 0.0
    %1488 = vmatpush1.msra.mxu0 0.0
    %1489 = vmatprep.subr.mxu0 0.0
    %1490 = vmatpush1.msra.mxu0 0.0
    %1491 = vmatprep.subr.mxu0 0.0
    %1492 = vmatpush1.msra.mxu0 0.0
    %1493 = vmatprep.subr.mxu0 0.0
    %1494 = vmatpush1.msra.mxu0 0.0
    %1495 = vmatprep.subr.mxu0 0.0
    %1496 = vmatpush1.msra.mxu0 0.0
    %1497 = vmatprep.subr.mxu0 0.0
    %1498 = vmatpush1.msra.mxu0 0.0
    %1499 = vmatprep.subr.mxu0 0.0
    %1500 = vmatpush1.msra.mxu0 0.0
    %1501 = vmatprep.subr.mxu0 0.0
    %1502 = vmatpush1.msra.mxu0 0.0
    %1503 = vmatprep.subr.mxu0 0.0
    %1504 = vmatpush1.msra.mxu0 0.0
    %1505 = vmatprep.subr.mxu0 0.0
    %1506 = vmatpush1.msra.mxu0 0.0
    %1507 = vmatprep.subr.mxu0 0.0
    %1508 = vmatpush1.msra.mxu0 0.0
    %1509 = vmatprep.subr.mxu0 0.0
    %1510 = vmatpush1.msra.mxu0 0.0
    %1511 = vmatprep.subr.mxu0 0.0
    %1512 = vmatpush1.msra.mxu0 0.0
    %1513 = vmatprep.subr.mxu0 0.0
    %1514 = vmatpush1.msra.mxu0 0.0
    %1515 = vmatprep.subr.mxu0 0.0
    %1516 = vmatpush1.msra.mxu0 0.0
    %1517 = vmatprep.subr.mxu0 0.0
    %1518 = vmatpush1.msra.mxu0 0.0
    %1519 = vmatprep.subr.mxu0 0.0
    %1520 = vmatpush1.msra.mxu0 0.0
    %1521 = vmatprep.subr.mxu0 0.0
    %1522 = vmatpush1.msra.mxu0 0.0
    %1523 = vmatprep.subr.mxu0 0.0
    %1524 = vmatpush1.msra.mxu0 0.0
    %1525 = vmatprep.subr.mxu0 0.0
    %1526 = vmatpush1.msra.mxu0 0.0
    %1527 = vmatprep.subr.mxu0 0.0
    %1528 = vmatpush1.msra.mxu0 0.0
    %1529 = vmatprep.subr.mxu0 0.0
    %1530 = vmatpush1.msra.mxu0 0.0
    %1531 = vmatprep.mubr.f32.mxu0 0.0
    %1532 = vmatmul.mubr.f32.gmra.mrb[0].mxu0 %v1465
    %v1533 = vpop.f32.mrb[0].mxu0
    %v1534 = vadd.f32 0.0, %v1533
    %v1535 = vpop.f32.mrb[0].mxu0
    %1536 = vdwg.mxu0
    %v1538 = vrot.slane %v1534, 2
    %v1540 = vadd.f32 %v1145, %v1538
    %v1541 = vxor.u32 %v1540, 2147483648
    %v1542 = vmul.f32 %v1541, 1.442695
    %v1543 = vpow.pop %v1542
    %v1544 = vadd.f32 %v1543, 1.0
    %v1545 = vrcp.pop %v1544
    %v1546 = vmul.f32 1.0, %v1545
    %v1547 = vtanh.pop %v1540
    %v1549 = vrot.slane %v1454, 6
    %v1551 = vmul.f32 %v1546, %v1549
    %1553 = vrot.lane.b32.xlu0 %v1547, 32
    %v1554 = vpop.permute.xlu0 %1553
    %v1556 = vmul.f32 %v1546, %v1554
    %1558 = vrot.lane.b32.xlu0 %v1556, 32
    %v1559 = vpop.permute.xlu0 %1558
    %v1561 = vadd.f32 %v1551, %v1559
    %v1562 = vtanh.pop %v1561
    %1564 = vrot.lane.b32.xlu0 %v1562, 32
    %v1565 = vpop.permute.xlu0 %1564
    %v1567 = vmul.f32 %v1546, %v1565
    %v1569 = vrot.slane %v1567, 6
    %1570 = vrot.lane.b32.xlu0 %v1569, 64
    %v1571 = vpop.permute.xlu0 %1570
    %v1572 = vsel %vm201, %v1571, 0
    %1574 = vmatprep.subr.mxu0 0.0
    %1575 = vmatpush1.msra.mxu0 %v1057
    %1576 = vmatprep.subr.mxu0 0.0
    %1577 = vmatpush1.msra.mxu0 %v1058
    %1578 = vmatprep.subr.mxu0 0.0
    %1579 = vmatpush1.msra.mxu0 %v1059
    %1580 = vmatprep.subr.mxu0 0.0
    %1581 = vmatpush1.msra.mxu0 %v1060
    %1582 = vmatprep.subr.mxu0 0.0
    %1583 = vmatpush1.msra.mxu0 0.0
    %1584 = vmatprep.subr.mxu0 0.0
    %1585 = vmatpush1.msra.mxu0 0.0
    %1586 = vmatprep.subr.mxu0 0.0
    %1587 = vmatpush1.msra.mxu0 0.0
    %1588 = vmatprep.subr.mxu0 0.0
    %1589 = vmatpush1.msra.mxu0 0.0
    %1590 = vmatprep.subr.mxu0 0.0
    %1591 = vmatpush1.msra.mxu0 0.0
    %1592 = vmatprep.subr.mxu0 0.0
    %1593 = vmatpush1.msra.mxu0 0.0
    %1594 = vmatprep.subr.mxu0 0.0
    %1595 = vmatpush1.msra.mxu0 0.0
    %1596 = vmatprep.subr.mxu0 0.0
    %1597 = vmatpush1.msra.mxu0 0.0
    %1598 = vmatprep.subr.mxu0 0.0
    %1599 = vmatpush1.msra.mxu0 0.0
    %1600 = vmatprep.subr.mxu0 0.0
    %1601 = vmatpush1.msra.mxu0 0.0
    %1602 = vmatprep.subr.mxu0 0.0
    %1603 = vmatpush1.msra.mxu0 0.0
    %1604 = vmatprep.subr.mxu0 0.0
    %1605 = vmatpush1.msra.mxu0 0.0
    %1606 = vmatprep.subr.mxu0 0.0
    %1607 = vmatpush1.msra.mxu0 0.0
    %1608 = vmatprep.subr.mxu0 0.0
    %1609 = vmatpush1.msra.mxu0 0.0
    %1610 = vmatprep.subr.mxu0 0.0
    %1611 = vmatpush1.msra.mxu0 0.0
    %1612 = vmatprep.subr.mxu0 0.0
    %1613 = vmatpush1.msra.mxu0 0.0
    %1614 = vmatprep.subr.mxu0 0.0
    %1615 = vmatpush1.msra.mxu0 0.0
    %1616 = vmatprep.subr.mxu0 0.0
    %1617 = vmatpush1.msra.mxu0 0.0
    %1618 = vmatprep.subr.mxu0 0.0
    %1619 = vmatpush1.msra.mxu0 0.0
    %1620 = vmatprep.subr.mxu0 0.0
    %1621 = vmatpush1.msra.mxu0 0.0
    %1622 = vmatprep.subr.mxu0 0.0
    %1623 = vmatpush1.msra.mxu0 0.0
    %1624 = vmatprep.subr.mxu0 0.0
    %1625 = vmatpush1.msra.mxu0 0.0
    %1626 = vmatprep.subr.mxu0 0.0
    %1627 = vmatpush1.msra.mxu0 0.0
    %1628 = vmatprep.subr.mxu0 0.0
    %1629 = vmatpush1.msra.mxu0 0.0
    %1630 = vmatprep.subr.mxu0 0.0
    %1631 = vmatpush1.msra.mxu0 0.0
    %1632 = vmatprep.subr.mxu0 0.0
    %1633 = vmatpush1.msra.mxu0 0.0
    %1634 = vmatprep.subr.mxu0 0.0
    %1635 = vmatpush1.msra.mxu0 0.0
    %1636 = vmatprep.subr.mxu0 0.0
    %1637 = vmatpush1.msra.mxu0 0.0
    %1638 = vmatprep.mubr.f32.mxu0 0.0
    %1639 = vmatmul.mubr.f32.gmra.mrb[0].mxu0 %v1572
    %v1640 = vpop.f32.mrb[0].mxu0
    %v1641 = vadd.f32 0.0, %v1640
    %v1642 = vpop.f32.mrb[0].mxu0
    %1643 = vdwg.mxu0
    %v1644 = vadd.f32 %v1150, %v1641
    %v1645 = vxor.u32 %v1644, 2147483648
    %v1646 = vmul.f32 %v1645, 1.442695
    %v1647 = vpow.pop %v1646
    %v1648 = vadd.f32 %v1647, 1.0
    %v1649 = vrcp.pop %v1648
    %v1650 = vmul.f32 1.0, %v1649
    %v1651 = vtanh.pop %v1644
    %v1653 = vrot.slane %v1561, 6
    %v1655 = vmul.f32 %v1650, %v1653
    %1657 = vrot.lane.b32.xlu0 %v1651, 32
    %v1658 = vpop.permute.xlu0 %1657
    %v1660 = vmul.f32 %v1650, %v1658
    %1662 = vrot.lane.b32.xlu0 %v1660, 32
    %v1663 = vpop.permute.xlu0 %1662
    %v1665 = vadd.f32 %v1655, %v1663
    %v1666 = vtanh.pop %v1665
    %1668 = vrot.lane.b32.xlu0 %v1666, 32
    %v1669 = vpop.permute.xlu0 %1668
    %v1671 = vmul.f32 %v1650, %v1669
    %1673 = vrot.lane.b32.xlu0 %v1671, 64
    %v1674 = vpop.permute.xlu0 %1673
    %v1675 = vsel %vm201, %v1674, 0
    %1677 = vmatprep.subr.mxu0 0.0
    %1678 = vmatpush1.msra.mxu0 %v1057
    %1679 = vmatprep.subr.mxu0 0.0
    %1680 = vmatpush1.msra.mxu0 %v1058
    %1681 = vmatprep.subr.mxu0 0.0
    %1682 = vmatpush1.msra.mxu0 %v1059
    %1683 = vmatprep.subr.mxu0 0.0
    %1684 = vmatpush1.msra.mxu0 %v1060
    %1685 = vmatprep.subr.mxu0 0.0
    %1686 = vmatpush1.msra.mxu0 0.0
    %1687 = vmatprep.subr.mxu0 0.0
    %1688 = vmatpush1.msra.mxu0 0.0
    %1689 = vmatprep.subr.mxu0 0.0
    %1690 = vmatpush1.msra.mxu0 0.0
    %1691 = vmatprep.subr.mxu0 0.0
    %1692 = vmatpush1.msra.mxu0 0.0
    %1693 = vmatprep.subr.mxu0 0.0
    %1694 = vmatpush1.msra.mxu0 0.0
    %1695 = vmatprep.subr.mxu0 0.0
    %1696 = vmatpush1.msra.mxu0 0.0
    %1697 = vmatprep.subr.mxu0 0.0
    %1698 = vmatpush1.msra.mxu0 0.0
    %1699 = vmatprep.subr.mxu0 0.0
    %1700 = vmatpush1.msra.mxu0 0.0
    %1701 = vmatprep.subr.mxu0 0.0
    %1702 = vmatpush1.msra.mxu0 0.0
    %1703 = vmatprep.subr.mxu0 0.0
    %1704 = vmatpush1.msra.mxu0 0.0
    %1705 = vmatprep.subr.mxu0 0.0
    %1706 = vmatpush1.msra.mxu0 0.0
    %1707 = vmatprep.subr.mxu0 0.0
    %1708 = vmatpush1.msra.mxu0 0.0
    %1709 = vmatprep.subr.mxu0 0.0
    %1710 = vmatpush1.msra.mxu0 0.0
    %1711 = vmatprep.subr.mxu0 0.0
    %1712 = vmatpush1.msra.mxu0 0.0
    %1713 = vmatprep.subr.mxu0 0.0
    %1714 = vmatpush1.msra.mxu0 0.0
    %1715 = vmatprep.subr.mxu0 0.0
    %1716 = vmatpush1.msra.mxu0 0.0
    %1717 = vmatprep.subr.mxu0 0.0
    %1718 = vmatpush1.msra.mxu0 0.0
    %1719 = vmatprep.subr.mxu0 0.0
    %1720 = vmatpush1.msra.mxu0 0.0
    %1721 = vmatprep.subr.mxu0 0.0
    %1722 = vmatpush1.msra.mxu0 0.0
    %1723 = vmatprep.subr.mxu0 0.0
    %1724 = vmatpush1.msra.mxu0 0.0
    %1725 = vmatprep.subr.mxu0 0.0
    %1726 = vmatpush1.msra.mxu0 0.0
    %1727 = vmatprep.subr.mxu0 0.0
    %1728 = vmatpush1.msra.mxu0 0.0
    %1729 = vmatprep.subr.mxu0 0.0
    %1730 = vmatpush1.msra.mxu0 0.0
    %1731 = vmatprep.subr.mxu0 0.0
    %1732 = vmatpush1.msra.mxu0 0.0
    %1733 = vmatprep.subr.mxu0 0.0
    %1734 = vmatpush1.msra.mxu0 0.0
    %1735 = vmatprep.subr.mxu0 0.0
    %1736 = vmatpush1.msra.mxu0 0.0
    %1737 = vmatprep.subr.mxu0 0.0
    %1738 = vmatpush1.msra.mxu0 0.0
    %1739 = vmatprep.subr.mxu0 0.0
    %1740 = vmatpush1.msra.mxu0 0.0
    %1741 = vmatprep.mubr.f32.mxu0 0.0
    %1742 = vmatmul.mubr.f32.gmra.mrb[0].mxu0 %v1675
    %v1743 = vpop.f32.mrb[0].mxu0
    %v1744 = vadd.f32 0.0, %v1743
    %v1745 = vpop.f32.mrb[0].mxu0
    %1746 = vdwg.mxu0
    %v1748 = vrot.slane %v1744, 6
    %v1750 = vadd.f32 %v1150, %v1748
    %v1751 = vxor.u32 %v1750, 2147483648
    %v1752 = vmul.f32 %v1751, 1.442695
    %v1753 = vpow.pop %v1752
    %v1754 = vadd.f32 %v1753, 1.0
    %v1755 = vrcp.pop %v1754
    %v1756 = vmul.f32 1.0, %v1755
    %v1757 = vtanh.pop %v1750
    %v1759 = vrot.slane %v1665, 6
    %v1761 = vmul.f32 %v1756, %v1759
    %1763 = vrot.lane.b32.xlu0 %v1757, 32
    %v1764 = vpop.permute.xlu0 %1763
    %v1766 = vmul.f32 %v1756, %v1764
    %1768 = vrot.lane.b32.xlu0 %v1766, 32
    %v1769 = vpop.permute.xlu0 %1768
    %v1771 = vadd.f32 %v1761, %v1769
    %v1772 = vtanh.pop %v1771
    %1774 = vrot.lane.b32.xlu0 %v1772, 32
    %v1775 = vpop.permute.xlu0 %1774
    %v1777 = vmul.f32 %v1756, %v1775
    %v1779 = vrot.slane %v1777, 2
    %1780 = vrot.lane.b32.xlu0 %v1779, 64
    %v1781 = vpop.permute.xlu0 %1780
    %v1782 = vsel %vm201, %v1781, 0
    %1784 = vmatprep.subr.mxu0 0.0
    %1785 = vmatpush1.msra.mxu0 %v1057
    %1786 = vmatprep.subr.mxu0 0.0
    %1787 = vmatpush1.msra.mxu0 %v1058
    %1788 = vmatprep.subr.mxu0 0.0
    %1789 = vmatpush1.msra.mxu0 %v1059
    %1790 = vmatprep.subr.mxu0 0.0
    %1791 = vmatpush1.msra.mxu0 %v1060
    %1792 = vmatprep.subr.mxu0 0.0
    %1793 = vmatpush1.msra.mxu0 0.0
    %1794 = vmatprep.subr.mxu0 0.0
    %1795 = vmatpush1.msra.mxu0 0.0
    %1796 = vmatprep.subr.mxu0 0.0
    %1797 = vmatpush1.msra.mxu0 0.0
    %1798 = vmatprep.subr.mxu0 0.0
    %1799 = vmatpush1.msra.mxu0 0.0
    %1800 = vmatprep.subr.mxu0 0.0
    %1801 = vmatpush1.msra.mxu0 0.0
    %1802 = vmatprep.subr.mxu0 0.0
    %1803 = vmatpush1.msra.mxu0 0.0
    %1804 = vmatprep.subr.mxu0 0.0
    %1805 = vmatpush1.msra.mxu0 0.0
    %1806 = vmatprep.subr.mxu0 0.0
    %1807 = vmatpush1.msra.mxu0 0.0
    %1808 = vmatprep.subr.mxu0 0.0
    %1809 = vmatpush1.msra.mxu0 0.0
    %1810 = vmatprep.subr.mxu0 0.0
    %1811 = vmatpush1.msra.mxu0 0.0
    %1812 = vmatprep.subr.mxu0 0.0
    %1813 = vmatpush1.msra.mxu0 0.0
    %1814 = vmatprep.subr.mxu0 0.0
    %1815 = vmatpush1.msra.mxu0 0.0
    %1816 = vmatprep.subr.mxu0 0.0
    %1817 = vmatpush1.msra.mxu0 0.0
    %1818 = vmatprep.subr.mxu0 0.0
    %1819 = vmatpush1.msra.mxu0 0.0
    %1820 = vmatprep.subr.mxu0 0.0
    %1821 = vmatpush1.msra.mxu0 0.0
    %1822 = vmatprep.subr.mxu0 0.0
    %1823 = vmatpush1.msra.mxu0 0.0
    %1824 = vmatprep.subr.mxu0 0.0
    %1825 = vmatpush1.msra.mxu0 0.0
    %1826 = vmatprep.subr.mxu0 0.0
    %1827 = vmatpush1.msra.mxu0 0.0
    %1828 = vmatprep.subr.mxu0 0.0
    %1829 = vmatpush1.msra.mxu0 0.0
    %1830 = vmatprep.subr.mxu0 0.0
    %1831 = vmatpush1.msra.mxu0 0.0
    %1832 = vmatprep.subr.mxu0 0.0
    %1833 = vmatpush1.msra.mxu0 0.0
    %1834 = vmatprep.subr.mxu0 0.0
    %1835 = vmatpush1.msra.mxu0 0.0
    %1836 = vmatprep.subr.mxu0 0.0
    %1837 = vmatpush1.msra.mxu0 0.0
    %1838 = vmatprep.subr.mxu0 0.0
    %1839 = vmatpush1.msra.mxu0 0.0
    %1840 = vmatprep.subr.mxu0 0.0
    %1841 = vmatpush1.msra.mxu0 0.0
    %1842 = vmatprep.subr.mxu0 0.0
    %1843 = vmatpush1.msra.mxu0 0.0
    %1844 = vmatprep.subr.mxu0 0.0
    %1845 = vmatpush1.msra.mxu0 0.0
    %1846 = vmatprep.subr.mxu0 0.0
    %1847 = vmatpush1.msra.mxu0 0.0
    %1848 = vmatprep.mubr.f32.mxu0 0.0
    %1849 = vmatmul.mubr.f32.gmra.mrb[0].mxu0 %v1782
    %v1850 = vpop.f32.mrb[0].mxu0
    %v1851 = vadd.f32 0.0, %v1850
    %v1852 = vpop.f32.mrb[0].mxu0
    %1853 = vdwg.mxu0
    %v1855 = vrot.slane %v1851, 4
    %v1857 = vadd.f32 %v1150, %v1855
    %v1858 = vxor.u32 %v1857, 2147483648
    %v1859 = vmul.f32 %v1858, 1.442695
    %v1860 = vpow.pop %v1859
    %v1861 = vadd.f32 %v1860, 1.0
    %v1862 = vrcp.pop %v1861
    %v1863 = vmul.f32 1.0, %v1862
    %v1864 = vtanh.pop %v1857
    %v1866 = vrot.slane %v1771, 6
    %v1868 = vmul.f32 %v1863, %v1866
    %1870 = vrot.lane.b32.xlu0 %v1864, 32
    %v1871 = vpop.permute.xlu0 %1870
    %v1873 = vmul.f32 %v1863, %v1871
    %1875 = vrot.lane.b32.xlu0 %v1873, 32
    %v1876 = vpop.permute.xlu0 %1875
    %v1878 = vadd.f32 %v1868, %v1876
    %v1879 = vtanh.pop %v1878
    %1881 = vrot.lane.b32.xlu0 %v1879, 32
    %v1882 = vpop.permute.xlu0 %1881
    %v1884 = vmul.f32 %v1863, %v1882
    %v1886 = vrot.slane %v1884, 4
    %1887 = vrot.lane.b32.xlu0 %v1886, 64
    %v1888 = vpop.permute.xlu0 %1887
    %v1889 = vsel %vm201, %v1888, 0
    %1891 = vmatprep.subr.mxu0 0.0
    %1892 = vmatpush1.msra.mxu0 %v1057
    %1893 = vmatprep.subr.mxu0 0.0
    %1894 = vmatpush1.msra.mxu0 %v1058
    %1895 = vmatprep.subr.mxu0 0.0
    %1896 = vmatpush1.msra.mxu0 %v1059
    %1897 = vmatprep.subr.mxu0 0.0
    %1898 = vmatpush1.msra.mxu0 %v1060
    %1899 = vmatprep.subr.mxu0 0.0
    %1900 = vmatpush1.msra.mxu0 0.0
    %1901 = vmatprep.subr.mxu0 0.0
    %1902 = vmatpush1.msra.mxu0 0.0
    %1903 = vmatprep.subr.mxu0 0.0
    %1904 = vmatpush1.msra.mxu0 0.0
    %1905 = vmatprep.subr.mxu0 0.0
    %1906 = vmatpush1.msra.mxu0 0.0
    %1907 = vmatprep.subr.mxu0 0.0
    %1908 = vmatpush1.msra.mxu0 0.0
    %1909 = vmatprep.subr.mxu0 0.0
    %1910 = vmatpush1.msra.mxu0 0.0
    %1911 = vmatprep.subr.mxu0 0.0
    %1912 = vmatpush1.msra.mxu0 0.0
    %1913 = vmatprep.subr.mxu0 0.0
    %1914 = vmatpush1.msra.mxu0 0.0
    %1915 = vmatprep.subr.mxu0 0.0
    %1916 = vmatpush1.msra.mxu0 0.0
    %1917 = vmatprep.subr.mxu0 0.0
    %1918 = vmatpush1.msra.mxu0 0.0
    %1919 = vmatprep.subr.mxu0 0.0
    %1920 = vmatpush1.msra.mxu0 0.0
    %1921 = vmatprep.subr.mxu0 0.0
    %1922 = vmatpush1.msra.mxu0 0.0
    %1923 = vmatprep.subr.mxu0 0.0
    %1924 = vmatpush1.msra.mxu0 0.0
    %1925 = vmatprep.subr.mxu0 0.0
    %1926 = vmatpush1.msra.mxu0 0.0
    %1927 = vmatprep.subr.mxu0 0.0
    %1928 = vmatpush1.msra.mxu0 0.0
    %1929 = vmatprep.subr.mxu0 0.0
    %1930 = vmatpush1.msra.mxu0 0.0
    %1931 = vmatprep.subr.mxu0 0.0
    %1932 = vmatpush1.msra.mxu0 0.0
    %1933 = vmatprep.subr.mxu0 0.0
    %1934 = vmatpush1.msra.mxu0 0.0
    %1935 = vmatprep.subr.mxu0 0.0
    %1936 = vmatpush1.msra.mxu0 0.0
    %1937 = vmatprep.subr.mxu0 0.0
    %1938 = vmatpush1.msra.mxu0 0.0
    %1939 = vmatprep.subr.mxu0 0.0
    %1940 = vmatpush1.msra.mxu0 0.0
    %1941 = vmatprep.subr.mxu0 0.0
    %1942 = vmatpush1.msra.mxu0 0.0
    %1943 = vmatprep.subr.mxu0 0.0
    %1944 = vmatpush1.msra.mxu0 0.0
    %1945 = vmatprep.subr.mxu0 0.0
    %1946 = vmatpush1.msra.mxu0 0.0
    %1947 = vmatprep.subr.mxu0 0.0
    %1948 = vmatpush1.msra.mxu0 0.0
    %1949 = vmatprep.subr.mxu0 0.0
    %1950 = vmatpush1.msra.mxu0 0.0
    %1951 = vmatprep.subr.mxu0 0.0
    %1952 = vmatpush1.msra.mxu0 0.0
    %1953 = vmatprep.subr.mxu0 0.0
    %1954 = vmatpush1.msra.mxu0 0.0
    %1955 = vmatprep.mubr.f32.mxu0 0.0
    %1956 = vmatmul.mubr.f32.gmra.mrb[0].mxu0 %v1889
    %v1957 = vpop.f32.mrb[0].mxu0
    %v1958 = vadd.f32 0.0, %v1957
    %v1959 = vpop.f32.mrb[0].mxu0
    %1960 = vdwg.mxu0
    %v1962 = vrot.slane %v1958, 2
    %v1964 = vadd.f32 %v1150, %v1962
    %v1965 = vxor.u32 %v1964, 2147483648
    %v1966 = vmul.f32 %v1965, 1.442695
    %v1967 = vpow.pop %v1966
    %v1968 = vadd.f32 %v1967, 1.0
    %v1969 = vrcp.pop %v1968
    %v1970 = vmul.f32 1.0, %v1969
    %v1971 = vtanh.pop %v1964
    %v1973 = vrot.slane %v1878, 6
    %v1975 = vmul.f32 %v1970, %v1973
    %1977 = vrot.lane.b32.xlu0 %v1971, 32
    %v1978 = vpop.permute.xlu0 %1977
    %v1980 = vmul.f32 %v1970, %v1978
    %1982 = vrot.lane.b32.xlu0 %v1980, 32
    %v1983 = vpop.permute.xlu0 %1982
    %v1985 = vadd.f32 %v1975, %v1983
    %v1986 = vtanh.pop %v1985
    %1988 = vrot.lane.b32.xlu0 %v1986, 32
    %v1989 = vpop.permute.xlu0 %1988
    %v1991 = vmul.f32 %v1970, %v1989
    %v1992 = vld [vmem:[%s7] sm:$0xff]
    %v1993 = vld [vmem:[%s7 + $0x8] sm:$0xff]
    %v1994 = vld [vmem:[%s7 + $0x10] sm:$0xff]
    %v1995 = vld [vmem:[%s7 + $0x18] sm:$0xff]
    %v1996 = vld [vmem:[#allocation9] sm:$0x1]
    %v1997 = vld [vmem:[%s9] sm:$0xff]
    %v1998 = vld [vmem:[%s9 + $0x8] sm:$0xff]
    %v1999 = vld [vmem:[%s9 + $0x10] sm:$0xff]
    %v2000 = vld [vmem:[%s9 + $0x18] sm:$0xff]
    %v2001 = vld [vmem:[%s10] sm:$0x1]
    %v2002 = vrot.slane %v1353, 1
    %v2004 = vrot.slane %v1460, 2
    %v2006 = vrot.slane %v1567, 3
    %v2008 = vrot.slane %v1671, 4
    %v2010 = vrot.slane %v1777, 5
    %v2012 = vrot.slane %v1884, 6
    %v2015 = vrot.slane %v1991, 7
    %vm2017 = vcmask 1040384
    %v2018 = vsel %vm2017, %v1247, %v2002
    %v2019 = vsel %vm1044, %v2018, %v2004
    %vm2020 = vcmask 1042432
    %v2021 = vsel %vm2020, %v2019, %v2006
    %v2022 = vsel %vm1046, %v2021, %v2008
    %vm2023 = vcmask 1044480
    %v2024 = vsel %vm2023, %v2022, %v2010
    %v2025 = vsel %vm1048, %v2024, %v2012
    %vm2026 = vcmask 1046528
    %v2027 = vsel %vm2026, %v2025, %v2015
    %v2029 = vlaneseq
    %v2030 = vshrl.u32 %v2029, 7
    %v2031 = vsub.s32 0, %v2030
    %v2032 = vrot.slane %v1996, %v2031
    %2035 = vrot.lane.b32.xlu0 %v2027, 64
    %v2036 = vpop.permute.xlu0 %2035
    %v2037 = vsel %vm201, %v2036, 0
    %2039 = vmatprep.subr.mxu0 0.0
    %2040 = vmatpush1.msra.mxu0 %v1992
    %2041 = vmatprep.subr.mxu0 0.0
    %2042 = vmatpush1.msra.mxu0 %v1993
    %2043 = vmatprep.subr.mxu0 0.0
    %2044 = vmatpush1.msra.mxu0 %v1994
    %2045 = vmatprep.subr.mxu0 0.0
    %2046 = vmatpush1.msra.mxu0 %v1995
    %2047 = vmatprep.subr.mxu0 0.0
    %2048 = vmatpush1.msra.mxu0 0.0
    %2049 = vmatprep.subr.mxu0 0.0
    %2050 = vmatpush1.msra.mxu0 0.0
    %2051 = vmatprep.subr.mxu0 0.0
    %2052 = vmatpush1.msra.mxu0 0.0
    %2053 = vmatprep.subr.mxu0 0.0
    %2054 = vmatpush1.msra.mxu0 0.0
    %2055 = vmatprep.subr.mxu0 0.0
    %2056 = vmatpush1.msra.mxu0 0.0
    %2057 = vmatprep.subr.mxu0 0.0
    %2058 = vmatpush1.msra.mxu0 0.0
    %2059 = vmatprep.subr.mxu0 0.0
    %2060 = vmatpush1.msra.mxu0 0.0
    %2061 = vmatprep.subr.mxu0 0.0
    %2062 = vmatpush1.msra.mxu0 0.0
    %2063 = vmatprep.subr.mxu0 0.0
    %2064 = vmatpush1.msra.mxu0 0.0
    %2065 = vmatprep.subr.mxu0 0.0
    %2066 = vmatpush1.msra.mxu0 0.0
    %2067 = vmatprep.subr.mxu0 0.0
    %2068 = vmatpush1.msra.mxu0 0.0
    %2069 = vmatprep.subr.mxu0 0.0
    %2070 = vmatpush1.msra.mxu0 0.0
    %2071 = vmatprep.subr.mxu0 0.0
    %2072 = vmatpush1.msra.mxu0 0.0
    %2073 = vmatprep.subr.mxu0 0.0
    %2074 = vmatpush1.msra.mxu0 0.0
    %2075 = vmatprep.subr.mxu0 0.0
    %2076 = vmatpush1.msra.mxu0 0.0
    %2077 = vmatprep.subr.mxu0 0.0
    %2078 = vmatpush1.msra.mxu0 0.0
    %2079 = vmatprep.subr.mxu0 0.0
    %2080 = vmatpush1.msra.mxu0 0.0
    %2081 = vmatprep.subr.mxu0 0.0
    %2082 = vmatpush1.msra.mxu0 0.0
    %2083 = vmatprep.subr.mxu0 0.0
    %2084 = vmatpush1.msra.mxu0 0.0
    %2085 = vmatprep.subr.mxu0 0.0
    %2086 = vmatpush1.msra.mxu0 0.0
    %2087 = vmatprep.subr.mxu0 0.0
    %2088 = vmatpush1.msra.mxu0 0.0
    %2089 = vmatprep.subr.mxu0 0.0
    %2090 = vmatpush1.msra.mxu0 0.0
    %2091 = vmatprep.subr.mxu0 0.0
    %2092 = vmatpush1.msra.mxu0 0.0
    %2093 = vmatprep.subr.mxu0 0.0
    %2094 = vmatpush1.msra.mxu0 0.0
    %2095 = vmatprep.subr.mxu0 0.0
    %2096 = vmatpush1.msra.mxu0 0.0
    %2097 = vmatprep.subr.mxu0 0.0
    %2098 = vmatpush1.msra.mxu0 0.0
    %2099 = vmatprep.subr.mxu0 0.0
    %2100 = vmatpush1.msra.mxu0 0.0
    %2101 = vmatprep.subr.mxu0 0.0
    %2102 = vmatpush1.msra.mxu0 0.0
    %2103 = vmatprep.mubr.f32.mxu0 0.0
    %2104 = vmatmul.mubr.f32.gmra.mrb[0].mxu0 %v2037
    %v2105 = vpop.f32.mrb[0].mxu0
    %v2106 = vadd.f32 %v2032, %v2105
    %v2107 = vpop.f32.mrb[0].mxu0
    %2108 = vdwg.mxu0
    %2110 = vrot.lane.b32.xlu0 %v2106, 96
    %v2111 = vpop.permute.xlu0 %2110
    %v2112 = vsel %vm201, %v2106, 0
    %v2114 = vsel %vm201, %v2111, 0
    %2116 = vmatprep.subr.mxu0 0.0
    %2117 = vmatpush1.xpose.msra.mxu0 %v2114
    %2118 = vmatprep.subr.mxu0 0.0
    %2119 = vmatpush1.xpose.msra.mxu0 0.0
    %2120 = vmatprep.subr.mxu0 0.0
    %2121 = vmatpush1.xpose.msra.mxu0 0.0
    %2122 = vmatprep.subr.mxu0 0.0
    %2123 = vmatpush1.xpose.msra.mxu0 0.0
    %2124 = vmatprep.subr.mxu0 0.0
    %2125 = vmatpush1.xpose.msra.mxu0 0.0
    %2126 = vmatprep.subr.mxu0 0.0
    %2127 = vmatpush1.xpose.msra.mxu0 0.0
    %2128 = vmatprep.subr.mxu0 0.0
    %2129 = vmatpush1.xpose.msra.mxu0 0.0
    %2130 = vmatprep.subr.mxu0 0.0
    %2131 = vmatpush1.xpose.msra.mxu0 0.0
    %2132 = vmatprep.subr.mxu0 0.0
    %2133 = vmatpush1.xpose.msra.mxu0 0.0
    %2134 = vmatprep.subr.mxu0 0.0
    %2135 = vmatpush1.xpose.msra.mxu0 0.0
    %2136 = vmatprep.subr.mxu0 0.0
    %2137 = vmatpush1.xpose.msra.mxu0 0.0
    %2138 = vmatprep.subr.mxu0 0.0
    %2139 = vmatpush1.xpose.msra.mxu0 0.0
    %2140 = vmatprep.subr.mxu0 0.0
    %2141 = vmatpush1.xpose.msra.mxu0 0.0
    %2142 = vmatprep.subr.mxu0 0.0
    %2143 = vmatpush1.xpose.msra.mxu0 0.0
    %2144 = vmatprep.subr.mxu0 0.0
    %2145 = vmatpush1.xpose.msra.mxu0 0.0
    %2146 = vmatprep.subr.mxu0 0.0
    %2147 = vmatpush1.xpose.msra.mxu0 0.0
    %2148 = vmatprep.subr.mxu0 0.0
    %2149 = vmatpush1.xpose.msra.mxu0 0.0
    %2150 = vmatprep.subr.mxu0 0.0
    %2151 = vmatpush1.xpose.msra.mxu0 0.0
    %2152 = vmatprep.subr.mxu0 0.0
    %2153 = vmatpush1.xpose.msra.mxu0 0.0
    %2154 = vmatprep.subr.mxu0 0.0
    %2155 = vmatpush1.xpose.msra.mxu0 0.0
    %2156 = vmatprep.subr.mxu0 0.0
    %2157 = vmatpush1.xpose.msra.mxu0 0.0
    %2158 = vmatprep.subr.mxu0 0.0
    %2159 = vmatpush1.xpose.msra.mxu0 0.0
    %2160 = vmatprep.subr.mxu0 0.0
    %2161 = vmatpush1.xpose.msra.mxu0 0.0
    %2162 = vmatprep.subr.mxu0 0.0
    %2163 = vmatpush1.xpose.msra.mxu0 0.0
    %2164 = vmatprep.subr.mxu0 0.0
    %2165 = vmatpush1.xpose.msra.mxu0 0.0
    %2166 = vmatprep.subr.mxu0 0.0
    %2167 = vmatpush1.xpose.msra.mxu0 0.0
    %2168 = vmatprep.subr.mxu0 0.0
    %2169 = vmatpush1.xpose.msra.mxu0 0.0
    %2170 = vmatprep.subr.mxu0 0.0
    %2171 = vmatpush1.xpose.msra.mxu0 0.0
    %2172 = vmatprep.subr.mxu0 0.0
    %2173 = vmatpush1.xpose.msra.mxu0 0.0
    %2174 = vmatprep.subr.mxu0 0.0
    %2175 = vmatpush1.xpose.msra.mxu0 0.0
    %2176 = vmatprep.subr.mxu0 0.0
    %2177 = vmatpush1.xpose.msra.mxu0 0.0
    %2178 = vmatprep.subr.mxu0 0.0
    %2179 = vmatpush1.xpose.msra.mxu0 0.0
    %2180 = vmatprep.mubr.f32.mxu0 0.0
    %2181 = vmatmul.mubr.f32.gmra.mrb[0].mxu0 %v2112
    %v2182 = vpop.f32.mrb[0].mxu0
    %v2183 = vadd.f32 0.0, %v2182
    %v2184 = vpop.f32.mrb[0].mxu0
    %2185 = vdwg.mxu0
    %v2186 = vmul.f32 %v2183, 0.17677669
    %vm2187 = vcmask 64512
    %v2188 = vsel %vm2187, %v2186, -inf
    %2189 = vmax.xlane.f32.xlu0 %v2188
    %v2190 = vpop.xlane.xlu0 %2189
    %v2191 = vsub.f32 %v2186, %v2190
    %v2192 = vmul.f32 %v2191, 1.442695
    %v2193 = vpow.pop %v2192
    %v2194 = vsel %vm2187, %v2193, 0.0
    %2195 = vadd.xlane.f32.xlu0 %v2194
    %v2196 = vpop.xlane.xlu0 %2195
    %v2197 = vrcp.pop %v2196
    %v2198 = vmul.f32 %v2193, %v2197
    %2199 = vrot.lane.b32.xlu0 %v2106, 64
    %v2200 = vpop.permute.xlu0 %2199
    %v2203 = vsel %vm2187, %v2198, 0
    %2205 = vmatprep.subr.mxu0 0.0
    %2206 = vmatpush1.msra.mxu0 %v2200
    %2207 = vmatprep.subr.mxu0 0.0
    %2208 = vmatpush1.msra.mxu0 0.0
    %2209 = vmatprep.subr.mxu0 0.0
    %2210 = vmatpush1.msra.mxu0 0.0
    %2211 = vmatprep.subr.mxu0 0.0
    %2212 = vmatpush1.msra.mxu0 0.0
    %2213 = vmatprep.subr.mxu0 0.0
    %2214 = vmatpush1.msra.mxu0 0.0
    %2215 = vmatprep.subr.mxu0 0.0
    %2216 = vmatpush1.msra.mxu0 0.0
    %2217 = vmatprep.subr.mxu0 0.0
    %2218 = vmatpush1.msra.mxu0 0.0
    %2219 = vmatprep.subr.mxu0 0.0
    %2220 = vmatpush1.msra.mxu0 0.0
    %2221 = vmatprep.subr.mxu0 0.0
    %2222 = vmatpush1.msra.mxu0 0.0
    %2223 = vmatprep.subr.mxu0 0.0
    %2224 = vmatpush1.msra.mxu0 0.0
    %2225 = vmatprep.subr.mxu0 0.0
    %2226 = vmatpush1.msra.mxu0 0.0
    %2227 = vmatprep.subr.mxu0 0.0
    %2228 = vmatpush1.msra.mxu0 0.0
    %2229 = vmatprep.subr.mxu0 0.0
    %2230 = vmatpush1.msra.mxu0 0.0
    %2231 = vmatprep.subr.mxu0 0.0
    %2232 = vmatpush1.msra.mxu0 0.0
    %2233 = vmatprep.subr.mxu0 0.0
    %2234 = vmatpush1.msra.mxu0 0.0
    %2235 = vmatprep.subr.mxu0 0.0
    %2236 = vmatpush1.msra.mxu0 0.0
    %2237 = vmatprep.subr.mxu0 0.0
    %2238 = vmatpush1.msra.mxu0 0.0
    %2239 = vmatprep.subr.mxu0 0.0
    %2240 = vmatpush1.msra.mxu0 0.0
    %2241 = vmatprep.subr.mxu0 0.0
    %2242 = vmatpush1.msra.mxu0 0.0
    %2243 = vmatprep.subr.mxu0 0.0
    %2244 = vmatpush1.msra.mxu0 0.0
    %2245 = vmatprep.subr.mxu0 0.0
    %2246 = vmatpush1.msra.mxu0 0.0
    %2247 = vmatprep.subr.mxu0 0.0
    %2248 = vmatpush1.msra.mxu0 0.0
    %2249 = vmatprep.subr.mxu0 0.0
    %2250 = vmatpush1.msra.mxu0 0.0
    %2251 = vmatprep.subr.mxu0 0.0
    %2252 = vmatpush1.msra.mxu0 0.0
    %2253 = vmatprep.subr.mxu0 0.0
    %2254 = vmatpush1.msra.mxu0 0.0
    %2255 = vmatprep.subr.mxu0 0.0
    %2256 = vmatpush1.msra.mxu0 0.0
    %2257 = vmatprep.subr.mxu0 0.0
    %2258 = vmatpush1.msra.mxu0 0.0
    %2259 = vmatprep.subr.mxu0 0.0
    %2260 = vmatpush1.msra.mxu0 0.0
    %2261 = vmatprep.subr.mxu0 0.0
    %2262 = vmatpush1.msra.mxu0 0.0
    %2263 = vmatprep.subr.mxu0 0.0
    %2264 = vmatpush1.msra.mxu0 0.0
    %2265 = vmatprep.subr.mxu0 0.0
    %2266 = vmatpush1.msra.mxu0 0.0
    %2267 = vmatprep.subr.mxu0 0.0
    %2268 = vmatpush1.msra.mxu0 0.0
    %2269 = vmatprep.mubr.f32.mxu0 0.0
    %2270 = vmatmul.mubr.f32.gmra.mrb[0].mxu0 %v2203
    %v2271 = vpop.f32.mrb[0].mxu0
    %v2272 = vadd.f32 0.0, %v2271
    %v2273 = vpop.f32.mrb[0].mxu0
    %2274 = vdwg.mxu0
    %v2276 = vlaneseq
    %v2277 = vshrl.u32 %v2276, 7
    %v2278 = vsub.s32 0, %v2277
    %v2279 = vrot.slane %v2001, %v2278
    %v2282 = vsel %vm201, %v2272, 0
    %2284 = vmatprep.subr.mxu0 0.0
    %2285 = vmatpush1.msra.mxu0 %v1997
    %2286 = vmatprep.subr.mxu0 0.0
    %2287 = vmatpush1.msra.mxu0 %v1998
    %2288 = vmatprep.subr.mxu0 0.0
    %2289 = vmatpush1.msra.mxu0 %v1999
    %2290 = vmatprep.subr.mxu0 0.0
    %2291 = vmatpush1.msra.mxu0 %v2000
    %2292 = vmatprep.subr.mxu0 0.0
    %2293 = vmatpush1.msra.mxu0 0.0
    %2294 = vmatprep.subr.mxu0 0.0
    %2295 = vmatpush1.msra.mxu0 0.0
    %2296 = vmatprep.subr.mxu0 0.0
    %2297 = vmatpush1.msra.mxu0 0.0
    %2298 = vmatprep.subr.mxu0 0.0
    %2299 = vmatpush1.msra.mxu0 0.0
    %2300 = vmatprep.subr.mxu0 0.0
    %2301 = vmatpush1.msra.mxu0 0.0
    %2302 = vmatprep.subr.mxu0 0.0
    %2303 = vmatpush1.msra.mxu0 0.0
    %2304 = vmatprep.subr.mxu0 0.0
    %2305 = vmatpush1.msra.mxu0 0.0
    %2306 = vmatprep.subr.mxu0 0.0
    %2307 = vmatpush1.msra.mxu0 0.0
    %2308 = vmatprep.subr.mxu0 0.0
    %2309 = vmatpush1.msra.mxu0 0.0
    %2310 = vmatprep.subr.mxu0 0.0
    %2311 = vmatpush1.msra.mxu0 0.0
    %2312 = vmatprep.subr.mxu0 0.0
    %2313 = vmatpush1.msra.mxu0 0.0
    %2314 = vmatprep.subr.mxu0 0.0
    %2315 = vmatpush1.msra.mxu0 0.0
    %2316 = vmatprep.subr.mxu0 0.0
    %2317 = vmatpush1.msra.mxu0 0.0
    %2318 = vmatprep.subr.mxu0 0.0
    %2319 = vmatpush1.msra.mxu0 0.0
    %2320 = vmatprep.subr.mxu0 0.0
    %2321 = vmatpush1.msra.mxu0 0.0
    %2322 = vmatprep.subr.mxu0 0.0
    %2323 = vmatpush1.msra.mxu0 0.0
    %2324 = vmatprep.subr.mxu0 0.0
    %2325 = vmatpush1.msra.mxu0 0.0
    %2326 = vmatprep.subr.mxu0 0.0
    %2327 = vmatpush1.msra.mxu0 0.0
    %2328 = vmatprep.subr.mxu0 0.0
    %2329 = vmatpush1.msra.mxu0 0.0
    %2330 = vmatprep.subr.mxu0 0.0
    %2331 = vmatpush1.msra.mxu0 0.0
    %2332 = vmatprep.subr.mxu0 0.0
    %2333 = vmatpush1.msra.mxu0 0.0
    %2334 = vmatprep.subr.mxu0 0.0
    %2335 = vmatpush1.msra.mxu0 0.0
    %2336 = vmatprep.subr.mxu0 0.0
    %2337 = vmatpush1.msra.mxu0 0.0
    %2338 = vmatprep.subr.mxu0 0.0
    %2339 = vmatpush1.msra.mxu0 0.0
    %2340 = vmatprep.subr.mxu0 0.0
    %2341 = vmatpush1.msra.mxu0 0.0
    %2342 = vmatprep.subr.mxu0 0.0
    %2343 = vmatpush1.msra.mxu0 0.0
    %2344 = vmatprep.subr.mxu0 0.0
    %2345 = vmatpush1.msra.mxu0 0.0
    %2346 = vmatprep.subr.mxu0 0.0
    %2347 = vmatpush1.msra.mxu0 0.0
    %2348 = vmatprep.mubr.f32.mxu0 0.0
    %2349 = vmatmul.mubr.f32.gmra.mrb[0].mxu0 %v2282
    %v2350 = vpop.f32.mrb[0].mxu0
    %v2351 = vadd.f32 %v2279, %v2350
    %v2352 = vpop.f32.mrb[0].mxu0
    %2353 = vdwg.mxu0
    %v2354 = vrot.slane %v1247, 1
    %v2357 = vrot.slane %v1460, 3
    %v2359 = vrot.slane %v1567, 4
    %v2361 = vrot.slane %v1671, 5
    %v2363 = vrot.slane %v1777, 6
    %v2365 = vrot.slane %v1884, 7
    %v2367 = vsel %vm2017, %v2354, %v1355
    %v2368 = vsel %vm1044, %v2367, %v2357
    %v2369 = vsel %vm2020, %v2368, %v2359
    %v2370 = vsel %vm1046, %v2369, %v2361
    %v2371 = vsel %vm2023, %v2370, %v2363
    %v2372 = vsel %vm1048, %v2371, %v2365
    %v2373 = vsel %vm2026, %v2372, %v1991
    %2375 = vrot.lane.b32.xlu0 %v2373, 64
    %v2376 = vpop.permute.xlu0 %2375
    %v2377 = vsel %vm201, %v2376, 0
    %2379 = vmatprep.subr.mxu0 0.0
    %2380 = vmatpush1.msra.mxu0 %v1992
    %2381 = vmatprep.subr.mxu0 0.0
    %2382 = vmatpush1.msra.mxu0 %v1993
    %2383 = vmatprep.subr.mxu0 0.0
    %2384 = vmatpush1.msra.mxu0 %v1994
    %2385 = vmatprep.subr.mxu0 0.0
    %2386 = vmatpush1.msra.mxu0 %v1995
    %2387 = vmatprep.subr.mxu0 0.0
    %2388 = vmatpush1.msra.mxu0 0.0
    %2389 = vmatprep.subr.mxu0 0.0
    %2390 = vmatpush1.msra.mxu0 0.0
    %2391 = vmatprep.subr.mxu0 0.0
    %2392 = vmatpush1.msra.mxu0 0.0
    %2393 = vmatprep.subr.mxu0 0.0
    %2394 = vmatpush1.msra.mxu0 0.0
    %2395 = vmatprep.subr.mxu0 0.0
    %2396 = vmatpush1.msra.mxu0 0.0
    %2397 = vmatprep.subr.mxu0 0.0
    %2398 = vmatpush1.msra.mxu0 0.0
    %2399 = vmatprep.subr.mxu0 0.0
    %2400 = vmatpush1.msra.mxu0 0.0
    %2401 = vmatprep.subr.mxu0 0.0
    %2402 = vmatpush1.msra.mxu0 0.0
    %2403 = vmatprep.subr.mxu0 0.0
    %2404 = vmatpush1.msra.mxu0 0.0
    %2405 = vmatprep.subr.mxu0 0.0
    %2406 = vmatpush1.msra.mxu0 0.0
    %2407 = vmatprep.subr.mxu0 0.0
    %2408 = vmatpush1.msra.mxu0 0.0
    %2409 = vmatprep.subr.mxu0 0.0
    %2410 = vmatpush1.msra.mxu0 0.0
    %2411 = vmatprep.subr.mxu0 0.0
    %2412 = vmatpush1.msra.mxu0 0.0
    %2413 = vmatprep.subr.mxu0 0.0
    %2414 = vmatpush1.msra.mxu0 0.0
    %2415 = vmatprep.subr.mxu0 0.0
    %2416 = vmatpush1.msra.mxu0 0.0
    %2417 = vmatprep.subr.mxu0 0.0
    %2418 = vmatpush1.msra.mxu0 0.0
    %2419 = vmatprep.subr.mxu0 0.0
    %2420 = vmatpush1.msra.mxu0 0.0
    %2421 = vmatprep.subr.mxu0 0.0
    %2422 = vmatpush1.msra.mxu0 0.0
    %2423 = vmatprep.subr.mxu0 0.0
    %2424 = vmatpush1.msra.mxu0 0.0
    %2425 = vmatprep.subr.mxu0 0.0
    %2426 = vmatpush1.msra.mxu0 0.0
    %2427 = vmatprep.subr.mxu0 0.0
    %2428 = vmatpush1.msra.mxu0 0.0
    %2429 = vmatprep.subr.mxu0 0.0
    %2430 = vmatpush1.msra.mxu0 0.0
    %2431 = vmatprep.subr.mxu0 0.0
    %2432 = vmatpush1.msra.mxu0 0.0
    %2433 = vmatprep.subr.mxu0 0.0
    %2434 = vmatpush1.msra.mxu0 0.0
    %2435 = vmatprep.subr.mxu0 0.0
    %2436 = vmatpush1.msra.mxu0 0.0
    %2437 = vmatprep.subr.mxu0 0.0
    %2438 = vmatpush1.msra.mxu0 0.0
    %2439 = vmatprep.subr.mxu0 0.0
    %2440 = vmatpush1.msra.mxu0 0.0
    %2441 = vmatprep.subr.mxu0 0.0
    %2442 = vmatpush1.msra.mxu0 0.0
    %2443 = vmatprep.mubr.f32.mxu0 0.0
    %2444 = vmatmul.mubr.f32.gmra.mrb[0].mxu0 %v2377
    %v2445 = vpop.f32.mrb[0].mxu0
    %v2446 = vadd.f32 %v2032, %v2445
    %v2447 = vpop.f32.mrb[0].mxu0
    %2448 = vdwg.mxu0
    %2450 = vrot.lane.b32.xlu0 %v2446, 96
    %v2451 = vpop.permute.xlu0 %2450
    %v2452 = vsel %vm201, %v2446, 0
    %v2454 = vsel %vm201, %v2451, 0
    %2456 = vmatprep.subr.mxu0 0.0
    %2457 = vmatpush1.xpose.msra.mxu0 %v2454
    %2458 = vmatprep.subr.mxu0 0.0
    %2459 = vmatpush1.xpose.msra.mxu0 0.0
    %2460 = vmatprep.subr.mxu0 0.0
    %2461 = vmatpush1.xpose.msra.mxu0 0.0
    %2462 = vmatprep.subr.mxu0 0.0
    %2463 = vmatpush1.xpose.msra.mxu0 0.0
    %2464 = vmatprep.subr.mxu0 0.0
    %2465 = vmatpush1.xpose.msra.mxu0 0.0
    %2466 = vmatprep.subr.mxu0 0.0
    %2467 = vmatpush1.xpose.msra.mxu0 0.0
    %2468 = vmatprep.subr.mxu0 0.0
    %2469 = vmatpush1.xpose.msra.mxu0 0.0
    %2470 = vmatprep.subr.mxu0 0.0
    %2471 = vmatpush1.xpose.msra.mxu0 0.0
    %2472 = vmatprep.subr.mxu0 0.0
    %2473 = vmatpush1.xpose.msra.mxu0 0.0
    %2474 = vmatprep.subr.mxu0 0.0
    %2475 = vmatpush1.xpose.msra.mxu0 0.0
    %2476 = vmatprep.subr.mxu0 0.0
    %2477 = vmatpush1.xpose.msra.mxu0 0.0
    %2478 = vmatprep.subr.mxu0 0.0
    %2479 = vmatpush1.xpose.msra.mxu0 0.0
    %2480 = vmatprep.subr.mxu0 0.0
    %2481 = vmatpush1.xpose.msra.mxu0 0.0
    %2482 = vmatprep.subr.mxu0 0.0
    %2483 = vmatpush1.xpose.msra.mxu0 0.0
    %2484 = vmatprep.subr.mxu0 0.0
    %2485 = vmatpush1.xpose.msra.mxu0 0.0
    %2486 = vmatprep.subr.mxu0 0.0
    %2487 = vmatpush1.xpose.msra.mxu0 0.0
    %2488 = vmatprep.subr.mxu0 0.0
    %2489 = vmatpush1.xpose.msra.mxu0 0.0
    %2490 = vmatprep.subr.mxu0 0.0
    %2491 = vmatpush1.xpose.msra.mxu0 0.0
    %2492 = vmatprep.subr.mxu0 0.0
    %2493 = vmatpush1.xpose.msra.mxu0 0.0
    %2494 = vmatprep.subr.mxu0 0.0
    %2495 = vmatpush1.xpose.msra.mxu0 0.0
    %2496 = vmatprep.subr.mxu0 0.0
    %2497 = vmatpush1.xpose.msra.mxu0 0.0
    %2498 = vmatprep.subr.mxu0 0.0
    %2499 = vmatpush1.xpose.msra.mxu0 0.0
    %2500 = vmatprep.subr.mxu0 0.0
    %2501 = vmatpush1.xpose.msra.mxu0 0.0
    %2502 = vmatprep.subr.mxu0 0.0
    %2503 = vmatpush1.xpose.msra.mxu0 0.0
    %2504 = vmatprep.subr.mxu0 0.0
    %2505 = vmatpush1.xpose.msra.mxu0 0.0
    %2506 = vmatprep.subr.mxu0 0.0
    %2507 = vmatpush1.xpose.msra.mxu0 0.0
    %2508 = vmatprep.subr.mxu0 0.0
    %2509 = vmatpush1.xpose.msra.mxu0 0.0
    %2510 = vmatprep.subr.mxu0 0.0
    %2511 = vmatpush1.xpose.msra.mxu0 0.0
    %2512 = vmatprep.subr.mxu0 0.0
    %2513 = vmatpush1.xpose.msra.mxu0 0.0
    %2514 = vmatprep.subr.mxu0 0.0
    %2515 = vmatpush1.xpose.msra.mxu0 0.0
    %2516 = vmatprep.subr.mxu0 0.0
    %2517 = vmatpush1.xpose.msra.mxu0 0.0
    %2518 = vmatprep.subr.mxu0 0.0
    %2519 = vmatpush1.xpose.msra.mxu0 0.0
    %2520 = vmatprep.mubr.f32.mxu0 0.0
    %2521 = vmatmul.mubr.f32.gmra.mrb[0].mxu0 %v2452
    %v2522 = vpop.f32.mrb[0].mxu0
    %v2523 = vadd.f32 0.0, %v2522
    %v2524 = vpop.f32.mrb[0].mxu0
    %2525 = vdwg.mxu0
    %v2526 = vmul.f32 %v2523, 0.17677669
    %v2527 = vsel %vm2187, %v2526, -inf
    %2528 = vmax.xlane.f32.xlu0 %v2527
    %v2529 = vpop.xlane.xlu0 %2528
    %v2530 = vsub.f32 %v2526, %v2529
    %v2531 = vmul.f32 %v2530, 1.442695
    %v2532 = vpow.pop %v2531
    %v2533 = vsel %vm2187, %v2532, 0.0
    %2534 = vadd.xlane.f32.xlu0 %v2533
    %v2535 = vpop.xlane.xlu0 %2534
    %v2536 = vrcp.pop %v2535
    %v2537 = vmul.f32 %v2532, %v2536
    %2538 = vrot.lane.b32.xlu0 %v2446, 64
    %v2539 = vpop.permute.xlu0 %2538
    %v2542 = vsel %vm2187, %v2537, 0
    %2544 = vmatprep.subr.mxu0 0.0
    %2545 = vmatpush1.msra.mxu0 %v2539
    %2546 = vmatprep.subr.mxu0 0.0
    %2547 = vmatpush1.msra.mxu0 0.0
    %2548 = vmatprep.subr.mxu0 0.0
    %2549 = vmatpush1.msra.mxu0 0.0
    %2550 = vmatprep.subr.mxu0 0.0
    %2551 = vmatpush1.msra.mxu0 0.0
    %2552 = vmatprep.subr.mxu0 0.0
    %2553 = vmatpush1.msra.mxu0 0.0
    %2554 = vmatprep.subr.mxu0 0.0
    %2555 = vmatpush1.msra.mxu0 0.0
    %2556 = vmatprep.subr.mxu0 0.0
    %2557 = vmatpush1.msra.mxu0 0.0
    %2558 = vmatprep.subr.mxu0 0.0
    %2559 = vmatpush1.msra.mxu0 0.0
    %2560 = vmatprep.subr.mxu0 0.0
    %2561 = vmatpush1.msra.mxu0 0.0
    %2562 = vmatprep.subr.mxu0 0.0
    %2563 = vmatpush1.msra.mxu0 0.0
    %2564 = vmatprep.subr.mxu0 0.0
    %2565 = vmatpush1.msra.mxu0 0.0
    %2566 = vmatprep.subr.mxu0 0.0
    %2567 = vmatpush1.msra.mxu0 0.0
    %2568 = vmatprep.subr.mxu0 0.0
    %2569 = vmatpush1.msra.mxu0 0.0
    %2570 = vmatprep.subr.mxu0 0.0
    %2571 = vmatpush1.msra.mxu0 0.0
    %2572 = vmatprep.subr.mxu0 0.0
    %2573 = vmatpush1.msra.mxu0 0.0
    %2574 = vmatprep.subr.mxu0 0.0
    %2575 = vmatpush1.msra.mxu0 0.0
    %2576 = vmatprep.subr.mxu0 0.0
    %2577 = vmatpush1.msra.mxu0 0.0
    %2578 = vmatprep.subr.mxu0 0.0
    %2579 = vmatpush1.msra.mxu0 0.0
    %2580 = vmatprep.subr.mxu0 0.0
    %2581 = vmatpush1.msra.mxu0 0.0
    %2582 = vmatprep.subr.mxu0 0.0
    %2583 = vmatpush1.msra.mxu0 0.0
    %2584 = vmatprep.subr.mxu0 0.0
    %2585 = vmatpush1.msra.mxu0 0.0
    %2586 = vmatprep.subr.mxu0 0.0
    %2587 = vmatpush1.msra.mxu0 0.0
    %2588 = vmatprep.subr.mxu0 0.0
    %2589 = vmatpush1.msra.mxu0 0.0
    %2590 = vmatprep.subr.mxu0 0.0
    %2591 = vmatpush1.msra.mxu0 0.0
    %2592 = vmatprep.subr.mxu0 0.0
    %2593 = vmatpush1.msra.mxu0 0.0
    %2594 = vmatprep.subr.mxu0 0.0
    %2595 = vmatpush1.msra.mxu0 0.0
    %2596 = vmatprep.subr.mxu0 0.0
    %2597 = vmatpush1.msra.mxu0 0.0
    %2598 = vmatprep.subr.mxu0 0.0
    %2599 = vmatpush1.msra.mxu0 0.0
    %2600 = vmatprep.subr.mxu0 0.0
    %2601 = vmatpush1.msra.mxu0 0.0
    %2602 = vmatprep.subr.mxu0 0.0
    %2603 = vmatpush1.msra.mxu0 0.0
    %2604 = vmatprep.subr.mxu0 0.0
    %2605 = vmatpush1.msra.mxu0 0.0
    %2606 = vmatprep.subr.mxu0 0.0
    %2607 = vmatpush1.msra.mxu0 0.0
    %2608 = vmatprep.mubr.f32.mxu0 0.0
    %2609 = vmatmul.mubr.f32.gmra.mrb[0].mxu0 %v2542
    %v2610 = vpop.f32.mrb[0].mxu0
    %v2611 = vadd.f32 0.0, %v2610
    %v2612 = vpop.f32.mrb[0].mxu0
    %2613 = vdwg.mxu0
    %v2615 = vsel %vm201, %v2611, 0
    %2617 = vmatprep.subr.mxu0 0.0
    %2618 = vmatpush1.msra.mxu0 %v1997
    %2619 = vmatprep.subr.mxu0 0.0
    %2620 = vmatpush1.msra.mxu0 %v1998
    %2621 = vmatprep.subr.mxu0 0.0
    %2622 = vmatpush1.msra.mxu0 %v1999
    %2623 = vmatprep.subr.mxu0 0.0
    %2624 = vmatpush1.msra.mxu0 %v2000
    %2625 = vmatprep.subr.mxu0 0.0
    %2626 = vmatpush1.msra.mxu0 0.0
    %2627 = vmatprep.subr.mxu0 0.0
    %2628 = vmatpush1.msra.mxu0 0.0
    %2629 = vmatprep.subr.mxu0 0.0
    %2630 = vmatpush1.msra.mxu0 0.0
    %2631 = vmatprep.subr.mxu0 0.0
    %2632 = vmatpush1.msra.mxu0 0.0
    %2633 = vmatprep.subr.mxu0 0.0
    %2634 = vmatpush1.msra.mxu0 0.0
    %2635 = vmatprep.subr.mxu0 0.0
    %2636 = vmatpush1.msra.mxu0 0.0
    %2637 = vmatprep.subr.mxu0 0.0
    %2638 = vmatpush1.msra.mxu0 0.0
    %2639 = vmatprep.subr.mxu0 0.0
    %2640 = vmatpush1.msra.mxu0 0.0
    %2641 = vmatprep.subr.mxu0 0.0
    %2642 = vmatpush1.msra.mxu0 0.0
    %2643 = vmatprep.subr.mxu0 0.0
    %2644 = vmatpush1.msra.mxu0 0.0
    %2645 = vmatprep.subr.mxu0 0.0
    %2646 = vmatpush1.msra.mxu0 0.0
    %2647 = vmatprep.subr.mxu0 0.0
    %2648 = vmatpush1.msra.mxu0 0.0
    %2649 = vmatprep.subr.mxu0 0.0
    %2650 = vmatpush1.msra.mxu0 0.0
    %2651 = vmatprep.subr.mxu0 0.0
    %2652 = vmatpush1.msra.mxu0 0.0
    %2653 = vmatprep.subr.mxu0 0.0
    %2654 = vmatpush1.msra.mxu0 0.0
    %2655 = vmatprep.subr.mxu0 0.0
    %2656 = vmatpush1.msra.mxu0 0.0
    %2657 = vmatprep.subr.mxu0 0.0
    %2658 = vmatpush1.msra.mxu0 0.0
    %2659 = vmatprep.subr.mxu0 0.0
    %2660 = vmatpush1.msra.mxu0 0.0
    %2661 = vmatprep.subr.mxu0 0.0
    %2662 = vmatpush1.msra.mxu0 0.0
    %2663 = vmatprep.subr.mxu0 0.0
    %2664 = vmatpush1.msra.mxu0 0.0
    %2665 = vmatprep.subr.mxu0 0.0
    %2666 = vmatpush1.msra.mxu0 0.0
    %2667 = vmatprep.subr.mxu0 0.0
    %2668 = vmatpush1.msra.mxu0 0.0
    %2669 = vmatprep.subr.mxu0 0.0
    %2670 = vmatpush1.msra.mxu0 0.0
    %2671 = vmatprep.subr.mxu0 0.0
    %2672 = vmatpush1.msra.mxu0 0.0
    %2673 = vmatprep.subr.mxu0 0.0
    %2674 = vmatpush1.msra.mxu0 0.0
    %2675 = vmatprep.subr.mxu0 0.0
    %2676 = vmatpush1.msra.mxu0 0.0
    %2677 = vmatprep.subr.mxu0 0.0
    %2678 = vmatpush1.msra.mxu0 0.0
    %2679 = vmatprep.subr.mxu0 0.0
    %2680 = vmatpush1.msra.mxu0 0.0
    %2681 = vmatprep.mubr.f32.mxu0 0.0
    %2682 = vmatmul.mubr.f32.gmra.mrb[0].mxu0 %v2615
    %v2683 = vpop.f32.mrb[0].mxu0
    %v2684 = vadd.f32 %v2279, %v2683
    %v2685 = vpop.f32.mrb[0].mxu0
    %2686 = vdwg.mxu0
    %2687 = vst.msk [vmem:[%s11] sm:$0xff] %vm2187, %v2351
    %2688 = vst.msk [vmem:[%s11 + $0x8] sm:$0xff] %vm2187, %v2684
    // Predicated region
    $region66: #{tpu_custom_call.1} parent=1 // pred_check
      _
    $region67: #{tpu_custom_call.1} parent=1 // pred_check_branch
      %2690 = sbr.rel (0) target = $region69
    $region68: #{tpu_custom_call.1} parent=1 // pred_region
      _
    $region69: #{tpu_custom_call.1} parent=1 // pred_fallthru
      _
    // Predicated region
    $region70: #{tpu_custom_call.1} parent=1 // pred_check
      _
    $region71: #{tpu_custom_call.1} parent=1 // pred_check_branch
      %2692 = sbr.rel (0) target = $region73
    $region72: #{tpu_custom_call.1} parent=1 // pred_region
      _
    $region73: #{tpu_custom_call.1} parent=1 // pred_fallthru
      _
    %2693 = vsyncpa [#allocation3], 1
    %2694 = vsyncpa [#allocation5], 1
    %2695 = vsyncpa [#allocation8], 1

</llo_original>
